<compile_context>
chip_gen: v6e
topology: v6e:2x2x1
jax: 0.10.0
libtpu: 0.0.40
codegen_flags: <defaults>
</compile_context>

<pallas_src>
import functools

import jax
import jax.numpy as jnp
from jax import lax
from jax.experimental import pallas as pl
from jax.experimental.pallas import tpu as pltpu

EPS = 1e-5
LANE = 128


def _vmem_limit_bytes():
    """3/4 of physical VMEM, capped at 96 MiB; conservative fallback if the query fails."""
    try:
        cap = int(pltpu.get_tpu_info().vmem_capacity_bytes)
    except Exception:
        cap = 64 * 1024 * 1024
    return int(min((cap * 3) // 4, 96 * 1024 * 1024))


VMEM_LIMIT = _vmem_limit_bytes()


def _round_up(n, m=LANE):
    return ((n + m - 1) // m) * m


def _choose_row_tile(rows, cap):
    """Return (tile, padded_rows): tile is a multiple of 8 <= cap.

    Prefers an exact divisor of `rows`; otherwise pads rows up to a tile multiple
    (the ragged tail is masked out of the BN statistics inside pass B).
    """
    cap = max(8, min(cap, rows))
    cap = max((cap // 8) * 8, 8)
    for t in range(cap, 7, -8):
        if rows % t == 0:
            return t, rows
    tile = cap
    padded = ((rows + tile - 1) // tile) * tile
    return tile, padded


def _scale_shift(stats, gamma, beta, count):
    """Fold global batch statistics + affine params into per-channel scale/shift (1, C)."""
    mean = stats[0:1, :] / count
    var = jnp.maximum(stats[1:2, :] / count - mean * mean, 0.0)
    scale = gamma * lax.rsqrt(var + EPS)
    shift = beta - mean * scale
    return scale, shift


# ---------------- pass A: per-tile partial channel statistics of x (parallel grid) ----------------
def _stats_kernel(x_ref, stats_ref):
    x = x_ref[...]
    stats_ref[0:1, :] = jnp.sum(x, axis=0, keepdims=True)
    stats_ref[1:2, :] = jnp.sum(x * x, axis=0, keepdims=True)


# ---------------- pass B: bn1+relu -> conv1 (1x1), bf16 writeback, partial h1 stats ----------------
def _bn_conv1x1_stats_kernel(valid_rows, x_ref, scale_ref, shift_ref, w_ref, h_ref, stats_ref):
    a = jnp.maximum(x_ref[...] * scale_ref[...] + shift_ref[...], 0.0)
    h = jnp.dot(a.astype(jnp.bfloat16), w_ref[...], preferred_element_type=jnp.float32)
    if valid_rows is not None:
        # Ragged last tile: padded rows must not pollute the BN statistics / downstream conv.
        tile = x_ref.shape[0]
        row = pl.program_id(0) * tile + lax.broadcasted_iota(jnp.int32, (tile, 1), 0)
        h = jnp.where(row < valid_rows, h, 0.0)
    h_ref[...] = h.astype(h_ref.dtype)          # bf16 HBM intermediate
    stats_ref[0:1, :] = jnp.sum(h, axis=0, keepdims=True)       # f32 partials (pre-rounding)
    stats_ref[1:2, :] = jnp.sum(h * h, axis=0, keepdims=True)


# ---------------- pass C: bn2+relu -> conv2 (3x3) per image, bf16 writeback, partial h2 stats ----------------
def _bn_conv3x3_stats_kernel(H, W, h1_ref, scale_ref, shift_ref, w2_ref,
                             h2_ref, stats_ref, col_ref):
    HW = H * W
    C1p = h1_ref.shape[-1]

    # Re-zero only the halo rows every step (cheap: 4W rows) so the image axis stays
    # megacore-parallel-safe; interior rows are fully rewritten below (stores after zeroing win).
    zeros_halo = jnp.zeros((2 * W, col_ref.shape[-1]), dtype=col_ref.dtype)
    col_ref[0:2 * W, :] = zeros_halo
    col_ref[HW:HW + 2 * W, :] = zeros_halo

    # bn2 + relu with precomputed (global) scale/shift -> single data pass.
    a2 = jnp.maximum(h1_ref[...] * scale_ref[...] + shift_ref[...], 0.0)

    # Hoisted column-boundary masks (the dy boundaries are handled by the zero halo rows).
    xcol = lax.broadcasted_iota(jnp.int32, (HW, 1), 0) % W
    a2_xm1 = jnp.where(xcol != W - 1, a2, 0.0)   # supplies the (x-1) neighbour after +1-row offset
    a2_xp1 = jnp.where(xcol != 0, a2, 0.0)       # supplies the (x+1) neighbour after -1-row offset

    # im2col scratch: rows = [W halo | H*W image rows (flattened y*W+x) | W halo],
    # columns = [dx=-1 | dx=0 | dx=+1] channel blocks.  The dx shift is baked into the store
    # row offset, so each row of 3 taps becomes one (HW, 3*C1) x (3*C1, C2) matmul.
    col_ref[W + 1:W + 1 + HW, 0:C1p] = a2_xm1
    col_ref[W:W + HW, C1p:2 * C1p] = a2
    col_ref[W - 1:W - 1 + HW, 2 * C1p:3 * C1p] = a2_xp1

    acc = None
    for d in range(3):                               # d = dy + 1
        lhs = col_ref[d * W:d * W + HW, :].astype(jnp.bfloat16)
        part = jnp.dot(lhs, w2_ref[d], preferred_element_type=jnp.float32)
        acc = part if acc is None else acc + part

    h2_ref[...] = acc.astype(h2_ref.dtype)          # bf16 HBM intermediate
    stats_ref[0:1, :] = jnp.sum(acc, axis=0, keepdims=True)     # f32 partials (pre-rounding)
    stats_ref[1:2, :] = jnp.sum(acc * acc, axis=0, keepdims=True)


# ---------------- pass D: bn3+relu -> conv3 (1x1) + identity residual (unpadded C0 output) ----------------
def _bn_conv1x1_res_kernel(h2_ref, xres_ref, scale_ref, shift_ref, w_ref, out_ref):
    a = jnp.maximum(h2_ref[...] * scale_ref[...] + shift_ref[...], 0.0)
    out_ref[...] = (jnp.dot(a.astype(jnp.bfloat16), w_ref[...],
                            preferred_element_type=jnp.float32) + xres_ref[...])


@functools.partial(jax.jit, static_argnames=("row_tile",))
def bottleneck_forward(x_nchw, params, *, row_tile=2048):
    """x_nchw: (N, C0, H, W) float32. Returns (N, C0, H, W) float32."""
    g1, b1, w1, g2, b2, w2, g3, b3, w3 = params
    N, C0, H, W = x_nchw.shape
    HW = H * W
    R = N * HW
    C1 = w1.shape[1]
    C2 = w2.shape[-1]
    C4 = w3.shape[-1]
    assert C4 == C0, "identity residual requires inplanes == planes * 4"
    assert HW % 8 == 0, "per-image pass C assumes H*W is a multiple of 8"

    C0p, C1p, C2p = _round_up(C0), _round_up(C1), _round_up(C2)

    # Row tile derived from the VMEM budget (double-buffered streaming bytes per row of the
    # heaviest row-tiled passes), capped by the user-provided row_tile.
    per_row = max(4 * C0p + 2 * C1p,          # pass B: f32 x in + bf16 h1 out
                  2 * C2p + 8 * C0p)          # pass D: bf16 h2 in + f32 residual in + f32 out
    cap = max(64, (VMEM_LIMIT // (4 * per_row)) // 8 * 8)
    tile, R_pad = _choose_row_tile(R, min(row_tile, cap))
    nt = R_pad // tile
    valid_rows = R if R_pad != R else None

    # NCHW -> row-major NHWC rows.  Channel-padded copy feeds the matmul passes; the unpadded
    # copy feeds the residual add so pass D reads/writes only C0 lanes.
    # TODO(synk): the NCHW->rows transpose itself is still an XLA relayout outside the pipeline.
    x_rows_raw = jnp.transpose(x_nchw, (0, 2, 3, 1)).reshape(R, C0)
    x_rows_raw = jnp.pad(x_rows_raw, ((0, R_pad - R), (0, 0)))
    x_rows = jnp.pad(x_rows_raw, ((0, 0), (0, C0p - C0)))

    # Weights: pad to lane multiples (except conv3's output dim) and cast to bf16 for the MXU.
    w1p = jnp.pad(w1, ((0, C0p - C0), (0, C1p - C1))).astype(jnp.bfloat16)
    w2p = jnp.pad(w2, ((0, 0), (0, 0), (0, C1p - C1), (0, C2p - C2)))
    w2p = w2p.reshape(3, 3 * C1p, C2p).astype(jnp.bfloat16)
    w3p = jnp.pad(w3, ((0, C2p - C2), (0, 0))).astype(jnp.bfloat16)     # (C2p, C0) narrow-N conv3

    # Padded BN params (padded gammas/betas are zero -> padded channels stay exactly zero).
    g1p = jnp.pad(g1, ((0, 0), (0, C0p - C0)))
    b1p = jnp.pad(b1, ((0, 0), (0, C0p - C0)))
    g2p = jnp.pad(g2, ((0, 0), (0, C1p - C1)))
    b2p = jnp.pad(b2, ((0, 0), (0, C1p - C1)))
    g3p = jnp.pad(g3, ((0, 0), (0, C2p - C2)))
    b3p = jnp.pad(b3, ((0, 0), (0, C2p - C2)))

    cp = pltpu.CompilerParams(dimension_semantics=("parallel",),
                              vmem_limit_bytes=VMEM_LIMIT)

    # ---- pass A: per-tile partial stats of x (reduced outside the grid) ----
    stats_x = pl.pallas_call(
        _stats_kernel,
        out_shape=jax.ShapeDtypeStruct((nt, 2, C0p), jnp.float32),
        grid=(nt,),
        in_specs=[pl.BlockSpec((tile, C0p), lambda i: (i, 0))],
        out_specs=pl.BlockSpec((None, 2, C0p), lambda i: (i, 0, 0)),
        compiler_params=cp,
    )(x_rows)
    scale1, shift1 = _scale_shift(jnp.sum(stats_x, axis=0), g1p, b1p, R)

    # ---- pass B: bn1 + relu + conv1 (1x1), bf16 h1, per-tile partial stats ----
    h1_rows, stats_h1 = pl.pallas_call(
        functools.partial(_bn_conv1x1_stats_kernel, valid_rows),
        out_shape=(jax.ShapeDtypeStruct((R_pad, C1p), jnp.bfloat16),
                   jax.ShapeDtypeStruct((nt, 2, C1p), jnp.float32)),
        grid=(nt,),
        in_specs=[pl.BlockSpec((tile, C0p), lambda i: (i, 0)),
                  pl.BlockSpec((1, C0p), lambda i: (0, 0)),
                  pl.BlockSpec((1, C0p), lambda i: (0, 0)),
                  pl.BlockSpec((C0p, C1p), lambda i: (0, 0))],
        out_specs=(pl.BlockSpec((tile, C1p), lambda i: (i, 0)),
                   pl.BlockSpec((None, 2, C1p), lambda i: (i, 0, 0))),
        compiler_params=cp,
    )(x_rows, scale1, shift1, w1p)
    scale2, shift2 = _scale_shift(jnp.sum(stats_h1, axis=0), g2p, b2p, R)

    # ---- pass C: bn2 + relu + conv2 (3x3) per image, bf16 h2, per-image partial stats ----
    h2_rows, stats_h2 = pl.pallas_call(
        functools.partial(_bn_conv3x3_stats_kernel, H, W),
        out_shape=(jax.ShapeDtypeStruct((R_pad, C2p), jnp.bfloat16),
                   jax.ShapeDtypeStruct((N, 2, C2p), jnp.float32)),
        grid=(N,),
        in_specs=[pl.BlockSpec((HW, C1p), lambda n: (n, 0)),
                  pl.BlockSpec((1, C1p), lambda n: (0, 0)),
                  pl.BlockSpec((1, C1p), lambda n: (0, 0)),
                  pl.BlockSpec((3, 3 * C1p, C2p), lambda n: (0, 0, 0))],
        out_specs=(pl.BlockSpec((HW, C2p), lambda n: (n, 0)),
                   pl.BlockSpec((None, 2, C2p), lambda n: (n, 0, 0))),
        scratch_shapes=[pltpu.VMEM(((H + 2) * W, 3 * C1p), jnp.float32)],
        compiler_params=cp,
    )(h1_rows, scale2, shift2, w2p)
    scale3, shift3 = _scale_shift(jnp.sum(stats_h2, axis=0), g3p, b3p, R)

    # ---- pass D: bn3 + relu + conv3 (1x1) + identity residual, unpadded C0 output ----
    out_rows = pl.pallas_call(
        _bn_conv1x1_res_kernel,
        out_shape=jax.ShapeDtypeStruct((R_pad, C0), jnp.float32),
        grid=(nt,),
        in_specs=[pl.BlockSpec((tile, C2p), lambda i: (i, 0)),
                  pl.BlockSpec((tile, C0), lambda i: (i, 0)),
                  pl.BlockSpec((1, C2p), lambda i: (0, 0)),
                  pl.BlockSpec((1, C2p), lambda i: (0, 0)),
                  pl.BlockSpec((C2p, C0), lambda i: (0, 0))],
        out_specs=pl.BlockSpec((tile, C0), lambda i: (i, 0)),
        compiler_params=cp,
    )(h2_rows, x_rows_raw, scale3, shift3, w3p)

    out = out_rows[:R, :].reshape(N, H, W, C0)
    return jnp.transpose(out, (0, 3, 1, 2))


def make_params(key, inplanes, planes, cfg):
    """Deterministic synthetic parameters (matmul-friendly layouts)."""
    c0, c1, c2 = cfg
    cout = planes * 4
    ks = jax.random.split(key, 9)
    g1 = 1.0 + 0.1 * jax.random.normal(ks[0], (1, inplanes), jnp.float32)
    b1 = 0.1 * jax.random.normal(ks[1], (1, inplanes), jnp.float32)
    # conv1: torch weight (c1, c0, 1, 1) -> (c0, c1)
    w1 = jax.random.normal(ks[2], (c0, c1), jnp.float32) * (1.0 / jnp.sqrt(c0))
    g2 = 1.0 + 0.1 * jax.random.normal(ks[3], (1, c1), jnp.float32)
    b2 = 0.1 * jax.random.normal(ks[4], (1, c1), jnp.float32)
    # conv2: torch weight (c2, c1, 3, 3) -> HWIO taps (3, 3, c1, c2), tap[ky,kx] = weight[:, :, ky, kx].T
    w2 = jax.random.normal(ks[5], (3, 3, c1, c2), jnp.float32) * (1.0 / jnp.sqrt(9 * c1))
    g3 = 1.0 + 0.1 * jax.random.normal(ks[6], (1, c2), jnp.float32)
    b3 = 0.1 * jax.random.normal(ks[7], (1, c2), jnp.float32)
    # conv3: torch weight (cout, c2, 1, 1) -> (c2, cout)
    w3 = jax.random.normal(ks[8], (c2, cout), jnp.float32) * (1.0 / jnp.sqrt(c2))
    return (g1, b1, w1, g2, b2, w2, g3, b3, w3)


def reference_forward(x_nchw, params):
    """Plain-JAX reference with matching precision choices (bf16 matmul operands, bf16 h1/h2)."""
    g1, b1, w1, g2, b2, w2, g3, b3, w3 = params
    x = jnp.transpose(x_nchw, (0, 2, 3, 1))                          # NHWC
    c = jnp.bfloat16

    def bn_relu(h, g, b):
        m = jnp.mean(h, axis=(0, 1, 2), keepdims=True)
        v = jnp.maximum(jnp.mean(h * h, axis=(0, 1, 2), keepdims=True) - m * m, 0.0)
        return jnp.maximum((h - m) * lax.rsqrt(v + EPS) * g.reshape(1, 1, 1, -1)
                           + b.reshape(1, 1, 1, -1), 0.0)

    a1 = bn_relu(x, g1, b1)
    h1 = jnp.einsum('nhwc,cd->nhwd', a1.astype(c), w1.astype(c),
                    preferred_element_type=jnp.float32)
    h1 = h1.astype(c).astype(jnp.float32)          # mirror bf16 HBM intermediate
    a2 = bn_relu(h1, g2, b2)
    h2 = lax.conv_general_dilated(a2.astype(c), w2.astype(c), window_strides=(1, 1),
                                  padding='SAME',
                                  dimension_numbers=('NHWC', 'HWIO', 'NHWC'),
                                  preferred_element_type=jnp.float32)
    h2 = h2.astype(c).astype(jnp.float32)          # mirror bf16 HBM intermediate
    a3 = bn_relu(h2, g3, b3)
    h3 = jnp.einsum('nhwc,cd->nhwd', a3.astype(c), w3.astype(c),
                    preferred_element_type=jnp.float32)
    return jnp.transpose(h3 + x, (0, 3, 1, 2))


if __name__ == "__main__":
    key = jax.random.PRNGKey(0)
    k_x, k_p = jax.random.split(key)

    # Small shapes consistent with the module: inplanes = planes * expansion (identity residual).
    planes = 8
    inplanes = planes * 4                      # 32
    cfg = [inplanes, planes, planes]           # [32, 8, 8]
    N, H, W = 2, 16, 16

    x = jax.random.normal(k_x, (N, inplanes, H, W), jnp.float32)
    params = make_params(k_p, inplanes, planes, cfg)

    # row_tile=128 exercises the multi-step row grid and the per-tile partial-stat reduction.
    out = jax.block_until_ready(bottleneck_forward(x, params, row_tile=128))
    ref = jax.block_until_ready(reference_forward(x, params))

    assert out.shape == (N, planes * 4, H, W)
    max_err = float(jnp.max(jnp.abs(out - ref)))
    assert jnp.allclose(out, ref, atol=2e-2, rtol=2e-2), max_err

    print("KERNEL_OK")
</pallas_src>

<mosaic_0001>
module attributes {stable_mosaic.version = 11 : i64} {
  func.func @_stats_kernel(%arg0: i32, %arg1: memref<128x128xf32, #tpu.memory_space<vmem>>, %arg2: memref<1x2x128xf32, #tpu.memory_space<vmem>>) attributes {dimension_semantics = [#tpu.dimension_semantics<parallel>], iteration_bounds = array<i64: 4>, scalar_prefetch = 0 : i64, scratch_operands = 0 : i64, tpu.core_type = #tpu.core_type<tc>, window_params = [{transform_indices = @transform_0, window_bounds = array<i64: 128, 128>}, {transform_indices = @transform_1, window_bounds = array<i64: 1, 2, 128>}]} {
    %c0 = arith.constant 0 : index
    %c0_0 = arith.constant 0 : index
    %0 = vector.load %arg1[%c0, %c0_0] : memref<128x128xf32, #tpu.memory_space<vmem>>, vector<128x128xf32>
    %cst = arith.constant dense<0.000000e+00> : vector<128xf32>
    %1 = vector.multi_reduction <add>, %0, %cst [0] : vector<128x128xf32> to vector<128xf32>
    %2 = vector.shape_cast %1 : vector<128xf32> to vector<1x128xf32>
    %c0_1 = arith.constant 0 : index
    %c0_2 = arith.constant 0 : index
    %c0_3 = arith.constant 0 : index
    %3 = vector.load %arg2[%c0_1, %c0_2, %c0_3] : memref<1x2x128xf32, #tpu.memory_space<vmem>>, vector<1x1x128xf32>
    %4 = vector.shape_cast %3 : vector<1x1x128xf32> to vector<1x128xf32>
    %5 = vector.shape_cast %2 : vector<1x128xf32> to vector<1x1x128xf32>
    tpu.vector_store %arg2[%c0_1, %c0_2, %c0_3], %5 {strides = array<i32>} : memref<1x2x128xf32, #tpu.memory_space<vmem>>, vector<1x1x128xf32>,
    %6 = arith.mulf %0, %0 : vector<128x128xf32>
    %cst_4 = arith.constant dense<0.000000e+00> : vector<128xf32>
    %7 = vector.multi_reduction <add>, %6, %cst_4 [0] : vector<128x128xf32> to vector<128xf32>
    %8 = vector.shape_cast %7 : vector<128xf32> to vector<1x128xf32>
    %c0_5 = arith.constant 0 : index
    %c1 = arith.constant 1 : index
    %c0_6 = arith.constant 0 : index
    %9 = vector.load %arg2[%c0_5, %c1, %c0_6] : memref<1x2x128xf32, #tpu.memory_space<vmem>>, vector<1x1x128xf32>
    %10 = vector.shape_cast %9 : vector<1x1x128xf32> to vector<1x128xf32>
    %11 = vector.shape_cast %8 : vector<1x128xf32> to vector<1x1x128xf32>
    tpu.vector_store %arg2[%c0_5, %c1, %c0_6], %11 {strides = array<i32>} : memref<1x2x128xf32, #tpu.memory_space<vmem>>, vector<1x1x128xf32>,
    return
  }
  func.func @transform_0(%arg0: i32) -> (i32, i32) {
    %c0_i32 = arith.constant 0 : i32
    %c0_i32_0 = arith.constant 0 : i32
    return %arg0, %c0_i32 : i32, i32
  }
  func.func @transform_1(%arg0: i32) -> (i32, i32, i32) {
    %c0_i32 = arith.constant 0 : i32
    %c0_i32_0 = arith.constant 0 : i32
    %c0_i32_1 = arith.constant 0 : i32
    return %arg0, %c0_i32, %c0_i32_0 : i32, i32, i32
  }
}

module attributes {stable_mosaic.version = 11 : i64} {
  func.func @_bn_conv1x1_stats_kernel(%arg0: i32, %arg1: memref<128x128xf32, #tpu.memory_space<vmem>>, %arg2: memref<1x128xf32, #tpu.memory_space<vmem>>, %arg3: memref<1x128xf32, #tpu.memory_space<vmem>>, %arg4: memref<128x128xbf16, #tpu.memory_space<vmem>>, %arg5: memref<128x128xbf16, #tpu.memory_space<vmem>>, %arg6: memref<1x2x128xf32, #tpu.memory_space<vmem>>) attributes {dimension_semantics = [#tpu.dimension_semantics<parallel>], iteration_bounds = array<i64: 4>, scalar_prefetch = 0 : i64, scratch_operands = 0 : i64, tpu.core_type = #tpu.core_type<tc>, window_params = [{transform_indices = @transform_0, window_bounds = array<i64: 128, 128>}, {pipeline_mode = #tpu.pipeline_mode<synchronous>, transform_indices = @transform_1, window_bounds = array<i64: 1, 128>}, {pipeline_mode = #tpu.pipeline_mode<synchronous>, transform_indices = @transform_2, window_bounds = array<i64: 1, 128>}, {pipeline_mode = #tpu.pipeline_mode<synchronous>, transform_indices = @transform_3, window_bounds = array<i64: 128, 128>}, {transform_indices = @transform_4, window_bounds = array<i64: 128, 128>}, {transform_indices = @transform_5, window_bounds = array<i64: 1, 2, 128>}]} {
    %c0 = arith.constant 0 : index
    %c0_0 = arith.constant 0 : index
    %0 = vector.load %arg1[%c0, %c0_0] : memref<128x128xf32, #tpu.memory_space<vmem>>, vector<128x128xf32>
    %c0_1 = arith.constant 0 : index
    %c0_2 = arith.constant 0 : index
    %1 = vector.load %arg2[%c0_1, %c0_2] : memref<1x128xf32, #tpu.memory_space<vmem>>, vector<1x128xf32>
    %2 = vector.broadcast %1 : vector<1x128xf32> to vector<128x128xf32>
    %3 = arith.mulf %0, %2 : vector<128x128xf32>
    %c0_3 = arith.constant 0 : index
    %c0_4 = arith.constant 0 : index
    %4 = vector.load %arg3[%c0_3, %c0_4] : memref<1x128xf32, #tpu.memory_space<vmem>>, vector<1x128xf32>
    %5 = vector.broadcast %4 : vector<1x128xf32> to vector<128x128xf32>
    %6 = arith.addf %3, %5 : vector<128x128xf32>
    %cst = arith.constant 0.000000e+00 : f32
    %7 = vector.broadcast %cst : f32 to vector<128x128xf32>
    %8 = arith.maximumf %6, %7 : vector<128x128xf32>
    %9 = arith.truncf %8 : vector<128x128xf32> to vector<128x128xbf16>
    %c0_5 = arith.constant 0 : index
    %c0_6 = arith.constant 0 : index
    %10 = vector.load %arg4[%c0_5, %c0_6] : memref<128x128xbf16, #tpu.memory_space<vmem>>, vector<128x128xbf16>
    %cst_7 = arith.constant dense<0.000000e+00> : vector<128x128xf32>
    %11 = tpu.matmul %9, %10, %cst_7 {dimension_numbers = #tpu.dot_dimension_numbers<[1], [0], [0], [1], [0, 0, 1, 1], [], []>} : vector<128x128xbf16>, vector<128x128xbf16>, vector<128x128xf32> -> vector<128x128xf32>
    %12 = arith.truncf %11 : vector<128x128xf32> to vector<128x128xbf16>
    %c0_8 = arith.constant 0 : index
    %c0_9 = arith.constant 0 : index
    %13 = vector.load %arg5[%c0_8, %c0_9] : memref<128x128xbf16, #tpu.memory_space<vmem>>, vector<128x128xbf16>
    tpu.vector_store %arg5[%c0_8, %c0_9], %12 {strides = array<i32>} : memref<128x128xbf16, #tpu.memory_space<vmem>>, vector<128x128xbf16>,
    %cst_10 = arith.constant dense<0.000000e+00> : vector<128xf32>
    %14 = vector.multi_reduction <add>, %11, %cst_10 [0] : vector<128x128xf32> to vector<128xf32>
    %15 = vector.shape_cast %14 : vector<128xf32> to vector<1x128xf32>
    %c0_11 = arith.constant 0 : index
    %c0_12 = arith.constant 0 : index
    %c0_13 = arith.constant 0 : index
    %16 = vector.load %arg6[%c0_11, %c0_12, %c0_13] : memref<1x2x128xf32, #tpu.memory_space<vmem>>, vector<1x1x128xf32>
    %17 = vector.shape_cast %16 : vector<1x1x128xf32> to vector<1x128xf32>
    %18 = vector.shape_cast %15 : vector<1x128xf32> to vector<1x1x128xf32>
    tpu.vector_store %arg6[%c0_11, %c0_12, %c0_13], %18 {strides = array<i32>} : memref<1x2x128xf32, #tpu.memory_space<vmem>>, vector<1x1x128xf32>,
    %19 = arith.mulf %11, %11 : vector<128x128xf32>
    %cst_14 = arith.constant dense<0.000000e+00> : vector<128xf32>
    %20 = vector.multi_reduction <add>, %19, %cst_14 [0] : vector<128x128xf32> to vector<128xf32>
    %21 = vector.shape_cast %20 : vector<128xf32> to vector<1x128xf32>
    %c0_15 = arith.constant 0 : index
    %c1 = arith.constant 1 : index
    %c0_16 = arith.constant 0 : index
    %22 = vector.load %arg6[%c0_15, %c1, %c0_16] : memref<1x2x128xf32, #tpu.memory_space<vmem>>, vector<1x1x128xf32>
    %23 = vector.shape_cast %22 : vector<1x1x128xf32> to vector<1x128xf32>
    %24 = vector.shape_cast %21 : vector<1x128xf32> to vector<1x1x128xf32>
    tpu.vector_store %arg6[%c0_15, %c1, %c0_16], %24 {strides = array<i32>} : memref<1x2x128xf32, #tpu.memory_space<vmem>>, vector<1x1x128xf32>,
    return
  }
  func.func @transform_0(%arg0: i32) -> (i32, i32) {
    %c0_i32 = arith.constant 0 : i32
    %c0_i32_0 = arith.constant 0 : i32
    return %arg0, %c0_i32 : i32, i32
  }
  func.func @transform_1(%arg0: i32) -> (i32, i32) {
    %c0_i32 = arith.constant 0 : i32
    %c0_i32_0 = arith.constant 0 : i32
    %c0_i32_1 = arith.constant 0 : i32
    return %c0_i32, %c0_i32_0 : i32, i32
  }
  func.func @transform_2(%arg0: i32) -> (i32, i32) {
    %c0_i32 = arith.constant 0 : i32
    %c0_i32_0 = arith.constant 0 : i32
    %c0_i32_1 = arith.constant 0 : i32
    return %c0_i32, %c0_i32_0 : i32, i32
  }
  func.func @transform_3(%arg0: i32) -> (i32, i32) {
    %c0_i32 = arith.constant 0 : i32
    %c0_i32_0 = arith.constant 0 : i32
    %c0_i32_1 = arith.constant 0 : i32
    return %c0_i32, %c0_i32_0 : i32, i32
  }
  func.func @transform_4(%arg0: i32) -> (i32, i32) {
    %c0_i32 = arith.constant 0 : i32
    %c0_i32_0 = arith.constant 0 : i32
    return %arg0, %c0_i32 : i32, i32
  }
  func.func @transform_5(%arg0: i32) -> (i32, i32, i32) {
    %c0_i32 = arith.constant 0 : i32
    %c0_i32_0 = arith.constant 0 : i32
    %c0_i32_1 = arith.constant 0 : i32
    return %arg0, %c0_i32, %c0_i32_0 : i32, i32, i32
  }
}

module attributes {stable_mosaic.version = 11 : i64} {
  func.func @_bn_conv3x3_stats_kernel(%arg0: i32, %arg1: memref<256x128xbf16, #tpu.memory_space<vmem>>, %arg2: memref<1x128xf32, #tpu.memory_space<vmem>>, %arg3: memref<1x128xf32, #tpu.memory_space<vmem>>, %arg4: memref<3x384x128xbf16, #tpu.memory_space<vmem>>, %arg5: memref<256x128xbf16, #tpu.memory_space<vmem>>, %arg6: memref<1x2x128xf32, #tpu.memory_space<vmem>>, %arg7: memref<288x384xf32, #tpu.memory_space<vmem>>) attributes {dimension_semantics = [#tpu.dimension_semantics<parallel>], iteration_bounds = array<i64: 2>, scalar_prefetch = 0 : i64, scratch_operands = 1 : i64, tpu.core_type = #tpu.core_type<tc>, window_params = [{transform_indices = @transform_0, window_bounds = array<i64: 256, 128>}, {pipeline_mode = #tpu.pipeline_mode<synchronous>, transform_indices = @transform_1, window_bounds = array<i64: 1, 128>}, {pipeline_mode = #tpu.pipeline_mode<synchronous>, transform_indices = @transform_2, window_bounds = array<i64: 1, 128>}, {pipeline_mode = #tpu.pipeline_mode<synchronous>, transform_indices = @transform_3, window_bounds = array<i64: 3, 384, 128>}, {transform_indices = @transform_4, window_bounds = array<i64: 256, 128>}, {transform_indices = @transform_5, window_bounds = array<i64: 1, 2, 128>}]} {
    %cst = arith.constant 0.000000e+00 : f32
    %0 = vector.broadcast %cst : f32 to vector<32x384xf32>
    %c0 = arith.constant 0 : index
    %c0_0 = arith.constant 0 : index
    %1 = vector.load %arg7[%c0, %c0_0] : memref<288x384xf32, #tpu.memory_space<vmem>>, vector<32x384xf32>
    tpu.vector_store %arg7[%c0, %c0_0], %0 {strides = array<i32>} : memref<288x384xf32, #tpu.memory_space<vmem>>, vector<32x384xf32>,
    %c256 = arith.constant 256 : index
    %c0_1 = arith.constant 0 : index
    %2 = vector.load %arg7[%c256, %c0_1] : memref<288x384xf32, #tpu.memory_space<vmem>>, vector<32x384xf32>
    tpu.vector_store %arg7[%c256, %c0_1], %0 {strides = array<i32>} : memref<288x384xf32, #tpu.memory_space<vmem>>, vector<32x384xf32>,
    %c0_2 = arith.constant 0 : index
    %c0_3 = arith.constant 0 : index
    %3 = vector.load %arg1[%c0_2, %c0_3] : memref<256x128xbf16, #tpu.memory_space<vmem>>, vector<256x128xbf16>
    %c0_4 = arith.constant 0 : index
    %c0_5 = arith.constant 0 : index
    %4 = vector.load %arg2[%c0_4, %c0_5] : memref<1x128xf32, #tpu.memory_space<vmem>>, vector<1x128xf32>
    %5 = arith.extf %3 : vector<256x128xbf16> to vector<256x128xf32>
    %6 = vector.broadcast %4 : vector<1x128xf32> to vector<256x128xf32>
    %7 = arith.mulf %5, %6 : vector<256x128xf32>
    %c0_6 = arith.constant 0 : index
    %c0_7 = arith.constant 0 : index
    %8 = vector.load %arg3[%c0_6, %c0_7] : memref<1x128xf32, #tpu.memory_space<vmem>>, vector<1x128xf32>
    %9 = vector.broadcast %8 : vector<1x128xf32> to vector<256x128xf32>
    %10 = arith.addf %7, %9 : vector<256x128xf32>
    %cst_8 = arith.constant 0.000000e+00 : f32
    %11 = vector.broadcast %cst_8 : f32 to vector<256x128xf32>
    %12 = arith.maximumf %10, %11 : vector<256x128xf32>
    %13 = tpu.iota {dimensions = array<i32: 0>} : vector<256x1xi32>
    %c16_i32 = arith.constant 16 : i32
    %c0_i32 = arith.constant 0 : i32
    %14 = arith.cmpi eq, %c16_i32, %c0_i32 : i32
    %c1_i32 = arith.constant 1 : i32
    %15 = arith.select %14, %c1_i32, %c16_i32 : i32
    %16 = vector.broadcast %15 : i32 to vector<256x1xi32>
    %17 = arith.remsi %13, %16 : vector<256x1xi32>
    %c0_i32_9 = arith.constant 0 : i32
    %18 = vector.broadcast %c0_i32_9 : i32 to vector<256x1xi32>
    %19 = arith.cmpi ne, %17, %18 : vector<256x1xi32>
    %c0_i32_10 = arith.constant 0 : i32
    %20 = vector.broadcast %c0_i32_10 : i32 to vector<256x1xi32>
    %21 = arith.cmpi slt, %17, %20 : vector<256x1xi32>
    %c0_i32_11 = arith.constant 0 : i32
    %22 = arith.cmpi slt, %15, %c0_i32_11 : i32
    %23 = vector.broadcast %22 : i1 to vector<256x1xi1>
    %24 = vector.broadcast %23 : vector<256x1xi1> to vector<256x1xi1>
    %25 = arith.xori %21, %24 : vector<256x1xi1>
    %26 = arith.andi %25, %19 : vector<256x1xi1>
    %27 = vector.broadcast %15 : i32 to vector<256x1xi32>
    %28 = arith.addi %17, %27 : vector<256x1xi32>
    %29 = arith.select %26, %28, %17 : vector<256x1xi1>, vector<256x1xi32>
    %c15_i32 = arith.constant 15 : i32
    %30 = vector.broadcast %c15_i32 : i32 to vector<256x1xi32>
    %31 = arith.cmpi ne, %29, %30 : vector<256x1xi32>
    %cst_12 = arith.constant 0.000000e+00 : f32
    %32 = vector.shape_cast %31 : vector<256x1xi1> to vector<256x1xi1>
    %33 = vector.broadcast %32 : vector<256x1xi1> to vector<256x128xi1>
    %34 = vector.broadcast %cst_12 : f32 to vector<256x128xf32>
    %35 = arith.select %33, %12, %34 : vector<256x128xi1>, vector<256x128xf32>
    %c0_i32_13 = arith.constant 0 : i32
    %36 = vector.broadcast %c0_i32_13 : i32 to vector<256x1xi32>
    %37 = arith.cmpi ne, %29, %36 : vector<256x1xi32>
    %cst_14 = arith.constant 0.000000e+00 : f32
    %38 = vector.shape_cast %37 : vector<256x1xi1> to vector<256x1xi1>
    %39 = vector.broadcast %38 : vector<256x1xi1> to vector<256x128xi1>
    %40 = vector.broadcast %cst_14 : f32 to vector<256x128xf32>
    %41 = arith.select %39, %12, %40 : vector<256x128xi1>, vector<256x128xf32>
    %c17 = arith.constant 17 : index
    %c0_15 = arith.constant 0 : index
    %42 = vector.load %arg7[%c17, %c0_15] : memref<288x384xf32, #tpu.memory_space<vmem>>, vector<256x128xf32>
    tpu.vector_store %arg7[%c17, %c0_15], %35 {strides = array<i32>} : memref<288x384xf32, #tpu.memory_space<vmem>>, vector<256x128xf32>,
    %c16 = arith.constant 16 : index
    %c128 = arith.constant 128 : index
    %43 = vector.load %arg7[%c16, %c128] : memref<288x384xf32, #tpu.memory_space<vmem>>, vector<256x128xf32>
    tpu.vector_store %arg7[%c16, %c128], %12 {strides = array<i32>} : memref<288x384xf32, #tpu.memory_space<vmem>>, vector<256x128xf32>,
    %c15 = arith.constant 15 : index
    %c256_16 = arith.constant 256 : index
    %44 = vector.load %arg7[%c15, %c256_16] : memref<288x384xf32, #tpu.memory_space<vmem>>, vector<256x128xf32>
    tpu.vector_store %arg7[%c15, %c256_16], %41 {strides = array<i32>} : memref<288x384xf32, #tpu.memory_space<vmem>>, vector<256x128xf32>,
    %c0_17 = arith.constant 0 : index
    %c0_18 = arith.constant 0 : index
    %45 = vector.load %arg7[%c0_17, %c0_18] : memref<288x384xf32, #tpu.memory_space<vmem>>, vector<256x384xf32>
    %46 = arith.truncf %45 : vector<256x384xf32> to vector<256x384xbf16>
    %c0_19 = arith.constant 0 : index
    %c0_20 = arith.constant 0 : index
    %c0_21 = arith.constant 0 : index
    %47 = vector.load %arg4[%c0_19, %c0_20, %c0_21] : memref<3x384x128xbf16, #tpu.memory_space<vmem>>, vector<1x384x128xbf16>
    %48 = vector.shape_cast %47 : vector<1x384x128xbf16> to vector<384x128xbf16>
    %cst_22 = arith.constant dense<0.000000e+00> : vector<256x128xf32>
    %49 = tpu.matmul %46, %48, %cst_22 {dimension_numbers = #tpu.dot_dimension_numbers<[1], [0], [0], [1], [0, 0, 1, 1], [], []>} : vector<256x384xbf16>, vector<384x128xbf16>, vector<256x128xf32> -> vector<256x128xf32>
    %c16_23 = arith.constant 16 : index
    %c0_24 = arith.constant 0 : index
    %50 = vector.load %arg7[%c16_23, %c0_24] : memref<288x384xf32, #tpu.memory_space<vmem>>, vector<256x384xf32>
    %51 = arith.truncf %50 : vector<256x384xf32> to vector<256x384xbf16>
    %c1 = arith.constant 1 : index
    %c0_25 = arith.constant 0 : index
    %c0_26 = arith.constant 0 : index
    %52 = vector.load %arg4[%c1, %c0_25, %c0_26] : memref<3x384x128xbf16, #tpu.memory_space<vmem>>, vector<1x384x128xbf16>
    %53 = vector.shape_cast %52 : vector<1x384x128xbf16> to vector<384x128xbf16>
    %cst_27 = arith.constant dense<0.000000e+00> : vector<256x128xf32>
    %54 = tpu.matmul %51, %53, %cst_27 {dimension_numbers = #tpu.dot_dimension_numbers<[1], [0], [0], [1], [0, 0, 1, 1], [], []>} : vector<256x384xbf16>, vector<384x128xbf16>, vector<256x128xf32> -> vector<256x128xf32>
    %55 = arith.addf %49, %54 : vector<256x128xf32>
    %c32 = arith.constant 32 : index
    %c0_28 = arith.constant 0 : index
    %56 = vector.load %arg7[%c32, %c0_28] : memref<288x384xf32, #tpu.memory_space<vmem>>, vector<256x384xf32>
    %57 = arith.truncf %56 : vector<256x384xf32> to vector<256x384xbf16>
    %c2 = arith.constant 2 : index
    %c0_29 = arith.constant 0 : index
    %c0_30 = arith.constant 0 : index
    %58 = vector.load %arg4[%c2, %c0_29, %c0_30] : memref<3x384x128xbf16, #tpu.memory_space<vmem>>, vector<1x384x128xbf16>
    %59 = vector.shape_cast %58 : vector<1x384x128xbf16> to vector<384x128xbf16>
    %cst_31 = arith.constant dense<0.000000e+00> : vector<256x128xf32>
    %60 = tpu.matmul %57, %59, %cst_31 {dimension_numbers = #tpu.dot_dimension_numbers<[1], [0], [0], [1], [0, 0, 1, 1], [], []>} : vector<256x384xbf16>, vector<384x128xbf16>, vector<256x128xf32> -> vector<256x128xf32>
    %61 = arith.addf %55, %60 : vector<256x128xf32>
    %62 = arith.truncf %61 : vector<256x128xf32> to vector<256x128xbf16>
    %c0_32 = arith.constant 0 : index
    %c0_33 = arith.constant 0 : index
    %63 = vector.load %arg5[%c0_32, %c0_33] : memref<256x128xbf16, #tpu.memory_space<vmem>>, vector<256x128xbf16>
    tpu.vector_store %arg5[%c0_32, %c0_33], %62 {strides = array<i32>} : memref<256x128xbf16, #tpu.memory_space<vmem>>, vector<256x128xbf16>,
    %cst_34 = arith.constant dense<0.000000e+00> : vector<128xf32>
    %64 = vector.multi_reduction <add>, %61, %cst_34 [0] : vector<256x128xf32> to vector<128xf32>
    %65 = vector.shape_cast %64 : vector<128xf32> to vector<1x128xf32>
    %c0_35 = arith.constant 0 : index
    %c0_36 = arith.constant 0 : index
    %c0_37 = arith.constant 0 : index
    %66 = vector.load %arg6[%c0_35, %c0_36, %c0_37] : memref<1x2x128xf32, #tpu.memory_space<vmem>>, vector<1x1x128xf32>
    %67 = vector.shape_cast %66 : vector<1x1x128xf32> to vector<1x128xf32>
    %68 = vector.shape_cast %65 : vector<1x128xf32> to vector<1x1x128xf32>
    tpu.vector_store %arg6[%c0_35, %c0_36, %c0_37], %68 {strides = array<i32>} : memref<1x2x128xf32, #tpu.memory_space<vmem>>, vector<1x1x128xf32>,
    %69 = arith.mulf %61, %61 : vector<256x128xf32>
    %cst_38 = arith.constant dense<0.000000e+00> : vector<128xf32>
    %70 = vector.multi_reduction <add>, %69, %cst_38 [0] : vector<256x128xf32> to vector<128xf32>
    %71 = vector.shape_cast %70 : vector<128xf32> to vector<1x128xf32>
    %c0_39 = arith.constant 0 : index
    %c1_40 = arith.constant 1 : index
    %c0_41 = arith.constant 0 : index
    %72 = vector.load %arg6[%c0_39, %c1_40, %c0_41] : memref<1x2x128xf32, #tpu.memory_space<vmem>>, vector<1x1x128xf32>
    %73 = vector.shape_cast %72 : vector<1x1x128xf32> to vector<1x128xf32>
    %74 = vector.shape_cast %71 : vector<1x128xf32> to vector<1x1x128xf32>
    tpu.vector_store %arg6[%c0_39, %c1_40, %c0_41], %74 {strides = array<i32>} : memref<1x2x128xf32, #tpu.memory_space<vmem>>, vector<1x1x128xf32>,
    return
  }
  func.func @transform_0(%arg0: i32) -> (i32, i32) {
    %c0_i32 = arith.constant 0 : i32
    %c0_i32_0 = arith.constant 0 : i32
    return %arg0, %c0_i32 : i32, i32
  }
  func.func @transform_1(%arg0: i32) -> (i32, i32) {
    %c0_i32 = arith.constant 0 : i32
    %c0_i32_0 = arith.constant 0 : i32
    %c0_i32_1 = arith.constant 0 : i32
    return %c0_i32, %c0_i32_0 : i32, i32
  }
  func.func @transform_2(%arg0: i32) -> (i32, i32) {
    %c0_i32 = arith.constant 0 : i32
    %c0_i32_0 = arith.constant 0 : i32
    %c0_i32_1 = arith.constant 0 : i32
    return %c0_i32, %c0_i32_0 : i32, i32
  }
  func.func @transform_3(%arg0: i32) -> (i32, i32, i32) {
    %c0_i32 = arith.constant 0 : i32
    %c0_i32_0 = arith.constant 0 : i32
    %c0_i32_1 = arith.constant 0 : i32
    %c0_i32_2 = arith.constant 0 : i32
    return %c0_i32, %c0_i32_0, %c0_i32_1 : i32, i32, i32
  }
  func.func @transform_4(%arg0: i32) -> (i32, i32) {
    %c0_i32 = arith.constant 0 : i32
    %c0_i32_0 = arith.constant 0 : i32
    return %arg0, %c0_i32 : i32, i32
  }
  func.func @transform_5(%arg0: i32) -> (i32, i32, i32) {
    %c0_i32 = arith.constant 0 : i32
    %c0_i32_0 = arith.constant 0 : i32
    %c0_i32_1 = arith.constant 0 : i32
    return %arg0, %c0_i32, %c0_i32_0 : i32, i32, i32
  }
}

module attributes {stable_mosaic.version = 11 : i64} {
  func.func @_bn_conv1x1_res_kernel(%arg0: i32, %arg1: memref<128x128xbf16, #tpu.memory_space<vmem>>, %arg2: memref<128x32xf32, #tpu.memory_space<vmem>>, %arg3: memref<1x128xf32, #tpu.memory_space<vmem>>, %arg4: memref<1x128xf32, #tpu.memory_space<vmem>>, %arg5: memref<128x32xbf16, #tpu.memory_space<vmem>>, %arg6: memref<128x32xf32, #tpu.memory_space<vmem>>) attributes {dimension_semantics = [#tpu.dimension_semantics<parallel>], iteration_bounds = array<i64: 4>, scalar_prefetch = 0 : i64, scratch_operands = 0 : i64, tpu.core_type = #tpu.core_type<tc>, window_params = [{transform_indices = @transform_0, window_bounds = array<i64: 128, 128>}, {transform_indices = @transform_1, window_bounds = array<i64: 128, 32>}, {pipeline_mode = #tpu.pipeline_mode<synchronous>, transform_indices = @transform_2, window_bounds = array<i64: 1, 128>}, {pipeline_mode = #tpu.pipeline_mode<synchronous>, transform_indices = @transform_3, window_bounds = array<i64: 1, 128>}, {pipeline_mode = #tpu.pipeline_mode<synchronous>, transform_indices = @transform_4, window_bounds = array<i64: 128, 32>}, {transform_indices = @transform_5, window_bounds = array<i64: 128, 32>}]} {
    %c0 = arith.constant 0 : index
    %c0_0 = arith.constant 0 : index
    %0 = vector.load %arg1[%c0, %c0_0] : memref<128x128xbf16, #tpu.memory_space<vmem>>, vector<128x128xbf16>
    %c0_1 = arith.constant 0 : index
    %c0_2 = arith.constant 0 : index
    %1 = vector.load %arg3[%c0_1, %c0_2] : memref<1x128xf32, #tpu.memory_space<vmem>>, vector<1x128xf32>
    %2 = arith.extf %0 : vector<128x128xbf16> to vector<128x128xf32>
    %3 = vector.broadcast %1 : vector<1x128xf32> to vector<128x128xf32>
    %4 = arith.mulf %2, %3 : vector<128x128xf32>
    %c0_3 = arith.constant 0 : index
    %c0_4 = arith.constant 0 : index
    %5 = vector.load %arg4[%c0_3, %c0_4] : memref<1x128xf32, #tpu.memory_space<vmem>>, vector<1x128xf32>
    %6 = vector.broadcast %5 : vector<1x128xf32> to vector<128x128xf32>
    %7 = arith.addf %4, %6 : vector<128x128xf32>
    %cst = arith.constant 0.000000e+00 : f32
    %8 = vector.broadcast %cst : f32 to vector<128x128xf32>
    %9 = arith.maximumf %7, %8 : vector<128x128xf32>
    %10 = arith.truncf %9 : vector<128x128xf32> to vector<128x128xbf16>
    %c0_5 = arith.constant 0 : index
    %c0_6 = arith.constant 0 : index
    %11 = vector.load %arg5[%c0_5, %c0_6] : memref<128x32xbf16, #tpu.memory_space<vmem>>, vector<128x32xbf16>
    %cst_7 = arith.constant dense<0.000000e+00> : vector<128x32xf32>
    %12 = tpu.matmul %10, %11, %cst_7 {dimension_numbers = #tpu.dot_dimension_numbers<[1], [0], [0], [1], [0, 0, 1, 1], [], []>} : vector<128x128xbf16>, vector<128x32xbf16>, vector<128x32xf32> -> vector<128x32xf32>
    %c0_8 = arith.constant 0 : index
    %c0_9 = arith.constant 0 : index
    %13 = vector.load %arg2[%c0_8, %c0_9] : memref<128x32xf32, #tpu.memory_space<vmem>>, vector<128x32xf32>
    %14 = arith.addf %12, %13 : vector<128x32xf32>
    %c0_10 = arith.constant 0 : index
    %c0_11 = arith.constant 0 : index
    %15 = vector.load %arg6[%c0_10, %c0_11] : memref<128x32xf32, #tpu.memory_space<vmem>>, vector<128x32xf32>
    tpu.vector_store %arg6[%c0_10, %c0_11], %14 {strides = array<i32>} : memref<128x32xf32, #tpu.memory_space<vmem>>, vector<128x32xf32>,
    return
  }
  func.func @transform_0(%arg0: i32) -> (i32, i32) {
    %c0_i32 = arith.constant 0 : i32
    %c0_i32_0 = arith.constant 0 : i32
    return %arg0, %c0_i32 : i32, i32
  }
  func.func @transform_1(%arg0: i32) -> (i32, i32) {
    %c0_i32 = arith.constant 0 : i32
    %c0_i32_0 = arith.constant 0 : i32
    return %arg0, %c0_i32 : i32, i32
  }
  func.func @transform_2(%arg0: i32) -> (i32, i32) {
    %c0_i32 = arith.constant 0 : i32
    %c0_i32_0 = arith.constant 0 : i32
    %c0_i32_1 = arith.constant 0 : i32
    return %c0_i32, %c0_i32_0 : i32, i32
  }
  func.func @transform_3(%arg0: i32) -> (i32, i32) {
    %c0_i32 = arith.constant 0 : i32
    %c0_i32_0 = arith.constant 0 : i32
    %c0_i32_1 = arith.constant 0 : i32
    return %c0_i32, %c0_i32_0 : i32, i32
  }
  func.func @transform_4(%arg0: i32) -> (i32, i32) {
    %c0_i32 = arith.constant 0 : i32
    %c0_i32_0 = arith.constant 0 : i32
    %c0_i32_1 = arith.constant 0 : i32
    return %c0_i32, %c0_i32_0 : i32, i32
  }
  func.func @transform_5(%arg0: i32) -> (i32, i32) {
    %c0_i32 = arith.constant 0 : i32
    %c0_i32_0 = arith.constant 0 : i32
    return %arg0, %c0_i32 : i32, i32
  }
}

</mosaic_0001>

<llo_original>
// kernel: bottleneck_forward.4
$region0: #{bottleneck_forward.4}
  #allocation0 [shape = 'u32[]', space=smem, size = 0x4, offset = 0x4, fixed_abs, tag = 'smem constant byte address 0x4 - core index']
  #allocation1 [shape = 'u32[144,128]{1,0:T(1,128)}', space=vmem, size = 0x12000, scoped, tag = 'internal scratch']
  %s0 = inlined_call_operand.vmem [shape: f32[512,128], index: 0, kind: input, shape index: {}]
  %s1 = inlined_call_operand.vmem [shape: f32[4,2,128], index: 1, kind: output, shape index: {}]
  %s2 = sld [smem:[#allocation0]]
  $region37: #{bottleneck_forward.4} parent=0
    _
  %s4 = ssub.s32 1, %s2
  %s5 = scalar_select 0, %s4, %s2
  loop: start=0, step=1, limit=6
  $region2: #{bottleneck_forward.4} parent=0 // loop_pre_header
    _
  $region3: #{bottleneck_forward.4} parent=0 // loop_header
    %s7 = sphi 0, %s11
    %p8 = scmp.ge.s32.totalorder %s7, 6
    %s17 = sphi 0, %s19
    %s20 = sphi 0, %s17
    %s21 = sphi 0, %s20
    %s37 = sphi 0, %s21
    %s43 = sphi 0, %s45
    %s46 = sphi 0, %s43
    %s47 = sphi 0, %s46
    %s63 = sphi 0, %s47
  $region4: #{bottleneck_forward.4} parent=0 // loop_header_branch
    %10 = sbr.rel (%p8) target = $region8
  $region5: #{bottleneck_forward.4} parent=0 // loop_body
    %s12 = ssub.s32 %s7, 1
    %s13 = ssub.s32 %s7, 2
    %s14 = sadd.s32 %s7, 1
    %s15 = ssub.s32 %s7, %s14
    %p16 = scmp.eq.s32.totalorder %s15, 0
    %s18 = sadd.s32 %s17, 1
    %s19 = scalar_select %p16, %s17, %s18
    %p22 = pneg %p16
    %p23 = scmp.eq.s32.totalorder %s7, 3
    %p24 = por %p22, %p23
    %p25 = scmp.ne.s32.totalorder %s17, %s20
    %p26 = scmp.eq.s32.totalorder %s7, 0
    %p27 = por %p25, %p26
    %p28 = scmp.ne.s32.totalorder %s17, %s20
    %p29 = scmp.eq.s32.totalorder %s12, 3
    %p30 = por %p28, %p29
    %p31 = scmp.ne.s32.totalorder %s20, %s21
    %p32 = scmp.eq.s32.totalorder %s12, 0
    %p33 = por %p31, %p32
    %p34 = scmp.ne.s32.totalorder %s20, %s21
    %p35 = scmp.eq.s32.totalorder %s13, 3
    %p36 = por %p34, %p35
    %p38 = scmp.ne.s32.totalorder %s21, %s37
    %p39 = scmp.eq.s32.totalorder %s13, 0
    %p40 = por %p38, %p39
    %s41 = ssub.s32 %s7, %s14
    %p42 = scmp.eq.s32.totalorder %s41, 0
    %s44 = sadd.s32 %s43, 1
    %s45 = scalar_select %p42, %s43, %s44
    %p48 = pneg %p42
    %p49 = scmp.eq.s32.totalorder %s7, 3
    %p50 = por %p48, %p49
    %p51 = scmp.ne.s32.totalorder %s43, %s46
    %p52 = scmp.eq.s32.totalorder %s7, 0
    %p53 = por %p51, %p52
    %p54 = scmp.ne.s32.totalorder %s43, %s46
    %p55 = scmp.eq.s32.totalorder %s12, 3
    %p56 = por %p54, %p55
    %p57 = scmp.ne.s32.totalorder %s46, %s47
    %p58 = scmp.eq.s32.totalorder %s12, 0
    %p59 = por %p57, %p58
    %p60 = scmp.ne.s32.totalorder %s46, %s47
    %p61 = scmp.eq.s32.totalorder %s13, 3
    %p62 = por %p60, %p61
    %p64 = scmp.ne.s32.totalorder %s47, %s63
    %p65 = scmp.eq.s32.totalorder %s13, 0
    %p66 = por %p64, %p65
    %p67 = scmp.le.s32.totalorder 1, %s7
    %p68 = scmp.lt.s32.totalorder %s7, 5
    %p69 = pnand %p67, %p68
    %p70 = pneg %p69
    // Predicated region
    $region9: #{bottleneck_forward.4} parent=5 // pred_check
      _
    $region10: #{bottleneck_forward.4} parent=5 // pred_check_branch
      %72 = sbr.rel (%p69) target = $region12
    $region11: #{bottleneck_forward.4} parent=5 // pred_region
      %s73 = ssub.s32 %s7, 1
    $region12: #{bottleneck_forward.4} parent=5 // pred_fallthru
      _
    %p74 = scmp.lt.s32.totalorder %s7, 4
    // Predicated region
    $region13: #{bottleneck_forward.4} parent=5 // pred_check
      %p75 = pneg %p74
    $region14: #{bottleneck_forward.4} parent=5 // pred_check_branch
      %77 = sbr.rel (%p75) target = $region16
    $region15: #{bottleneck_forward.4} parent=5 // pred_region
      // Predicated region
      $region17: #{bottleneck_forward.4} parent=15 // pred_check
        %p78 = pneg %p27
      $region18: #{bottleneck_forward.4} parent=15 // pred_check_branch
        %80 = sbr.rel (%p78) target = $region20
      $region19: #{bottleneck_forward.4} parent=15 // pred_region
        %s81 = smul.u32 16, %s7
        %p82 = scmp.lt.s32.totalorder %s81, 63
        %s83 = scalar_select %p82, %s81, 63
        %s84 = smul.addr %s83, 8
        %s85 = scalar_lea.vmem %s0, %s84
        %s86 = smul.u32 16, %s7
      $region20: #{bottleneck_forward.4} parent=15 // pred_fallthru
        _
    $region16: #{bottleneck_forward.4} parent=5 // pred_fallthru
      _
    %p87 = scmp.le.s32.totalorder 1, %s7
    %p88 = scmp.lt.s32.totalorder %s7, 5
    %p89 = pnand %p87, %p88
    %p90 = pneg %p89
    // Predicated region
    $region21: #{bottleneck_forward.4} parent=5 // pred_check
      _
    $region22: #{bottleneck_forward.4} parent=5 // pred_check_branch
      %92 = sbr.rel (%p89) target = $region24
    $region23: #{bottleneck_forward.4} parent=5 // pred_region
      %s93 = ssub.s32 %s7, 1
      %s94 = smul.u32 16, %s12
      %p95 = scmp.lt.s32.totalorder %s94, 63
      %s96 = scalar_select %p95, %s94, 63
      %s97 = smul.addr %s96, 8
      %s98 = scalar_lea.vmem %s0, %s97
      %p99 = pneg %p33
      %p100 = pneg %p30
      %p101 = pneg %p59
      %p102 = pneg %p56
      %p103 = scmp.lt.s32.totalorder %s12, 3
      %s104 = scalar_select %p103, %s12, 3
      %s105 = smul.addr %s104, 2
      %s106 = scalar_lea.vmem %s1, %s105
      %s107 = smul.u32 16, %s12
      %p108 = scmp.lt.s32.totalorder %s107, 63
      %s109 = scalar_select %p108, %s107, 63
      %s110 = smul.addr %s109, 8
      %s111 = scalar_lea.vmem %s0, %s110
      %s112 = smul.u32 16, %s12
      %p113 = scmp.lt.s32.totalorder %s12, 3
      %s114 = scalar_select %p113, %s12, 3
      %s115 = smul.addr %s114, 2
      %s116 = scalar_lea.vmem %s1, %s115
      %v117 = vld [vmem:[%s111] sm:$0xff]
      %v118 = vld [vmem:[%s111 + $0x8] sm:$0xff]
      %v119 = vld [vmem:[%s111 + $0x10] sm:$0xff]
      %v120 = vld [vmem:[%s111 + $0x18] sm:$0xff]
      %v121 = vld [vmem:[%s111 + $0x20] sm:$0xff]
      %v122 = vld [vmem:[%s111 + $0x28] sm:$0xff]
      %v123 = vld [vmem:[%s111 + $0x30] sm:$0xff]
      %v124 = vld [vmem:[%s111 + $0x38] sm:$0xff]
      %v125 = vld [vmem:[%s111 + $0x40] sm:$0xff]
      %v126 = vld [vmem:[%s111 + $0x48] sm:$0xff]
      %v127 = vld [vmem:[%s111 + $0x50] sm:$0xff]
      %v128 = vld [vmem:[%s111 + $0x58] sm:$0xff]
      %v129 = vld [vmem:[%s111 + $0x60] sm:$0xff]
      %v130 = vld [vmem:[%s111 + $0x68] sm:$0xff]
      %v131 = vld [vmem:[%s111 + $0x70] sm:$0xff]
      %v132 = vld [vmem:[%s111 + $0x78] sm:$0xff]
      %v133 = vadd.f32 %v117, %v118
      %v134 = vadd.f32 %v133, %v119
      %v135 = vadd.f32 %v134, %v120
      %v136 = vadd.f32 %v135, %v121
      %v137 = vadd.f32 %v136, %v122
      %v138 = vadd.f32 %v137, %v123
      %v139 = vadd.f32 %v138, %v124
      %v140 = vadd.f32 %v139, %v125
      %v141 = vadd.f32 %v140, %v126
      %v142 = vadd.f32 %v141, %v127
      %v143 = vadd.f32 %v142, %v128
      %v144 = vadd.f32 %v143, %v129
      %v145 = vadd.f32 %v144, %v130
      %v146 = vadd.f32 %v145, %v131
      %v147 = vadd.f32 %v146, %v132
      %v148 = vrot.slane %v147, 4
      %v149 = vadd.f32 %v147, %v148
      %v150 = vrot.slane %v149, 2
      %v151 = vadd.f32 %v149, %v150
      %v152 = vrot.slane %v151, 1
      %v153 = vadd.f32 %v151, %v152
      %154 = vst [vmem:[%s116] sm:$0x1] %v153
      %v155 = vmul.f32 %v117, %v117
      %v156 = vmul.f32 %v118, %v118
      %v157 = vmul.f32 %v119, %v119
      %v158 = vmul.f32 %v120, %v120
      %v159 = vmul.f32 %v121, %v121
      %v160 = vmul.f32 %v122, %v122
      %v161 = vmul.f32 %v123, %v123
      %v162 = vmul.f32 %v124, %v124
      %v163 = vmul.f32 %v125, %v125
      %v164 = vmul.f32 %v126, %v126
      %v165 = vmul.f32 %v127, %v127
      %v166 = vmul.f32 %v128, %v128
      %v167 = vmul.f32 %v129, %v129
      %v168 = vmul.f32 %v130, %v130
      %v169 = vmul.f32 %v131, %v131
      %v170 = vmul.f32 %v132, %v132
      %v171 = vadd.f32 %v155, %v156
      %v172 = vadd.f32 %v171, %v157
      %v173 = vadd.f32 %v172, %v158
      %v174 = vadd.f32 %v173, %v159
      %v175 = vadd.f32 %v174, %v160
      %v176 = vadd.f32 %v175, %v161
      %v177 = vadd.f32 %v176, %v162
      %v178 = vadd.f32 %v177, %v163
      %v179 = vadd.f32 %v178, %v164
      %v180 = vadd.f32 %v179, %v165
      %v181 = vadd.f32 %v180, %v166
      %v182 = vadd.f32 %v181, %v167
      %v183 = vadd.f32 %v182, %v168
      %v184 = vadd.f32 %v183, %v169
      %v185 = vadd.f32 %v184, %v170
      %v186 = vrot.slane %v185, 4
      %v187 = vadd.f32 %v185, %v186
      %v188 = vrot.slane %v187, 2
      %v189 = vadd.f32 %v187, %v188
      %v190 = vrot.slane %v189, 1
      %v191 = vadd.f32 %v189, %v190
      %192 = vst [vmem:[%s116 + $0x1] sm:$0x1] %v191
      %p193 = scmp.lt.s32.totalorder %s12, 3
      %s194 = scalar_select %p193, %s12, 3
      %s195 = smul.addr %s194, 2
      %s196 = scalar_lea.vmem %s1, %s195
      // Predicated region
      $region25: #{bottleneck_forward.4} parent=23 // pred_check
        %p197 = pneg %p56
      $region26: #{bottleneck_forward.4} parent=23 // pred_check_branch
        %199 = sbr.rel (%p197) target = $region28
      $region27: #{bottleneck_forward.4} parent=23 // pred_region
        _
      $region28: #{bottleneck_forward.4} parent=23 // pred_fallthru
        _
    $region24: #{bottleneck_forward.4} parent=5 // pred_fallthru
      _
    %p200 = scmp.le.s32.totalorder 2, %s7
    // Predicated region
    $region29: #{bottleneck_forward.4} parent=5 // pred_check
      %p201 = pneg %p200
    $region30: #{bottleneck_forward.4} parent=5 // pred_check_branch
      %203 = sbr.rel (%p201) target = $region32
    $region31: #{bottleneck_forward.4} parent=5 // pred_region
      %s204 = ssub.s32 %s7, 2
      // Predicated region
      $region33: #{bottleneck_forward.4} parent=31 // pred_check
        %p205 = pneg %p62
      $region34: #{bottleneck_forward.4} parent=31 // pred_check_branch
        %207 = sbr.rel (%p205) target = $region36
      $region35: #{bottleneck_forward.4} parent=31 // pred_region
        %p208 = scmp.lt.s32.totalorder %s13, 3
        %s209 = scalar_select %p208, %s13, 3
        %s210 = smul.addr %s209, 2
        %s211 = scalar_lea.vmem %s1, %s210
      $region36: #{bottleneck_forward.4} parent=31 // pred_fallthru
        _
    $region32: #{bottleneck_forward.4} parent=5 // pred_fallthru
      _
  $region6: #{bottleneck_forward.4} parent=0 // loop_footer
    %s11 = sadd.s32 1, %s7
  $region7: #{bottleneck_forward.4} parent=0 // loop_footer_branch
    %6 = sbr.rel target = $region3
  $region8: #{bottleneck_forward.4} parent=0 // loop_exit
    _

// kernel: bottleneck_forward.5
$region0: #{bottleneck_forward.5}
  #allocation0 [shape = 'u32[]', space=smem, size = 0x4, offset = 0x4, fixed_abs, tag = 'smem constant byte address 0x4 - core index']
  #allocation1 [shape = 'u32[144,128]{1,0:T(1,128)}', space=vmem, size = 0x12000, scoped, tag = 'internal scratch']
  %s0 = inlined_call_operand.vmem [shape: f32[512,128], index: 0, kind: input, shape index: {}]
  %s1 = inlined_call_operand.vmem [shape: f32[1,128], index: 1, kind: input, shape index: {}]
  %s2 = inlined_call_operand.vmem [shape: f32[1,128], index: 2, kind: input, shape index: {}]
  %s3 = inlined_call_operand.vmem [shape: bf16[128,128], index: 3, kind: input, shape index: {}]
  %s4 = inlined_call_operand.vmem [shape: bf16[512,128], index: 4, kind: output, shape index: {0}]
  %s5 = inlined_call_operand.vmem [shape: f32[4,2,128], index: 5, kind: output, shape index: {1}]
  %6 = xla_tuple %s4, %s5
  %s7 = sld [smem:[#allocation0]]
  $region57: #{bottleneck_forward.5} parent=0
    _
  %s9 = ssub.s32 1, %s7
  %s10 = scalar_select 0, %s9, %s7
  loop: start=0, step=1, limit=6
  $region2: #{bottleneck_forward.5} parent=0 // loop_pre_header
    _
  $region3: #{bottleneck_forward.5} parent=0 // loop_header
    %s12 = sphi 0, %s16
    %p13 = scmp.ge.s32.totalorder %s12, 6
    %s22 = sphi 0, %s24
    %s25 = sphi 0, %s22
    %s26 = sphi 0, %s25
    %s42 = sphi 0, %s26
    %s46 = sphi 0, %s46
    %s48 = sphi 0, %s46
    %s49 = sphi 0, %s48
    %s63 = sphi 0, %s49
    %s67 = sphi 0, %s67
    %s69 = sphi 0, %s67
    %s70 = sphi 0, %s69
    %s84 = sphi 0, %s70
    %s88 = sphi 0, %s88
    %s90 = sphi 0, %s88
    %s91 = sphi 0, %s90
    %s105 = sphi 0, %s91
    %s111 = sphi 0, %s113
    %s114 = sphi 0, %s111
    %s115 = sphi 0, %s114
    %s131 = sphi 0, %s115
    %s137 = sphi 0, %s139
    %s140 = sphi 0, %s137
    %s141 = sphi 0, %s140
    %s157 = sphi 0, %s141
  $region4: #{bottleneck_forward.5} parent=0 // loop_header_branch
    %15 = sbr.rel (%p13) target = $region8
  $region5: #{bottleneck_forward.5} parent=0 // loop_body
    %s17 = ssub.s32 %s12, 1
    %s18 = ssub.s32 %s12, 2
    %s19 = sadd.s32 %s12, 1
    %s20 = ssub.s32 %s12, %s19
    %p21 = scmp.eq.s32.totalorder %s20, 0
    %s23 = sadd.s32 %s22, 1
    %s24 = scalar_select %p21, %s22, %s23
    %p27 = pneg %p21
    %p28 = scmp.eq.s32.totalorder %s12, 3
    %p29 = por %p27, %p28
    %p30 = scmp.ne.s32.totalorder %s22, %s25
    %p31 = scmp.eq.s32.totalorder %s12, 0
    %p32 = por %p30, %p31
    %p33 = scmp.ne.s32.totalorder %s22, %s25
    %p34 = scmp.eq.s32.totalorder %s17, 3
    %p35 = por %p33, %p34
    %p36 = scmp.ne.s32.totalorder %s25, %s26
    %p37 = scmp.eq.s32.totalorder %s17, 0
    %p38 = por %p36, %p37
    %p39 = scmp.ne.s32.totalorder %s25, %s26
    %p40 = scmp.eq.s32.totalorder %s18, 3
    %p41 = por %p39, %p40
    %p43 = scmp.ne.s32.totalorder %s26, %s42
    %p44 = scmp.eq.s32.totalorder %s18, 0
    %p45 = por %p43, %p44
    %s47 = sadd.s32 %s46, 1
    %p50 = scmp.eq.s32.totalorder %s12, 3
    %p51 = scmp.ne.s32.totalorder %s46, %s48
    %p52 = scmp.eq.s32.totalorder %s12, 0
    %p53 = por %p51, %p52
    %p54 = scmp.ne.s32.totalorder %s46, %s48
    %p55 = scmp.eq.s32.totalorder %s17, 3
    %p56 = por %p54, %p55
    %p57 = scmp.ne.s32.totalorder %s48, %s49
    %p58 = scmp.eq.s32.totalorder %s17, 0
    %p59 = por %p57, %p58
    %p60 = scmp.ne.s32.totalorder %s48, %s49
    %p61 = scmp.eq.s32.totalorder %s18, 3
    %p62 = por %p60, %p61
    %p64 = scmp.ne.s32.totalorder %s49, %s63
    %p65 = scmp.eq.s32.totalorder %s18, 0
    %p66 = por %p64, %p65
    %s68 = sadd.s32 %s67, 1
    %p71 = scmp.eq.s32.totalorder %s12, 3
    %p72 = scmp.ne.s32.totalorder %s67, %s69
    %p73 = scmp.eq.s32.totalorder %s12, 0
    %p74 = por %p72, %p73
    %p75 = scmp.ne.s32.totalorder %s67, %s69
    %p76 = scmp.eq.s32.totalorder %s17, 3
    %p77 = por %p75, %p76
    %p78 = scmp.ne.s32.totalorder %s69, %s70
    %p79 = scmp.eq.s32.totalorder %s17, 0
    %p80 = por %p78, %p79
    %p81 = scmp.ne.s32.totalorder %s69, %s70
    %p82 = scmp.eq.s32.totalorder %s18, 3
    %p83 = por %p81, %p82
    %p85 = scmp.ne.s32.totalorder %s70, %s84
    %p86 = scmp.eq.s32.totalorder %s18, 0
    %p87 = por %p85, %p86
    %s89 = sadd.s32 %s88, 1
    %p92 = scmp.eq.s32.totalorder %s12, 3
    %p93 = scmp.ne.s32.totalorder %s88, %s90
    %p94 = scmp.eq.s32.totalorder %s12, 0
    %p95 = por %p93, %p94
    %p96 = scmp.ne.s32.totalorder %s88, %s90
    %p97 = scmp.eq.s32.totalorder %s17, 3
    %p98 = por %p96, %p97
    %p99 = scmp.ne.s32.totalorder %s90, %s91
    %p100 = scmp.eq.s32.totalorder %s17, 0
    %p101 = por %p99, %p100
    %p102 = scmp.ne.s32.totalorder %s90, %s91
    %p103 = scmp.eq.s32.totalorder %s18, 3
    %p104 = por %p102, %p103
    %p106 = scmp.ne.s32.totalorder %s91, %s105
    %p107 = scmp.eq.s32.totalorder %s18, 0
    %p108 = por %p106, %p107
    %s109 = ssub.s32 %s12, %s19
    %p110 = scmp.eq.s32.totalorder %s109, 0
    %s112 = sadd.s32 %s111, 1
    %s113 = scalar_select %p110, %s111, %s112
    %p116 = pneg %p110
    %p117 = scmp.eq.s32.totalorder %s12, 3
    %p118 = por %p116, %p117
    %p119 = scmp.ne.s32.totalorder %s111, %s114
    %p120 = scmp.eq.s32.totalorder %s12, 0
    %p121 = por %p119, %p120
    %p122 = scmp.ne.s32.totalorder %s111, %s114
    %p123 = scmp.eq.s32.totalorder %s17, 3
    %p124 = por %p122, %p123
    %p125 = scmp.ne.s32.totalorder %s114, %s115
    %p126 = scmp.eq.s32.totalorder %s17, 0
    %p127 = por %p125, %p126
    %p128 = scmp.ne.s32.totalorder %s114, %s115
    %p129 = scmp.eq.s32.totalorder %s18, 3
    %p130 = por %p128, %p129
    %p132 = scmp.ne.s32.totalorder %s115, %s131
    %p133 = scmp.eq.s32.totalorder %s18, 0
    %p134 = por %p132, %p133
    %s135 = ssub.s32 %s12, %s19
    %p136 = scmp.eq.s32.totalorder %s135, 0
    %s138 = sadd.s32 %s137, 1
    %s139 = scalar_select %p136, %s137, %s138
    %p142 = pneg %p136
    %p143 = scmp.eq.s32.totalorder %s12, 3
    %p144 = por %p142, %p143
    %p145 = scmp.ne.s32.totalorder %s137, %s140
    %p146 = scmp.eq.s32.totalorder %s12, 0
    %p147 = por %p145, %p146
    %p148 = scmp.ne.s32.totalorder %s137, %s140
    %p149 = scmp.eq.s32.totalorder %s17, 3
    %p150 = por %p148, %p149
    %p151 = scmp.ne.s32.totalorder %s140, %s141
    %p152 = scmp.eq.s32.totalorder %s17, 0
    %p153 = por %p151, %p152
    %p154 = scmp.ne.s32.totalorder %s140, %s141
    %p155 = scmp.eq.s32.totalorder %s18, 3
    %p156 = por %p154, %p155
    %p158 = scmp.ne.s32.totalorder %s141, %s157
    %p159 = scmp.eq.s32.totalorder %s18, 0
    %p160 = por %p158, %p159
    %p161 = scmp.le.s32.totalorder 1, %s12
    %p162 = scmp.lt.s32.totalorder %s12, 5
    %p163 = pnand %p161, %p162
    %p164 = pneg %p163
    // Predicated region
    $region9: #{bottleneck_forward.5} parent=5 // pred_check
      _
    $region10: #{bottleneck_forward.5} parent=5 // pred_check_branch
      %166 = sbr.rel (%p163) target = $region12
    $region11: #{bottleneck_forward.5} parent=5 // pred_region
      %s167 = ssub.s32 %s12, 1
      // Predicated region
      $region13: #{bottleneck_forward.5} parent=11 // pred_check
        %p168 = pneg %p59
      $region14: #{bottleneck_forward.5} parent=11 // pred_check_branch
        %170 = sbr.rel (%p168) target = $region16
      $region15: #{bottleneck_forward.5} parent=11 // pred_region
        _
      $region16: #{bottleneck_forward.5} parent=11 // pred_fallthru
        _
      // Predicated region
      $region17: #{bottleneck_forward.5} parent=11 // pred_check
        %p171 = pneg %p80
      $region18: #{bottleneck_forward.5} parent=11 // pred_check_branch
        %173 = sbr.rel (%p171) target = $region20
      $region19: #{bottleneck_forward.5} parent=11 // pred_region
        _
      $region20: #{bottleneck_forward.5} parent=11 // pred_fallthru
        _
      // Predicated region
      $region21: #{bottleneck_forward.5} parent=11 // pred_check
        %p174 = pneg %p101
      $region22: #{bottleneck_forward.5} parent=11 // pred_check_branch
        %176 = sbr.rel (%p174) target = $region24
      $region23: #{bottleneck_forward.5} parent=11 // pred_region
        _
      $region24: #{bottleneck_forward.5} parent=11 // pred_fallthru
        _
    $region12: #{bottleneck_forward.5} parent=5 // pred_fallthru
      _
    %p177 = scmp.lt.s32.totalorder %s12, 4
    // Predicated region
    $region25: #{bottleneck_forward.5} parent=5 // pred_check
      %p178 = pneg %p177
    $region26: #{bottleneck_forward.5} parent=5 // pred_check_branch
      %180 = sbr.rel (%p178) target = $region28
    $region27: #{bottleneck_forward.5} parent=5 // pred_region
      // Predicated region
      $region29: #{bottleneck_forward.5} parent=27 // pred_check
        %p181 = pneg %p32
      $region30: #{bottleneck_forward.5} parent=27 // pred_check_branch
        %183 = sbr.rel (%p181) target = $region32
      $region31: #{bottleneck_forward.5} parent=27 // pred_region
        %s184 = smul.u32 16, %s12
        %p185 = scmp.lt.s32.totalorder %s184, 63
        %s186 = scalar_select %p185, %s184, 63
        %s187 = smul.addr %s186, 8
        %s188 = scalar_lea.vmem %s0, %s187
        %s189 = smul.u32 16, %s12
      $region32: #{bottleneck_forward.5} parent=27 // pred_fallthru
        _
    $region28: #{bottleneck_forward.5} parent=5 // pred_fallthru
      _
    %p190 = scmp.le.s32.totalorder 1, %s12
    %p191 = scmp.lt.s32.totalorder %s12, 5
    %p192 = pnand %p190, %p191
    %p193 = pneg %p192
    // Predicated region
    $region33: #{bottleneck_forward.5} parent=5 // pred_check
      _
    $region34: #{bottleneck_forward.5} parent=5 // pred_check_branch
      %195 = sbr.rel (%p192) target = $region36
    $region35: #{bottleneck_forward.5} parent=5 // pred_region
      %s196 = ssub.s32 %s12, 1
      %s197 = smul.u32 16, %s17
      %p198 = scmp.lt.s32.totalorder %s197, 63
      %s199 = scalar_select %p198, %s197, 63
      %s200 = smul.addr %s199, 8
      %s201 = scalar_lea.vmem %s0, %s200
      %p202 = pneg %p38
      %p203 = pneg %p35
      %p204 = pneg %p59
      %p205 = pneg %p56
      %p206 = pneg %p80
      %p207 = pneg %p77
      %p208 = pneg %p101
      %p209 = pneg %p98
      %p210 = pneg %p127
      %p211 = pneg %p124
      %s212 = smul.u32 16, %s17
      %p213 = scmp.lt.s32.totalorder %s212, 63
      %s214 = scalar_select %p213, %s212, 63
      %s215 = smul.addr %s214, 4
      %s216 = scalar_lea.vmem %s4, %s215
      %p217 = pneg %p153
      %p218 = pneg %p150
      %p219 = scmp.lt.s32.totalorder %s17, 3
      %s220 = scalar_select %p219, %s17, 3
      %s221 = smul.addr %s220, 2
      %s222 = scalar_lea.vmem %s5, %s221
      %s223 = smul.u32 16, %s17
      %p224 = scmp.lt.s32.totalorder %s223, 63
      %s225 = scalar_select %p224, %s223, 63
      %s226 = smul.addr %s225, 8
      %s227 = scalar_lea.vmem %s0, %s226
      %s228 = smul.u32 16, %s17
      %s229 = smul.u32 16, %s17
      %p230 = scmp.lt.s32.totalorder %s229, 63
      %s231 = scalar_select %p230, %s229, 63
      %s232 = smul.addr %s231, 4
      %s233 = scalar_lea.vmem %s4, %s232
      %s234 = smul.u32 16, %s17
      %p235 = scmp.lt.s32.totalorder %s17, 3
      %s236 = scalar_select %p235, %s17, 3
      %s237 = smul.addr %s236, 2
      %s238 = scalar_lea.vmem %s5, %s237
      %v240 = vld [vmem:[%s227] sm:$0xff]
      %v241 = vld [vmem:[%s227 + $0x8] sm:$0xff]
      %v242 = vld [vmem:[%s227 + $0x10] sm:$0xff]
      %v243 = vld [vmem:[%s227 + $0x18] sm:$0xff]
      %v244 = vld [vmem:[%s227 + $0x20] sm:$0xff]
      %v245 = vld [vmem:[%s227 + $0x28] sm:$0xff]
      %v246 = vld [vmem:[%s227 + $0x30] sm:$0xff]
      %v247 = vld [vmem:[%s227 + $0x38] sm:$0xff]
      %v248 = vld [vmem:[%s227 + $0x40] sm:$0xff]
      %v249 = vld [vmem:[%s227 + $0x48] sm:$0xff]
      %v250 = vld [vmem:[%s227 + $0x50] sm:$0xff]
      %v251 = vld [vmem:[%s227 + $0x58] sm:$0xff]
      %v252 = vld [vmem:[%s227 + $0x60] sm:$0xff]
      %v253 = vld [vmem:[%s227 + $0x68] sm:$0xff]
      %v254 = vld [vmem:[%s227 + $0x70] sm:$0xff]
      %v255 = vld [vmem:[%s227 + $0x78] sm:$0xff]
      %v256 = vld [vmem:[%s1] sm:$0x1]
      %v258 = vlaneseq
      %v259 = vshrl.u32 %v258, 7
      %v260 = vsub.s32 0, %v259
      %v261 = vrot.slane %v256, %v260
      %v263 = vmul.f32 %v240, %v261
      %v264 = vmul.f32 %v241, %v261
      %v265 = vmul.f32 %v242, %v261
      %v266 = vmul.f32 %v243, %v261
      %v267 = vmul.f32 %v244, %v261
      %v268 = vmul.f32 %v245, %v261
      %v269 = vmul.f32 %v246, %v261
      %v270 = vmul.f32 %v247, %v261
      %v271 = vmul.f32 %v248, %v261
      %v272 = vmul.f32 %v249, %v261
      %v273 = vmul.f32 %v250, %v261
      %v274 = vmul.f32 %v251, %v261
      %v275 = vmul.f32 %v252, %v261
      %v276 = vmul.f32 %v253, %v261
      %v277 = vmul.f32 %v254, %v261
      %v278 = vmul.f32 %v255, %v261
      %v279 = vld [vmem:[%s2] sm:$0x1]
      %v281 = vlaneseq
      %v282 = vshrl.u32 %v281, 7
      %v283 = vsub.s32 0, %v282
      %v284 = vrot.slane %v279, %v283
      %v286 = vadd.f32 %v263, %v284
      %v287 = vadd.f32 %v264, %v284
      %v288 = vadd.f32 %v265, %v284
      %v289 = vadd.f32 %v266, %v284
      %v290 = vadd.f32 %v267, %v284
      %v291 = vadd.f32 %v268, %v284
      %v292 = vadd.f32 %v269, %v284
      %v293 = vadd.f32 %v270, %v284
      %v294 = vadd.f32 %v271, %v284
      %v295 = vadd.f32 %v272, %v284
      %v296 = vadd.f32 %v273, %v284
      %v297 = vadd.f32 %v274, %v284
      %v298 = vadd.f32 %v275, %v284
      %v299 = vadd.f32 %v276, %v284
      %v300 = vadd.f32 %v277, %v284
      %v301 = vadd.f32 %v278, %v284
      %v302 = vmax.f32 %v286, 0.0
      %v303 = vmax.f32 %v287, 0.0
      %v304 = vmax.f32 %v288, 0.0
      %v305 = vmax.f32 %v289, 0.0
      %v306 = vmax.f32 %v290, 0.0
      %v307 = vmax.f32 %v291, 0.0
      %v308 = vmax.f32 %v292, 0.0
      %v309 = vmax.f32 %v293, 0.0
      %v310 = vmax.f32 %v294, 0.0
      %v311 = vmax.f32 %v295, 0.0
      %v312 = vmax.f32 %v296, 0.0
      %v313 = vmax.f32 %v297, 0.0
      %v314 = vmax.f32 %v298, 0.0
      %v315 = vmax.f32 %v299, 0.0
      %v316 = vmax.f32 %v300, 0.0
      %v317 = vmax.f32 %v301, 0.0
      %v318 = vpack.c.bf16 %v303, %v302
      %v319 = vpack.c.bf16 %v305, %v304
      %v320 = vpack.c.bf16 %v307, %v306
      %v321 = vpack.c.bf16 %v309, %v308
      %v322 = vpack.c.bf16 %v311, %v310
      %v323 = vpack.c.bf16 %v313, %v312
      %v324 = vpack.c.bf16 %v315, %v314
      %v325 = vpack.c.bf16 %v317, %v316
      %v326 = vld [vmem:[%s3] sm:$0xf]
      %v327 = vld [vmem:[%s3 + $0x4] sm:$0xf]
      %v328 = vld [vmem:[%s3 + $0x8] sm:$0xf]
      %v329 = vld [vmem:[%s3 + $0xc] sm:$0xf]
      %v330 = vld [vmem:[%s3 + $0x10] sm:$0xf]
      %v331 = vld [vmem:[%s3 + $0x14] sm:$0xf]
      %v332 = vld [vmem:[%s3 + $0x18] sm:$0xf]
      %v333 = vld [vmem:[%s3 + $0x1c] sm:$0xf]
      %v334 = vld [vmem:[%s3 + $0x20] sm:$0xf]
      %v335 = vld [vmem:[%s3 + $0x24] sm:$0xf]
      %v336 = vld [vmem:[%s3 + $0x28] sm:$0xf]
      %v337 = vld [vmem:[%s3 + $0x2c] sm:$0xf]
      %v338 = vld [vmem:[%s3 + $0x30] sm:$0xf]
      %v339 = vld [vmem:[%s3 + $0x34] sm:$0xf]
      %v340 = vld [vmem:[%s3 + $0x38] sm:$0xf]
      %v341 = vld [vmem:[%s3 + $0x3c] sm:$0xf]
      %v358 = vunpack.c.l.b16 %v326
      %v359 = vunpack.c.l.b16 %v327
      %v360 = vunpack.c.l.b16 %v328
      %v361 = vunpack.c.l.b16 %v329
      %v362 = vunpack.c.l.b16 %v330
      %v363 = vunpack.c.l.b16 %v331
      %v364 = vunpack.c.l.b16 %v332
      %v365 = vunpack.c.l.b16 %v333
      %v366 = vunpack.c.l.b16 %v334
      %v367 = vunpack.c.l.b16 %v335
      %v368 = vunpack.c.l.b16 %v336
      %v369 = vunpack.c.l.b16 %v337
      %v370 = vunpack.c.l.b16 %v338
      %v371 = vunpack.c.l.b16 %v339
      %v372 = vunpack.c.l.b16 %v340
      %v373 = vunpack.c.l.b16 %v341
      %v374 = vpack.c.b16 %v359, %v358
      %v375 = vpack.c.b16 %v361, %v360
      %v376 = vpack.c.b16 %v363, %v362
      %v377 = vpack.c.b16 %v365, %v364
      %v378 = vpack.c.b16 %v367, %v366
      %v379 = vpack.c.b16 %v369, %v368
      %v380 = vpack.c.b16 %v371, %v370
      %v381 = vpack.c.b16 %v373, %v372
      %390 = vmatprep.subr.bf16.mxu0 0
      %391 = vmatpush1.bf16.msra.mxu0 %v381
      %392 = vmatprep.subr.bf16.mxu0 0
      %393 = vmatpush1.bf16.msra.mxu0 %v380
      %394 = vmatprep.subr.bf16.mxu0 0
      %395 = vmatpush1.bf16.msra.mxu0 %v379
      %396 = vmatprep.subr.bf16.mxu0 0
      %397 = vmatpush1.bf16.msra.mxu0 %v378
      %398 = vmatprep.subr.bf16.mxu0 0
      %399 = vmatpush1.bf16.msra.mxu0 %v377
      %400 = vmatprep.subr.bf16.mxu0 0
      %401 = vmatpush1.bf16.msra.mxu0 %v376
      %402 = vmatprep.subr.bf16.mxu0 0
      %403 = vmatpush1.bf16.msra.mxu0 %v375
      %404 = vmatprep.subr.bf16.mxu0 0
      %405 = vmatpush1.bf16.msra.mxu0 %v374
      %406 = vmatprep.subr.bf16.mxu0 0
      %407 = vmatpush2.bf16.msra.mxu0 0
      %408 = vmatprep.subr.bf16.mxu0 0
      %409 = vmatpush2.bf16.msra.mxu0 0
      %410 = vmatprep.subr.bf16.mxu0 0
      %411 = vmatpush2.bf16.msra.mxu0 0
      %412 = vmatprep.subr.bf16.mxu0 0
      %413 = vmatpush2.bf16.msra.mxu0 0
      %414 = vmatprep.subr.bf16.mxu0 0
      %415 = vmatpush2.bf16.msra.mxu0 0
      %416 = vmatprep.subr.bf16.mxu0 0
      %417 = vmatpush2.bf16.msra.mxu0 0
      %418 = vmatprep.subr.bf16.mxu0 0
      %419 = vmatpush2.bf16.msra.mxu0 0
      %420 = vmatprep.subr.bf16.mxu0 0
      %421 = vmatpush2.bf16.msra.mxu0 0
      %422 = vmatprep.mubr.bf16.mxu0 0
      %423 = vmatmul.mubr.bf16.gmra.mxu0 %v318
      %v424 = vpop.f32.mrf.mxu0
      %v425 = vadd.f32 0.0, %v424
      %v426 = vpop.f32.mrf.mxu0
      %v427 = vpop.f32.mrf.mxu0
      %v428 = vadd.f32 0.0, %v427
      %v429 = vpop.f32.mrf.mxu0
      %430 = vmatprep.mubr.bf16.mxu0 0
      %431 = vmatmul.mubr.bf16.gmra.mxu0 %v319
      %v432 = vpop.f32.mrf.mxu0
      %v433 = vadd.f32 0.0, %v432
      %v434 = vpop.f32.mrf.mxu0
      %v435 = vpop.f32.mrf.mxu0
      %v436 = vadd.f32 0.0, %v435
      %v437 = vpop.f32.mrf.mxu0
      %438 = vmatprep.mubr.bf16.mxu0 0
      %439 = vmatmul.mubr.bf16.gmra.mxu0 %v320
      %v440 = vpop.f32.mrf.mxu0
      %v441 = vadd.f32 0.0, %v440
      %v442 = vpop.f32.mrf.mxu0
      %v443 = vpop.f32.mrf.mxu0
      %v444 = vadd.f32 0.0, %v443
      %v445 = vpop.f32.mrf.mxu0
      %446 = vmatprep.mubr.bf16.mxu0 0
      %447 = vmatmul.mubr.bf16.gmra.mxu0 %v321
      %v448 = vpop.f32.mrf.mxu0
      %v449 = vadd.f32 0.0, %v448
      %v450 = vpop.f32.mrf.mxu0
      %v451 = vpop.f32.mrf.mxu0
      %v452 = vadd.f32 0.0, %v451
      %v453 = vpop.f32.mrf.mxu0
      %454 = vmatprep.mubr.bf16.mxu0 0
      %455 = vmatmul.mubr.bf16.gmra.mxu0 %v322
      %v456 = vpop.f32.mrf.mxu0
      %v457 = vadd.f32 0.0, %v456
      %v458 = vpop.f32.mrf.mxu0
      %v459 = vpop.f32.mrf.mxu0
      %v460 = vadd.f32 0.0, %v459
      %v461 = vpop.f32.mrf.mxu0
      %462 = vmatprep.mubr.bf16.mxu0 0
      %463 = vmatmul.mubr.bf16.gmra.mxu0 %v323
      %v464 = vpop.f32.mrf.mxu0
      %v465 = vadd.f32 0.0, %v464
      %v466 = vpop.f32.mrf.mxu0
      %v467 = vpop.f32.mrf.mxu0
      %v468 = vadd.f32 0.0, %v467
      %v469 = vpop.f32.mrf.mxu0
      %470 = vmatprep.mubr.bf16.mxu0 0
      %471 = vmatmul.mubr.bf16.gmra.mxu0 %v324
      %v472 = vpop.f32.mrf.mxu0
      %v473 = vadd.f32 0.0, %v472
      %v474 = vpop.f32.mrf.mxu0
      %v475 = vpop.f32.mrf.mxu0
      %v476 = vadd.f32 0.0, %v475
      %v477 = vpop.f32.mrf.mxu0
      %478 = vmatprep.mubr.bf16.mxu0 0
      %479 = vmatmul.mubr.bf16.gmra.mxu0 %v325
      %v480 = vpop.f32.mrf.mxu0
      %v481 = vadd.f32 0.0, %v480
      %v482 = vpop.f32.mrf.mxu0
      %v483 = vpop.f32.mrf.mxu0
      %v484 = vadd.f32 0.0, %v483
      %v485 = vpop.f32.mrf.mxu0
      %486 = vdwg.mxu0
      %v487 = vpack.c.bf16 %v428, %v425
      %v488 = vpack.c.bf16 %v436, %v433
      %v489 = vpack.c.bf16 %v444, %v441
      %v490 = vpack.c.bf16 %v452, %v449
      %v491 = vpack.c.bf16 %v460, %v457
      %v492 = vpack.c.bf16 %v468, %v465
      %v493 = vpack.c.bf16 %v476, %v473
      %v494 = vpack.c.bf16 %v484, %v481
      %v503 = vunpack.c.l.b16 %v487
      %v504 = vunpack.c.h.b16 %v487
      %v505 = vunpack.c.l.b16 %v488
      %v506 = vunpack.c.h.b16 %v488
      %v507 = vunpack.c.l.b16 %v489
      %v508 = vunpack.c.h.b16 %v489
      %v509 = vunpack.c.l.b16 %v490
      %v510 = vunpack.c.h.b16 %v490
      %v511 = vunpack.c.l.b16 %v491
      %v512 = vunpack.c.h.b16 %v491
      %v513 = vunpack.c.l.b16 %v492
      %v514 = vunpack.c.h.b16 %v492
      %v515 = vunpack.c.l.b16 %v493
      %v516 = vunpack.c.h.b16 %v493
      %v517 = vunpack.c.l.b16 %v494
      %v518 = vunpack.c.h.b16 %v494
      %v519 = vpack.c.b16 %v503, %v503
      %v520 = vpack.c.b16 %v504, %v504
      %v521 = vpack.c.b16 %v505, %v505
      %v522 = vpack.c.b16 %v506, %v506
      %v523 = vpack.c.b16 %v507, %v507
      %v524 = vpack.c.b16 %v508, %v508
      %v525 = vpack.c.b16 %v509, %v509
      %v526 = vpack.c.b16 %v510, %v510
      %v527 = vpack.c.b16 %v511, %v511
      %v528 = vpack.c.b16 %v512, %v512
      %v529 = vpack.c.b16 %v513, %v513
      %v530 = vpack.c.b16 %v514, %v514
      %v531 = vpack.c.b16 %v515, %v515
      %v532 = vpack.c.b16 %v516, %v516
      %v533 = vpack.c.b16 %v517, %v517
      %v534 = vpack.c.b16 %v518, %v518
      %551 = vst [vmem:[%s233] sm:$0xf] %v519
      %552 = vst [vmem:[%s233 + $0x4] sm:$0xf] %v520
      %553 = vst [vmem:[%s233 + $0x8] sm:$0xf] %v521
      %554 = vst [vmem:[%s233 + $0xc] sm:$0xf] %v522
      %555 = vst [vmem:[%s233 + $0x10] sm:$0xf] %v523
      %556 = vst [vmem:[%s233 + $0x14] sm:$0xf] %v524
      %557 = vst [vmem:[%s233 + $0x18] sm:$0xf] %v525
      %558 = vst [vmem:[%s233 + $0x1c] sm:$0xf] %v526
      %559 = vst [vmem:[%s233 + $0x20] sm:$0xf] %v527
      %560 = vst [vmem:[%s233 + $0x24] sm:$0xf] %v528
      %561 = vst [vmem:[%s233 + $0x28] sm:$0xf] %v529
      %562 = vst [vmem:[%s233 + $0x2c] sm:$0xf] %v530
      %563 = vst [vmem:[%s233 + $0x30] sm:$0xf] %v531
      %564 = vst [vmem:[%s233 + $0x34] sm:$0xf] %v532
      %565 = vst [vmem:[%s233 + $0x38] sm:$0xf] %v533
      %566 = vst [vmem:[%s233 + $0x3c] sm:$0xf] %v534
      %v567 = vadd.f32 %v425, %v428
      %v568 = vadd.f32 %v567, %v433
      %v569 = vadd.f32 %v568, %v436
      %v570 = vadd.f32 %v569, %v441
      %v571 = vadd.f32 %v570, %v444
      %v572 = vadd.f32 %v571, %v449
      %v573 = vadd.f32 %v572, %v452
      %v574 = vadd.f32 %v573, %v457
      %v575 = vadd.f32 %v574, %v460
      %v576 = vadd.f32 %v575, %v465
      %v577 = vadd.f32 %v576, %v468
      %v578 = vadd.f32 %v577, %v473
      %v579 = vadd.f32 %v578, %v476
      %v580 = vadd.f32 %v579, %v481
      %v581 = vadd.f32 %v580, %v484
      %v582 = vrot.slane %v581, 4
      %v583 = vadd.f32 %v581, %v582
      %v584 = vrot.slane %v583, 2
      %v585 = vadd.f32 %v583, %v584
      %v586 = vrot.slane %v585, 1
      %v587 = vadd.f32 %v585, %v586
      %588 = vst [vmem:[%s238] sm:$0x1] %v587
      %v589 = vmul.f32 %v425, %v425
      %v590 = vmul.f32 %v428, %v428
      %v591 = vmul.f32 %v433, %v433
      %v592 = vmul.f32 %v436, %v436
      %v593 = vmul.f32 %v441, %v441
      %v594 = vmul.f32 %v444, %v444
      %v595 = vmul.f32 %v449, %v449
      %v596 = vmul.f32 %v452, %v452
      %v597 = vmul.f32 %v457, %v457
      %v598 = vmul.f32 %v460, %v460
      %v599 = vmul.f32 %v465, %v465
      %v600 = vmul.f32 %v468, %v468
      %v601 = vmul.f32 %v473, %v473
      %v602 = vmul.f32 %v476, %v476
      %v603 = vmul.f32 %v481, %v481
      %v604 = vmul.f32 %v484, %v484
      %v605 = vadd.f32 %v589, %v590
      %v606 = vadd.f32 %v605, %v591
      %v607 = vadd.f32 %v606, %v592
      %v608 = vadd.f32 %v607, %v593
      %v609 = vadd.f32 %v608, %v594
      %v610 = vadd.f32 %v609, %v595
      %v611 = vadd.f32 %v610, %v596
      %v612 = vadd.f32 %v611, %v597
      %v613 = vadd.f32 %v612, %v598
      %v614 = vadd.f32 %v613, %v599
      %v615 = vadd.f32 %v614, %v600
      %v616 = vadd.f32 %v615, %v601
      %v617 = vadd.f32 %v616, %v602
      %v618 = vadd.f32 %v617, %v603
      %v619 = vadd.f32 %v618, %v604
      %v620 = vrot.slane %v619, 4
      %v621 = vadd.f32 %v619, %v620
      %v622 = vrot.slane %v621, 2
      %v623 = vadd.f32 %v621, %v622
      %v624 = vrot.slane %v623, 1
      %v625 = vadd.f32 %v623, %v624
      %626 = vst [vmem:[%s238 + $0x1] sm:$0x1] %v625
      %s627 = smul.u32 16, %s17
      %p628 = scmp.lt.s32.totalorder %s627, 63
      %s629 = scalar_select %p628, %s627, 63
      %s630 = smul.addr %s629, 4
      %s631 = scalar_lea.vmem %s4, %s630
      %p632 = scmp.lt.s32.totalorder %s17, 3
      %s633 = scalar_select %p632, %s17, 3
      %s634 = smul.addr %s633, 2
      %s635 = scalar_lea.vmem %s5, %s634
      // Predicated region
      $region37: #{bottleneck_forward.5} parent=35 // pred_check
        %p636 = pneg %p124
      $region38: #{bottleneck_forward.5} parent=35 // pred_check_branch
        %638 = sbr.rel (%p636) target = $region40
      $region39: #{bottleneck_forward.5} parent=35 // pred_region
        %s639 = smul.u32 16, %s17
      $region40: #{bottleneck_forward.5} parent=35 // pred_fallthru
        _
      // Predicated region
      $region41: #{bottleneck_forward.5} parent=35 // pred_check
        %p640 = pneg %p150
      $region42: #{bottleneck_forward.5} parent=35 // pred_check_branch
        %642 = sbr.rel (%p640) target = $region44
      $region43: #{bottleneck_forward.5} parent=35 // pred_region
        _
      $region44: #{bottleneck_forward.5} parent=35 // pred_fallthru
        _
    $region36: #{bottleneck_forward.5} parent=5 // pred_fallthru
      _
    %p643 = scmp.le.s32.totalorder 2, %s12
    // Predicated region
    $region45: #{bottleneck_forward.5} parent=5 // pred_check
      %p644 = pneg %p643
    $region46: #{bottleneck_forward.5} parent=5 // pred_check_branch
      %646 = sbr.rel (%p644) target = $region48
    $region47: #{bottleneck_forward.5} parent=5 // pred_region
      %s647 = ssub.s32 %s12, 2
      // Predicated region
      $region49: #{bottleneck_forward.5} parent=47 // pred_check
        %p648 = pneg %p130
      $region50: #{bottleneck_forward.5} parent=47 // pred_check_branch
        %650 = sbr.rel (%p648) target = $region52
      $region51: #{bottleneck_forward.5} parent=47 // pred_region
        %s651 = smul.u32 16, %s18
        %p652 = scmp.lt.s32.totalorder %s651, 63
        %s653 = scalar_select %p652, %s651, 63
        %s654 = smul.addr %s653, 4
        %s655 = scalar_lea.vmem %s4, %s654
      $region52: #{bottleneck_forward.5} parent=47 // pred_fallthru
        _
      // Predicated region
      $region53: #{bottleneck_forward.5} parent=47 // pred_check
        %p656 = pneg %p156
      $region54: #{bottleneck_forward.5} parent=47 // pred_check_branch
        %658 = sbr.rel (%p656) target = $region56
      $region55: #{bottleneck_forward.5} parent=47 // pred_region
        %p659 = scmp.lt.s32.totalorder %s18, 3
        %s660 = scalar_select %p659, %s18, 3
        %s661 = smul.addr %s660, 2
        %s662 = scalar_lea.vmem %s5, %s661
      $region56: #{bottleneck_forward.5} parent=47 // pred_fallthru
        _
    $region48: #{bottleneck_forward.5} parent=5 // pred_fallthru
      _
  $region6: #{bottleneck_forward.5} parent=0 // loop_footer
    %s16 = sadd.s32 1, %s12
  $region7: #{bottleneck_forward.5} parent=0 // loop_footer_branch
    %11 = sbr.rel target = $region3
  $region8: #{bottleneck_forward.5} parent=0 // loop_exit
    _

// kernel: bottleneck_forward.7
$region0: #{bottleneck_forward.7}
  #allocation0 [shape = 'u32[]', space=smem, size = 0x4, offset = 0x4, fixed_abs, tag = 'smem constant byte address 0x4 - core index']
  #allocation1 [shape = 'u32[144,128]{1,0:T(1,128)}', space=vmem, size = 0x12000, scoped, tag = 'internal scratch']
  %s0 = inlined_call_operand.vmem [shape: bf16[512,128], index: 0, kind: input, shape index: {}]
  %s1 = inlined_call_operand.vmem [shape: f32[512,32], index: 1, kind: input, shape index: {}]
  %s2 = inlined_call_operand.vmem [shape: f32[1,128], index: 2, kind: input, shape index: {}]
  %s3 = inlined_call_operand.vmem [shape: f32[1,128], index: 3, kind: input, shape index: {}]
  %s4 = inlined_call_operand.vmem [shape: bf16[128,32], index: 4, kind: input, shape index: {}]
  %s5 = inlined_call_operand.hbm [shape: f32[512,32], index: 5, kind: output, shape index: {}]
  %s6 = sld [smem:[#allocation0]]
  $region53: #{bottleneck_forward.7} parent=0
    _
  %s8 = ssub.s32 1, %s6
  %s9 = scalar_select 0, %s8, %s6
  $region1: #{bottleneck_forward.7} parent=0
    #allocation2 [shape = 'u8[131072]{0}', space=vmem, size = 0x20000, scoped, tag = 'output window, operand 0']
    #allocation3 [shape = 's32[2]{0}', space=sflag, size = 0x8, scoped, tag = 'scoped memory for bottleneck_forward.7']
    %10 = vsyncpa [#allocation3], 0
    %s11 = scalar_lea.sflag [#allocation3], 1
    %12 = vsyncpa %s11, 0
    loop: start=0, step=1, limit=6
    $region2: #{bottleneck_forward.7} parent=1 // loop_pre_header
      _
    $region3: #{bottleneck_forward.7} parent=1 // loop_header
      %s14 = sphi 0, %s18
      %p15 = scmp.ge.s32.totalorder %s14, 6
      %s24 = sphi 0, %s26
      %s27 = sphi 0, %s24
      %s28 = sphi 0, %s27
      %s44 = sphi 0, %s28
      %s50 = sphi 0, %s52
      %s53 = sphi 0, %s50
      %s54 = sphi 0, %s53
      %s70 = sphi 0, %s54
      %s74 = sphi 0, %s74
      %s76 = sphi 0, %s74
      %s77 = sphi 0, %s76
      %s91 = sphi 0, %s77
      %s95 = sphi 0, %s95
      %s97 = sphi 0, %s95
      %s98 = sphi 0, %s97
      %s112 = sphi 0, %s98
      %s116 = sphi 0, %s116
      %s118 = sphi 0, %s116
      %s119 = sphi 0, %s118
      %s133 = sphi 0, %s119
      %s139 = sphi 0, %s141
      %s142 = sphi 0, %s139
      %s143 = sphi 0, %s142
      %s159 = sphi 0, %s143
    $region4: #{bottleneck_forward.7} parent=1 // loop_header_branch
      %17 = sbr.rel (%p15) target = $region8
    $region5: #{bottleneck_forward.7} parent=1 // loop_body
      %s19 = ssub.s32 %s14, 1
      %s20 = ssub.s32 %s14, 2
      %s21 = sadd.s32 %s14, 1
      %s22 = ssub.s32 %s14, %s21
      %p23 = scmp.eq.s32.totalorder %s22, 0
      %s25 = sadd.s32 %s24, 1
      %s26 = scalar_select %p23, %s24, %s25
      %p29 = pneg %p23
      %p30 = scmp.eq.s32.totalorder %s14, 3
      %p31 = por %p29, %p30
      %p32 = scmp.ne.s32.totalorder %s24, %s27
      %p33 = scmp.eq.s32.totalorder %s14, 0
      %p34 = por %p32, %p33
      %p35 = scmp.ne.s32.totalorder %s24, %s27
      %p36 = scmp.eq.s32.totalorder %s19, 3
      %p37 = por %p35, %p36
      %p38 = scmp.ne.s32.totalorder %s27, %s28
      %p39 = scmp.eq.s32.totalorder %s19, 0
      %p40 = por %p38, %p39
      %p41 = scmp.ne.s32.totalorder %s27, %s28
      %p42 = scmp.eq.s32.totalorder %s20, 3
      %p43 = por %p41, %p42
      %p45 = scmp.ne.s32.totalorder %s28, %s44
      %p46 = scmp.eq.s32.totalorder %s20, 0
      %p47 = por %p45, %p46
      %s48 = ssub.s32 %s14, %s21
      %p49 = scmp.eq.s32.totalorder %s48, 0
      %s51 = sadd.s32 %s50, 1
      %s52 = scalar_select %p49, %s50, %s51
      %p55 = pneg %p49
      %p56 = scmp.eq.s32.totalorder %s14, 3
      %p57 = por %p55, %p56
      %p58 = scmp.ne.s32.totalorder %s50, %s53
      %p59 = scmp.eq.s32.totalorder %s14, 0
      %p60 = por %p58, %p59
      %p61 = scmp.ne.s32.totalorder %s50, %s53
      %p62 = scmp.eq.s32.totalorder %s19, 3
      %p63 = por %p61, %p62
      %p64 = scmp.ne.s32.totalorder %s53, %s54
      %p65 = scmp.eq.s32.totalorder %s19, 0
      %p66 = por %p64, %p65
      %p67 = scmp.ne.s32.totalorder %s53, %s54
      %p68 = scmp.eq.s32.totalorder %s20, 3
      %p69 = por %p67, %p68
      %p71 = scmp.ne.s32.totalorder %s54, %s70
      %p72 = scmp.eq.s32.totalorder %s20, 0
      %p73 = por %p71, %p72
      %s75 = sadd.s32 %s74, 1
      %p78 = scmp.eq.s32.totalorder %s14, 3
      %p79 = scmp.ne.s32.totalorder %s74, %s76
      %p80 = scmp.eq.s32.totalorder %s14, 0
      %p81 = por %p79, %p80
      %p82 = scmp.ne.s32.totalorder %s74, %s76
      %p83 = scmp.eq.s32.totalorder %s19, 3
      %p84 = por %p82, %p83
      %p85 = scmp.ne.s32.totalorder %s76, %s77
      %p86 = scmp.eq.s32.totalorder %s19, 0
      %p87 = por %p85, %p86
      %p88 = scmp.ne.s32.totalorder %s76, %s77
      %p89 = scmp.eq.s32.totalorder %s20, 3
      %p90 = por %p88, %p89
      %p92 = scmp.ne.s32.totalorder %s77, %s91
      %p93 = scmp.eq.s32.totalorder %s20, 0
      %p94 = por %p92, %p93
      %s96 = sadd.s32 %s95, 1
      %p99 = scmp.eq.s32.totalorder %s14, 3
      %p100 = scmp.ne.s32.totalorder %s95, %s97
      %p101 = scmp.eq.s32.totalorder %s14, 0
      %p102 = por %p100, %p101
      %p103 = scmp.ne.s32.totalorder %s95, %s97
      %p104 = scmp.eq.s32.totalorder %s19, 3
      %p105 = por %p103, %p104
      %p106 = scmp.ne.s32.totalorder %s97, %s98
      %p107 = scmp.eq.s32.totalorder %s19, 0
      %p108 = por %p106, %p107
      %p109 = scmp.ne.s32.totalorder %s97, %s98
      %p110 = scmp.eq.s32.totalorder %s20, 3
      %p111 = por %p109, %p110
      %p113 = scmp.ne.s32.totalorder %s98, %s112
      %p114 = scmp.eq.s32.totalorder %s20, 0
      %p115 = por %p113, %p114
      %s117 = sadd.s32 %s116, 1
      %p120 = scmp.eq.s32.totalorder %s14, 3
      %p121 = scmp.ne.s32.totalorder %s116, %s118
      %p122 = scmp.eq.s32.totalorder %s14, 0
      %p123 = por %p121, %p122
      %p124 = scmp.ne.s32.totalorder %s116, %s118
      %p125 = scmp.eq.s32.totalorder %s19, 3
      %p126 = por %p124, %p125
      %p127 = scmp.ne.s32.totalorder %s118, %s119
      %p128 = scmp.eq.s32.totalorder %s19, 0
      %p129 = por %p127, %p128
      %p130 = scmp.ne.s32.totalorder %s118, %s119
      %p131 = scmp.eq.s32.totalorder %s20, 3
      %p132 = por %p130, %p131
      %p134 = scmp.ne.s32.totalorder %s119, %s133
      %p135 = scmp.eq.s32.totalorder %s20, 0
      %p136 = por %p134, %p135
      %s137 = ssub.s32 %s14, %s21
      %p138 = scmp.eq.s32.totalorder %s137, 0
      %s140 = sadd.s32 %s139, 1
      %s141 = scalar_select %p138, %s139, %s140
      %p144 = pneg %p138
      %p145 = scmp.eq.s32.totalorder %s14, 3
      %p146 = por %p144, %p145
      %p147 = scmp.ne.s32.totalorder %s139, %s142
      %p148 = scmp.eq.s32.totalorder %s14, 0
      %p149 = por %p147, %p148
      %p150 = scmp.ne.s32.totalorder %s139, %s142
      %p151 = scmp.eq.s32.totalorder %s19, 3
      %p152 = por %p150, %p151
      %p153 = scmp.ne.s32.totalorder %s142, %s143
      %p154 = scmp.eq.s32.totalorder %s19, 0
      %p155 = por %p153, %p154
      %p156 = scmp.ne.s32.totalorder %s142, %s143
      %p157 = scmp.eq.s32.totalorder %s20, 3
      %p158 = por %p156, %p157
      %p160 = scmp.ne.s32.totalorder %s143, %s159
      %p161 = scmp.eq.s32.totalorder %s20, 0
      %p162 = por %p160, %p161
      %p163 = scmp.le.s32.totalorder 1, %s14
      %p164 = scmp.lt.s32.totalorder %s14, 5
      %p165 = pnand %p163, %p164
      %p166 = pneg %p165
      // Predicated region
      $region9: #{bottleneck_forward.7} parent=5 // pred_check
        _
      $region10: #{bottleneck_forward.7} parent=5 // pred_check_branch
        %168 = sbr.rel (%p165) target = $region12
      $region11: #{bottleneck_forward.7} parent=5 // pred_region
        %s169 = ssub.s32 %s14, 1
        // Predicated region
        $region13: #{bottleneck_forward.7} parent=11 // pred_check
          %p170 = pneg %p87
        $region14: #{bottleneck_forward.7} parent=11 // pred_check_branch
          %172 = sbr.rel (%p170) target = $region16
        $region15: #{bottleneck_forward.7} parent=11 // pred_region
          _
        $region16: #{bottleneck_forward.7} parent=11 // pred_fallthru
          _
        // Predicated region
        $region17: #{bottleneck_forward.7} parent=11 // pred_check
          %p173 = pneg %p108
        $region18: #{bottleneck_forward.7} parent=11 // pred_check_branch
          %175 = sbr.rel (%p173) target = $region20
        $region19: #{bottleneck_forward.7} parent=11 // pred_region
          _
        $region20: #{bottleneck_forward.7} parent=11 // pred_fallthru
          _
        // Predicated region
        $region21: #{bottleneck_forward.7} parent=11 // pred_check
          %p176 = pneg %p129
        $region22: #{bottleneck_forward.7} parent=11 // pred_check_branch
          %178 = sbr.rel (%p176) target = $region24
        $region23: #{bottleneck_forward.7} parent=11 // pred_region
          _
        $region24: #{bottleneck_forward.7} parent=11 // pred_fallthru
          _
      $region12: #{bottleneck_forward.7} parent=5 // pred_fallthru
        _
      %p179 = scmp.lt.s32.totalorder %s14, 4
      // Predicated region
      $region25: #{bottleneck_forward.7} parent=5 // pred_check
        %p180 = pneg %p179
      $region26: #{bottleneck_forward.7} parent=5 // pred_check_branch
        %182 = sbr.rel (%p180) target = $region28
      $region27: #{bottleneck_forward.7} parent=5 // pred_region
        // Predicated region
        $region29: #{bottleneck_forward.7} parent=27 // pred_check
          %p183 = pneg %p34
        $region30: #{bottleneck_forward.7} parent=27 // pred_check_branch
          %185 = sbr.rel (%p183) target = $region32
        $region31: #{bottleneck_forward.7} parent=27 // pred_region
          %s186 = smul.u32 16, %s14
          %p187 = scmp.lt.s32.totalorder %s186, 63
          %s188 = scalar_select %p187, %s186, 63
          %s189 = smul.addr %s188, 4
          %s190 = scalar_lea.vmem %s0, %s189
          %s191 = smul.u32 16, %s14
        $region32: #{bottleneck_forward.7} parent=27 // pred_fallthru
          _
        // Predicated region
        $region33: #{bottleneck_forward.7} parent=27 // pred_check
          %p192 = pneg %p60
        $region34: #{bottleneck_forward.7} parent=27 // pred_check_branch
          %194 = sbr.rel (%p192) target = $region36
        $region35: #{bottleneck_forward.7} parent=27 // pred_region
          %s195 = smul.u32 16, %s14
          %p196 = scmp.lt.s32.totalorder %s195, 63
          %s197 = scalar_select %p196, %s195, 63
          %s198 = smul.addr %s197, 8
          %s199 = scalar_lea.vmem %s1, %s198
          %s200 = smul.u32 16, %s14
        $region36: #{bottleneck_forward.7} parent=27 // pred_fallthru
          _
      $region28: #{bottleneck_forward.7} parent=5 // pred_fallthru
        _
      %p201 = scmp.le.s32.totalorder 1, %s14
      %p202 = scmp.lt.s32.totalorder %s14, 5
      %p203 = pnand %p201, %p202
      %p204 = pneg %p203
      // Predicated region
      $region37: #{bottleneck_forward.7} parent=5 // pred_check
        _
      $region38: #{bottleneck_forward.7} parent=5 // pred_check_branch
        %206 = sbr.rel (%p203) target = $region40
      $region39: #{bottleneck_forward.7} parent=5 // pred_region
        %s207 = ssub.s32 %s14, 1
        %s208 = smul.u32 16, %s19
        %p209 = scmp.lt.s32.totalorder %s208, 63
        %s210 = scalar_select %p209, %s208, 63
        %s211 = smul.addr %s210, 4
        %s212 = scalar_lea.vmem %s0, %s211
        %p213 = pneg %p40
        %p214 = pneg %p37
        %s215 = smul.u32 16, %s19
        %p216 = scmp.lt.s32.totalorder %s215, 63
        %s217 = scalar_select %p216, %s215, 63
        %s218 = smul.addr %s217, 8
        %s219 = scalar_lea.vmem %s1, %s218
        %p220 = pneg %p66
        %p221 = pneg %p63
        %p222 = pneg %p87
        %p223 = pneg %p84
        %p224 = pneg %p108
        %p225 = pneg %p105
        %p226 = pneg %p129
        %p227 = pneg %p126
        %p228 = pneg %p155
        %p229 = pneg %p152
        %s230 = sand.u32 %s142, 1
        %s231 = scalar_lea.sflag [#allocation3], %s230
        %s232 = sand.u32 %s142, 1
        %s233 = smul.addr %s232, 128
        %s234 = scalar_lea.vmem [#allocation2], %s233
        %s235 = smul.u32 16, %s19
        %p236 = scmp.lt.s32.totalorder %s235, 63
        %s237 = scalar_select %p236, %s235, 63
        %s238 = smul.addr %s237, 4
        %s239 = scalar_lea.vmem %s0, %s238
        %s240 = smul.u32 16, %s19
        %s241 = smul.u32 16, %s19
        %p242 = scmp.lt.s32.totalorder %s241, 63
        %s243 = scalar_select %p242, %s241, 63
        %s244 = smul.addr %s243, 8
        %s245 = scalar_lea.vmem %s1, %s244
        %s246 = smul.u32 16, %s19
        %s247 = smul.u32 16, %s19
        %v249 = vld [vmem:[%s239] sm:$0xf]
        %v250 = vld [vmem:[%s239 + $0x4] sm:$0xf]
        %v251 = vld [vmem:[%s239 + $0x8] sm:$0xf]
        %v252 = vld [vmem:[%s239 + $0xc] sm:$0xf]
        %v253 = vld [vmem:[%s239 + $0x10] sm:$0xf]
        %v254 = vld [vmem:[%s239 + $0x14] sm:$0xf]
        %v255 = vld [vmem:[%s239 + $0x18] sm:$0xf]
        %v256 = vld [vmem:[%s239 + $0x1c] sm:$0xf]
        %v257 = vld [vmem:[%s239 + $0x20] sm:$0xf]
        %v258 = vld [vmem:[%s239 + $0x24] sm:$0xf]
        %v259 = vld [vmem:[%s239 + $0x28] sm:$0xf]
        %v260 = vld [vmem:[%s239 + $0x2c] sm:$0xf]
        %v261 = vld [vmem:[%s239 + $0x30] sm:$0xf]
        %v262 = vld [vmem:[%s239 + $0x34] sm:$0xf]
        %v263 = vld [vmem:[%s239 + $0x38] sm:$0xf]
        %v264 = vld [vmem:[%s239 + $0x3c] sm:$0xf]
        %v265 = vld [vmem:[%s2] sm:$0x1]
        %v266 = vunpack.c.l.bf16 %v249
        %v267 = vunpack.c.l.bf16 %v250
        %v268 = vunpack.c.l.bf16 %v251
        %v269 = vunpack.c.l.bf16 %v252
        %v270 = vunpack.c.l.bf16 %v253
        %v271 = vunpack.c.l.bf16 %v254
        %v272 = vunpack.c.l.bf16 %v255
        %v273 = vunpack.c.l.bf16 %v256
        %v274 = vunpack.c.l.bf16 %v257
        %v275 = vunpack.c.l.bf16 %v258
        %v276 = vunpack.c.l.bf16 %v259
        %v277 = vunpack.c.l.bf16 %v260
        %v278 = vunpack.c.l.bf16 %v261
        %v279 = vunpack.c.l.bf16 %v262
        %v280 = vunpack.c.l.bf16 %v263
        %v281 = vunpack.c.l.bf16 %v264
        %v283 = vlaneseq
        %v284 = vshrl.u32 %v283, 7
        %v285 = vsub.s32 0, %v284
        %v286 = vrot.slane %v265, %v285
        %v288 = vmul.f32 %v266, %v286
        %v289 = vmul.f32 %v267, %v286
        %v290 = vmul.f32 %v268, %v286
        %v291 = vmul.f32 %v269, %v286
        %v292 = vmul.f32 %v270, %v286
        %v293 = vmul.f32 %v271, %v286
        %v294 = vmul.f32 %v272, %v286
        %v295 = vmul.f32 %v273, %v286
        %v296 = vmul.f32 %v274, %v286
        %v297 = vmul.f32 %v275, %v286
        %v298 = vmul.f32 %v276, %v286
        %v299 = vmul.f32 %v277, %v286
        %v300 = vmul.f32 %v278, %v286
        %v301 = vmul.f32 %v279, %v286
        %v302 = vmul.f32 %v280, %v286
        %v303 = vmul.f32 %v281, %v286
        %v304 = vld [vmem:[%s3] sm:$0x1]
        %v306 = vlaneseq
        %v307 = vshrl.u32 %v306, 7
        %v308 = vsub.s32 0, %v307
        %v309 = vrot.slane %v304, %v308
        %v311 = vadd.f32 %v288, %v309
        %v312 = vadd.f32 %v289, %v309
        %v313 = vadd.f32 %v290, %v309
        %v314 = vadd.f32 %v291, %v309
        %v315 = vadd.f32 %v292, %v309
        %v316 = vadd.f32 %v293, %v309
        %v317 = vadd.f32 %v294, %v309
        %v318 = vadd.f32 %v295, %v309
        %v319 = vadd.f32 %v296, %v309
        %v320 = vadd.f32 %v297, %v309
        %v321 = vadd.f32 %v298, %v309
        %v322 = vadd.f32 %v299, %v309
        %v323 = vadd.f32 %v300, %v309
        %v324 = vadd.f32 %v301, %v309
        %v325 = vadd.f32 %v302, %v309
        %v326 = vadd.f32 %v303, %v309
        %v327 = vmax.f32 %v311, 0.0
        %v328 = vmax.f32 %v312, 0.0
        %v329 = vmax.f32 %v313, 0.0
        %v330 = vmax.f32 %v314, 0.0
        %v331 = vmax.f32 %v315, 0.0
        %v332 = vmax.f32 %v316, 0.0
        %v333 = vmax.f32 %v317, 0.0
        %v334 = vmax.f32 %v318, 0.0
        %v335 = vmax.f32 %v319, 0.0
        %v336 = vmax.f32 %v320, 0.0
        %v337 = vmax.f32 %v321, 0.0
        %v338 = vmax.f32 %v322, 0.0
        %v339 = vmax.f32 %v323, 0.0
        %v340 = vmax.f32 %v324, 0.0
        %v341 = vmax.f32 %v325, 0.0
        %v342 = vmax.f32 %v326, 0.0
        %v343 = vpack.c.bf16 %v328, %v327
        %v344 = vpack.c.bf16 %v330, %v329
        %v345 = vpack.c.bf16 %v332, %v331
        %v346 = vpack.c.bf16 %v334, %v333
        %v347 = vpack.c.bf16 %v336, %v335
        %v348 = vpack.c.bf16 %v338, %v337
        %v349 = vpack.c.bf16 %v340, %v339
        %v350 = vpack.c.bf16 %v342, %v341
        %v351 = vld [vmem:[%s4] sm:$0xf]
        %v352 = vld [vmem:[%s4 + $0x4] sm:$0xf]
        %v353 = vld [vmem:[%s4 + $0x8] sm:$0xf]
        %v354 = vld [vmem:[%s4 + $0xc] sm:$0xf]
        %v355 = vld [vmem:[%s4 + $0x10] sm:$0xf]
        %v356 = vld [vmem:[%s4 + $0x14] sm:$0xf]
        %v357 = vld [vmem:[%s4 + $0x18] sm:$0xf]
        %v358 = vld [vmem:[%s4 + $0x1c] sm:$0xf]
        %v359 = vld [vmem:[%s4 + $0x20] sm:$0xf]
        %v360 = vld [vmem:[%s4 + $0x24] sm:$0xf]
        %v361 = vld [vmem:[%s4 + $0x28] sm:$0xf]
        %v362 = vld [vmem:[%s4 + $0x2c] sm:$0xf]
        %v363 = vld [vmem:[%s4 + $0x30] sm:$0xf]
        %v364 = vld [vmem:[%s4 + $0x34] sm:$0xf]
        %v365 = vld [vmem:[%s4 + $0x38] sm:$0xf]
        %v366 = vld [vmem:[%s4 + $0x3c] sm:$0xf]
        %v367 = vld [vmem:[%s245] sm:$0xff]
        %v368 = vld [vmem:[%s245 + $0x8] sm:$0xff]
        %v369 = vld [vmem:[%s245 + $0x10] sm:$0xff]
        %v370 = vld [vmem:[%s245 + $0x18] sm:$0xff]
        %v371 = vld [vmem:[%s245 + $0x20] sm:$0xff]
        %v372 = vld [vmem:[%s245 + $0x28] sm:$0xff]
        %v373 = vld [vmem:[%s245 + $0x30] sm:$0xff]
        %v374 = vld [vmem:[%s245 + $0x38] sm:$0xff]
        %v375 = vld [vmem:[%s245 + $0x40] sm:$0xff]
        %v376 = vld [vmem:[%s245 + $0x48] sm:$0xff]
        %v377 = vld [vmem:[%s245 + $0x50] sm:$0xff]
        %v378 = vld [vmem:[%s245 + $0x58] sm:$0xff]
        %v379 = vld [vmem:[%s245 + $0x60] sm:$0xff]
        %v380 = vld [vmem:[%s245 + $0x68] sm:$0xff]
        %v381 = vld [vmem:[%s245 + $0x70] sm:$0xff]
        %v382 = vld [vmem:[%s245 + $0x78] sm:$0xff]
        %v399 = vunpack.c.l.b16 %v351
        %v400 = vunpack.c.l.b16 %v352
        %v401 = vunpack.c.l.b16 %v353
        %v402 = vunpack.c.l.b16 %v354
        %v403 = vunpack.c.l.b16 %v355
        %v404 = vunpack.c.l.b16 %v356
        %v405 = vunpack.c.l.b16 %v357
        %v406 = vunpack.c.l.b16 %v358
        %v407 = vunpack.c.l.b16 %v359
        %v408 = vunpack.c.l.b16 %v360
        %v409 = vunpack.c.l.b16 %v361
        %v410 = vunpack.c.l.b16 %v362
        %v411 = vunpack.c.l.b16 %v363
        %v412 = vunpack.c.l.b16 %v364
        %v413 = vunpack.c.l.b16 %v365
        %v414 = vunpack.c.l.b16 %v366
        %v415 = vpack.c.b16 %v400, %v399
        %v416 = vpack.c.b16 %v402, %v401
        %v417 = vpack.c.b16 %v404, %v403
        %v418 = vpack.c.b16 %v406, %v405
        %v419 = vpack.c.b16 %v408, %v407
        %v420 = vpack.c.b16 %v410, %v409
        %v421 = vpack.c.b16 %v412, %v411
        %v422 = vpack.c.b16 %v414, %v413
        %431 = vmatprep.subr.bf16.mxu0 0
        %432 = vmatpush1.bf16.msra.mxu0 %v422
        %433 = vmatprep.subr.bf16.mxu0 0
        %434 = vmatpush1.bf16.msra.mxu0 %v421
        %435 = vmatprep.subr.bf16.mxu0 0
        %436 = vmatpush1.bf16.msra.mxu0 %v420
        %437 = vmatprep.subr.bf16.mxu0 0
        %438 = vmatpush1.bf16.msra.mxu0 %v419
        %439 = vmatprep.subr.bf16.mxu0 0
        %440 = vmatpush1.bf16.msra.mxu0 %v418
        %441 = vmatprep.subr.bf16.mxu0 0
        %442 = vmatpush1.bf16.msra.mxu0 %v417
        %443 = vmatprep.subr.bf16.mxu0 0
        %444 = vmatpush1.bf16.msra.mxu0 %v416
        %445 = vmatprep.subr.bf16.mxu0 0
        %446 = vmatpush1.bf16.msra.mxu0 %v415
        %447 = vmatprep.subr.bf16.mxu0 0
        %448 = vmatpush2.bf16.msra.mxu0 0
        %449 = vmatprep.subr.bf16.mxu0 0
        %450 = vmatpush2.bf16.msra.mxu0 0
        %451 = vmatprep.subr.bf16.mxu0 0
        %452 = vmatpush2.bf16.msra.mxu0 0
        %453 = vmatprep.subr.bf16.mxu0 0
        %454 = vmatpush2.bf16.msra.mxu0 0
        %455 = vmatprep.subr.bf16.mxu0 0
        %456 = vmatpush2.bf16.msra.mxu0 0
        %457 = vmatprep.subr.bf16.mxu0 0
        %458 = vmatpush2.bf16.msra.mxu0 0
        %459 = vmatprep.subr.bf16.mxu0 0
        %460 = vmatpush2.bf16.msra.mxu0 0
        %461 = vmatprep.subr.bf16.mxu0 0
        %462 = vmatpush2.bf16.msra.mxu0 0
        %463 = vmatprep.mubr.bf16.mxu0 0
        %464 = vmatmul.mubr.bf16.gmra.mxu0 %v343
        %v465 = vpop.f32.mrf.mxu0
        %v466 = vadd.f32 %v367, %v465
        %v467 = vpop.f32.mrf.mxu0
        %v468 = vpop.f32.mrf.mxu0
        %v469 = vadd.f32 %v368, %v468
        %v470 = vpop.f32.mrf.mxu0
        %471 = vmatprep.mubr.bf16.mxu0 0
        %472 = vmatmul.mubr.bf16.gmra.mxu0 %v344
        %v473 = vpop.f32.mrf.mxu0
        %v474 = vadd.f32 %v369, %v473
        %v475 = vpop.f32.mrf.mxu0
        %v476 = vpop.f32.mrf.mxu0
        %v477 = vadd.f32 %v370, %v476
        %v478 = vpop.f32.mrf.mxu0
        %479 = vmatprep.mubr.bf16.mxu0 0
        %480 = vmatmul.mubr.bf16.gmra.mxu0 %v345
        %v481 = vpop.f32.mrf.mxu0
        %v482 = vadd.f32 %v371, %v481
        %v483 = vpop.f32.mrf.mxu0
        %v484 = vpop.f32.mrf.mxu0
        %v485 = vadd.f32 %v372, %v484
        %v486 = vpop.f32.mrf.mxu0
        %487 = vmatprep.mubr.bf16.mxu0 0
        %488 = vmatmul.mubr.bf16.gmra.mxu0 %v346
        %v489 = vpop.f32.mrf.mxu0
        %v490 = vadd.f32 %v373, %v489
        %v491 = vpop.f32.mrf.mxu0
        %v492 = vpop.f32.mrf.mxu0
        %v493 = vadd.f32 %v374, %v492
        %v494 = vpop.f32.mrf.mxu0
        %495 = vmatprep.mubr.bf16.mxu0 0
        %496 = vmatmul.mubr.bf16.gmra.mxu0 %v347
        %v497 = vpop.f32.mrf.mxu0
        %v498 = vadd.f32 %v375, %v497
        %v499 = vpop.f32.mrf.mxu0
        %v500 = vpop.f32.mrf.mxu0
        %v501 = vadd.f32 %v376, %v500
        %v502 = vpop.f32.mrf.mxu0
        %503 = vmatprep.mubr.bf16.mxu0 0
        %504 = vmatmul.mubr.bf16.gmra.mxu0 %v348
        %v505 = vpop.f32.mrf.mxu0
        %v506 = vadd.f32 %v377, %v505
        %v507 = vpop.f32.mrf.mxu0
        %v508 = vpop.f32.mrf.mxu0
        %v509 = vadd.f32 %v378, %v508
        %v510 = vpop.f32.mrf.mxu0
        %511 = vmatprep.mubr.bf16.mxu0 0
        %512 = vmatmul.mubr.bf16.gmra.mxu0 %v349
        %v513 = vpop.f32.mrf.mxu0
        %v514 = vadd.f32 %v379, %v513
        %v515 = vpop.f32.mrf.mxu0
        %v516 = vpop.f32.mrf.mxu0
        %v517 = vadd.f32 %v380, %v516
        %v518 = vpop.f32.mrf.mxu0
        %519 = vmatprep.mubr.bf16.mxu0 0
        %520 = vmatmul.mubr.bf16.gmra.mxu0 %v350
        %v521 = vpop.f32.mrf.mxu0
        %v522 = vadd.f32 %v381, %v521
        %v523 = vpop.f32.mrf.mxu0
        %v524 = vpop.f32.mrf.mxu0
        %v525 = vadd.f32 %v382, %v524
        %v526 = vpop.f32.mrf.mxu0
        %527 = vdwg.mxu0
        %vm528 = vcmask 261120
        %529 = vst.msk [vmem:[%s234] sm:$0xff] %vm528, %v466
        %530 = vst.msk [vmem:[%s234 + $0x8] sm:$0xff] %vm528, %v469
        %531 = vst.msk [vmem:[%s234 + $0x10] sm:$0xff] %vm528, %v474
        %532 = vst.msk [vmem:[%s234 + $0x18] sm:$0xff] %vm528, %v477
        %533 = vst.msk [vmem:[%s234 + $0x20] sm:$0xff] %vm528, %v482
        %534 = vst.msk [vmem:[%s234 + $0x28] sm:$0xff] %vm528, %v485
        %535 = vst.msk [vmem:[%s234 + $0x30] sm:$0xff] %vm528, %v490
        %536 = vst.msk [vmem:[%s234 + $0x38] sm:$0xff] %vm528, %v493
        %537 = vst.msk [vmem:[%s234 + $0x40] sm:$0xff] %vm528, %v498
        %538 = vst.msk [vmem:[%s234 + $0x48] sm:$0xff] %vm528, %v501
        %539 = vst.msk [vmem:[%s234 + $0x50] sm:$0xff] %vm528, %v506
        %540 = vst.msk [vmem:[%s234 + $0x58] sm:$0xff] %vm528, %v509
        %541 = vst.msk [vmem:[%s234 + $0x60] sm:$0xff] %vm528, %v514
        %542 = vst.msk [vmem:[%s234 + $0x68] sm:$0xff] %vm528, %v517
        %543 = vst.msk [vmem:[%s234 + $0x70] sm:$0xff] %vm528, %v522
        %544 = vst.msk [vmem:[%s234 + $0x78] sm:$0xff] %vm528, %v525
        %s545 = sand.u32 %s142, 1
        %s546 = scalar_lea.sflag [#allocation3], %s545
        %s547 = sand.u32 %s142, 1
        %s548 = smul.addr %s547, 128
        %s549 = scalar_lea.vmem [#allocation2], %s548
        // Predicated region
        $region41: #{bottleneck_forward.7} parent=39 // pred_check
          %p550 = pneg %p152
        $region42: #{bottleneck_forward.7} parent=39 // pred_check_branch
          %552 = sbr.rel (%p550) target = $region44
        $region43: #{bottleneck_forward.7} parent=39 // pred_region
          %s553 = smul.u32 16, %s19
          %s555 = ssub.s32 2048, 2048
          %556 = vsyncadd %s546, %s555
          %s557 = smul.addr %s553, 128
          %s558 = scalar_lea.hbm %s5, %s557
          %s559 = sshll.u32 %s549, 4
          %s560 = int_to_ptr.vmem [resolvable:$true] %s559
          %565 = dma.vmem_to_hbm [thread:$0]  %s560, 2048, %s558, %s546, 128, 128, 8
        $region44: #{bottleneck_forward.7} parent=39 // pred_fallthru
          _
      $region40: #{bottleneck_forward.7} parent=5 // pred_fallthru
        _
      %p566 = scmp.le.s32.totalorder 2, %s14
      // Predicated region
      $region45: #{bottleneck_forward.7} parent=5 // pred_check
        %p567 = pneg %p566
      $region46: #{bottleneck_forward.7} parent=5 // pred_check_branch
        %569 = sbr.rel (%p567) target = $region48
      $region47: #{bottleneck_forward.7} parent=5 // pred_region
        %s570 = ssub.s32 %s14, 2
        // Predicated region
        $region49: #{bottleneck_forward.7} parent=47 // pred_check
          %p571 = pneg %p158
        $region50: #{bottleneck_forward.7} parent=47 // pred_check_branch
          %573 = sbr.rel (%p571) target = $region52
        $region51: #{bottleneck_forward.7} parent=47 // pred_region
          %s574 = sand.u32 %s143, 1
          %s575 = scalar_lea.sflag [#allocation3], %s574
          %s576 = sand.u32 %s143, 1
          %s577 = smul.addr %s576, 128
          %s578 = scalar_lea.vmem [#allocation2], %s577
          %579 = dma.done %s575, 2048
        $region52: #{bottleneck_forward.7} parent=47 // pred_fallthru
          _
      $region48: #{bottleneck_forward.7} parent=5 // pred_fallthru
        _
    $region6: #{bottleneck_forward.7} parent=1 // loop_footer
      %s18 = sadd.s32 1, %s14
    $region7: #{bottleneck_forward.7} parent=1 // loop_footer_branch
      %13 = sbr.rel target = $region3
    $region8: #{bottleneck_forward.7} parent=1 // loop_exit
      _
    %580 = vsyncpa [#allocation3], 1
    %s581 = scalar_lea.sflag [#allocation3], 1
    %582 = vsyncpa %s581, 1

// kernel: bottleneck_forward.6
$region0: #{bottleneck_forward.6}
  #allocation0 [shape = 'u32[]', space=smem, size = 0x4, offset = 0x4, fixed_abs, tag = 'smem constant byte address 0x4 - core index']
  #allocation1 [shape = 'u32[144,128]{1,0:T(1,128)}', space=vmem, size = 0x12000, scoped, tag = 'internal scratch']
  #allocation2 [shape = 'f32[288,384]{1,0:T(8,128)}', space=vmem, size = 0x6c000, scoped, tag = 'scratch operand']
  %s0 = inlined_call_operand.vmem [shape: bf16[512,128], index: 0, kind: input, shape index: {}]
  %s1 = inlined_call_operand.vmem [shape: f32[1,128], index: 1, kind: input, shape index: {}]
  %s2 = inlined_call_operand.vmem [shape: f32[1,128], index: 2, kind: input, shape index: {}]
  %s3 = inlined_call_operand.vmem [shape: bf16[3,384,128], index: 3, kind: input, shape index: {}]
  %s4 = inlined_call_operand.vmem [shape: bf16[512,128], index: 4, kind: output, shape index: {0}]
  %s5 = inlined_call_operand.vmem [shape: f32[2,2,128], index: 5, kind: output, shape index: {1}]
  %6 = xla_tuple %s4, %s5
  %s7 = sld [smem:[#allocation0]]
  $region57: #{bottleneck_forward.6} parent=0
    _
  %s9 = ssub.s32 1, %s7
  %s10 = scalar_select 0, %s9, %s7
  loop: start=0, step=1, limit=4
  $region2: #{bottleneck_forward.6} parent=0 // loop_pre_header
    _
  $region3: #{bottleneck_forward.6} parent=0 // loop_header
    %s12 = sphi 0, %s16
    %p13 = scmp.ge.s32.totalorder %s12, 4
    %s22 = sphi 0, %s24
    %s25 = sphi 0, %s22
    %s26 = sphi 0, %s25
    %s42 = sphi 0, %s26
    %s46 = sphi 0, %s46
    %s48 = sphi 0, %s46
    %s49 = sphi 0, %s48
    %s63 = sphi 0, %s49
    %s67 = sphi 0, %s67
    %s69 = sphi 0, %s67
    %s70 = sphi 0, %s69
    %s84 = sphi 0, %s70
    %s88 = sphi 0, %s88
    %s90 = sphi 0, %s88
    %s91 = sphi 0, %s90
    %s105 = sphi 0, %s91
    %s111 = sphi 0, %s113
    %s114 = sphi 0, %s111
    %s115 = sphi 0, %s114
    %s131 = sphi 0, %s115
    %s137 = sphi 0, %s139
    %s140 = sphi 0, %s137
    %s141 = sphi 0, %s140
    %s157 = sphi 0, %s141
  $region4: #{bottleneck_forward.6} parent=0 // loop_header_branch
    %15 = sbr.rel (%p13) target = $region8
  $region5: #{bottleneck_forward.6} parent=0 // loop_body
    %s17 = ssub.s32 %s12, 1
    %s18 = ssub.s32 %s12, 2
    %s19 = sadd.s32 %s12, 1
    %s20 = ssub.s32 %s12, %s19
    %p21 = scmp.eq.s32.totalorder %s20, 0
    %s23 = sadd.s32 %s22, 1
    %s24 = scalar_select %p21, %s22, %s23
    %p27 = pneg %p21
    %p28 = scmp.eq.s32.totalorder %s12, 1
    %p29 = por %p27, %p28
    %p30 = scmp.ne.s32.totalorder %s22, %s25
    %p31 = scmp.eq.s32.totalorder %s12, 0
    %p32 = por %p30, %p31
    %p33 = scmp.ne.s32.totalorder %s22, %s25
    %p34 = scmp.eq.s32.totalorder %s17, 1
    %p35 = por %p33, %p34
    %p36 = scmp.ne.s32.totalorder %s25, %s26
    %p37 = scmp.eq.s32.totalorder %s17, 0
    %p38 = por %p36, %p37
    %p39 = scmp.ne.s32.totalorder %s25, %s26
    %p40 = scmp.eq.s32.totalorder %s18, 1
    %p41 = por %p39, %p40
    %p43 = scmp.ne.s32.totalorder %s26, %s42
    %p44 = scmp.eq.s32.totalorder %s18, 0
    %p45 = por %p43, %p44
    %s47 = sadd.s32 %s46, 1
    %p50 = scmp.eq.s32.totalorder %s12, 1
    %p51 = scmp.ne.s32.totalorder %s46, %s48
    %p52 = scmp.eq.s32.totalorder %s12, 0
    %p53 = por %p51, %p52
    %p54 = scmp.ne.s32.totalorder %s46, %s48
    %p55 = scmp.eq.s32.totalorder %s17, 1
    %p56 = por %p54, %p55
    %p57 = scmp.ne.s32.totalorder %s48, %s49
    %p58 = scmp.eq.s32.totalorder %s17, 0
    %p59 = por %p57, %p58
    %p60 = scmp.ne.s32.totalorder %s48, %s49
    %p61 = scmp.eq.s32.totalorder %s18, 1
    %p62 = por %p60, %p61
    %p64 = scmp.ne.s32.totalorder %s49, %s63
    %p65 = scmp.eq.s32.totalorder %s18, 0
    %p66 = por %p64, %p65
    %s68 = sadd.s32 %s67, 1
    %p71 = scmp.eq.s32.totalorder %s12, 1
    %p72 = scmp.ne.s32.totalorder %s67, %s69
    %p73 = scmp.eq.s32.totalorder %s12, 0
    %p74 = por %p72, %p73
    %p75 = scmp.ne.s32.totalorder %s67, %s69
    %p76 = scmp.eq.s32.totalorder %s17, 1
    %p77 = por %p75, %p76
    %p78 = scmp.ne.s32.totalorder %s69, %s70
    %p79 = scmp.eq.s32.totalorder %s17, 0
    %p80 = por %p78, %p79
    %p81 = scmp.ne.s32.totalorder %s69, %s70
    %p82 = scmp.eq.s32.totalorder %s18, 1
    %p83 = por %p81, %p82
    %p85 = scmp.ne.s32.totalorder %s70, %s84
    %p86 = scmp.eq.s32.totalorder %s18, 0
    %p87 = por %p85, %p86
    %s89 = sadd.s32 %s88, 1
    %p92 = scmp.eq.s32.totalorder %s12, 1
    %p93 = scmp.ne.s32.totalorder %s88, %s90
    %p94 = scmp.eq.s32.totalorder %s12, 0
    %p95 = por %p93, %p94
    %p96 = scmp.ne.s32.totalorder %s88, %s90
    %p97 = scmp.eq.s32.totalorder %s17, 1
    %p98 = por %p96, %p97
    %p99 = scmp.ne.s32.totalorder %s90, %s91
    %p100 = scmp.eq.s32.totalorder %s17, 0
    %p101 = por %p99, %p100
    %p102 = scmp.ne.s32.totalorder %s90, %s91
    %p103 = scmp.eq.s32.totalorder %s18, 1
    %p104 = por %p102, %p103
    %p106 = scmp.ne.s32.totalorder %s91, %s105
    %p107 = scmp.eq.s32.totalorder %s18, 0
    %p108 = por %p106, %p107
    %s109 = ssub.s32 %s12, %s19
    %p110 = scmp.eq.s32.totalorder %s109, 0
    %s112 = sadd.s32 %s111, 1
    %s113 = scalar_select %p110, %s111, %s112
    %p116 = pneg %p110
    %p117 = scmp.eq.s32.totalorder %s12, 1
    %p118 = por %p116, %p117
    %p119 = scmp.ne.s32.totalorder %s111, %s114
    %p120 = scmp.eq.s32.totalorder %s12, 0
    %p121 = por %p119, %p120
    %p122 = scmp.ne.s32.totalorder %s111, %s114
    %p123 = scmp.eq.s32.totalorder %s17, 1
    %p124 = por %p122, %p123
    %p125 = scmp.ne.s32.totalorder %s114, %s115
    %p126 = scmp.eq.s32.totalorder %s17, 0
    %p127 = por %p125, %p126
    %p128 = scmp.ne.s32.totalorder %s114, %s115
    %p129 = scmp.eq.s32.totalorder %s18, 1
    %p130 = por %p128, %p129
    %p132 = scmp.ne.s32.totalorder %s115, %s131
    %p133 = scmp.eq.s32.totalorder %s18, 0
    %p134 = por %p132, %p133
    %s135 = ssub.s32 %s12, %s19
    %p136 = scmp.eq.s32.totalorder %s135, 0
    %s138 = sadd.s32 %s137, 1
    %s139 = scalar_select %p136, %s137, %s138
    %p142 = pneg %p136
    %p143 = scmp.eq.s32.totalorder %s12, 1
    %p144 = por %p142, %p143
    %p145 = scmp.ne.s32.totalorder %s137, %s140
    %p146 = scmp.eq.s32.totalorder %s12, 0
    %p147 = por %p145, %p146
    %p148 = scmp.ne.s32.totalorder %s137, %s140
    %p149 = scmp.eq.s32.totalorder %s17, 1
    %p150 = por %p148, %p149
    %p151 = scmp.ne.s32.totalorder %s140, %s141
    %p152 = scmp.eq.s32.totalorder %s17, 0
    %p153 = por %p151, %p152
    %p154 = scmp.ne.s32.totalorder %s140, %s141
    %p155 = scmp.eq.s32.totalorder %s18, 1
    %p156 = por %p154, %p155
    %p158 = scmp.ne.s32.totalorder %s141, %s157
    %p159 = scmp.eq.s32.totalorder %s18, 0
    %p160 = por %p158, %p159
    %p161 = scmp.le.s32.totalorder 1, %s12
    %p162 = scmp.lt.s32.totalorder %s12, 3
    %p163 = pnand %p161, %p162
    %p164 = pneg %p163
    // Predicated region
    $region9: #{bottleneck_forward.6} parent=5 // pred_check
      _
    $region10: #{bottleneck_forward.6} parent=5 // pred_check_branch
      %166 = sbr.rel (%p163) target = $region12
    $region11: #{bottleneck_forward.6} parent=5 // pred_region
      %s167 = ssub.s32 %s12, 1
      // Predicated region
      $region13: #{bottleneck_forward.6} parent=11 // pred_check
        %p168 = pneg %p59
      $region14: #{bottleneck_forward.6} parent=11 // pred_check_branch
        %170 = sbr.rel (%p168) target = $region16
      $region15: #{bottleneck_forward.6} parent=11 // pred_region
        _
      $region16: #{bottleneck_forward.6} parent=11 // pred_fallthru
        _
      // Predicated region
      $region17: #{bottleneck_forward.6} parent=11 // pred_check
        %p171 = pneg %p80
      $region18: #{bottleneck_forward.6} parent=11 // pred_check_branch
        %173 = sbr.rel (%p171) target = $region20
      $region19: #{bottleneck_forward.6} parent=11 // pred_region
        _
      $region20: #{bottleneck_forward.6} parent=11 // pred_fallthru
        _
      // Predicated region
      $region21: #{bottleneck_forward.6} parent=11 // pred_check
        %p174 = pneg %p101
      $region22: #{bottleneck_forward.6} parent=11 // pred_check_branch
        %176 = sbr.rel (%p174) target = $region24
      $region23: #{bottleneck_forward.6} parent=11 // pred_region
        _
      $region24: #{bottleneck_forward.6} parent=11 // pred_fallthru
        _
    $region12: #{bottleneck_forward.6} parent=5 // pred_fallthru
      _
    %p177 = scmp.lt.s32.totalorder %s12, 2
    // Predicated region
    $region25: #{bottleneck_forward.6} parent=5 // pred_check
      %p178 = pneg %p177
    $region26: #{bottleneck_forward.6} parent=5 // pred_check_branch
      %180 = sbr.rel (%p178) target = $region28
    $region27: #{bottleneck_forward.6} parent=5 // pred_region
      // Predicated region
      $region29: #{bottleneck_forward.6} parent=27 // pred_check
        %p181 = pneg %p32
      $region30: #{bottleneck_forward.6} parent=27 // pred_check_branch
        %183 = sbr.rel (%p181) target = $region32
      $region31: #{bottleneck_forward.6} parent=27 // pred_region
        %s184 = smul.u32 32, %s12
        %p185 = scmp.lt.s32.totalorder %s184, 63
        %s186 = scalar_select %p185, %s184, 63
        %s187 = smul.addr %s186, 4
        %s188 = scalar_lea.vmem %s0, %s187
        %s189 = smul.u32 32, %s12
      $region32: #{bottleneck_forward.6} parent=27 // pred_fallthru
        _
    $region28: #{bottleneck_forward.6} parent=5 // pred_fallthru
      _
    %p190 = scmp.le.s32.totalorder 1, %s12
    %p191 = scmp.lt.s32.totalorder %s12, 3
    %p192 = pnand %p190, %p191
    %p193 = pneg %p192
    // Predicated region
    $region33: #{bottleneck_forward.6} parent=5 // pred_check
      _
    $region34: #{bottleneck_forward.6} parent=5 // pred_check_branch
      %195 = sbr.rel (%p192) target = $region36
    $region35: #{bottleneck_forward.6} parent=5 // pred_region
      %s196 = ssub.s32 %s12, 1
      %s197 = smul.u32 32, %s17
      %p198 = scmp.lt.s32.totalorder %s197, 63
      %s199 = scalar_select %p198, %s197, 63
      %s200 = smul.addr %s199, 4
      %s201 = scalar_lea.vmem %s0, %s200
      %p202 = pneg %p38
      %p203 = pneg %p35
      %p204 = pneg %p59
      %p205 = pneg %p56
      %p206 = pneg %p80
      %p207 = pneg %p77
      %p208 = pneg %p101
      %p209 = pneg %p98
      %p210 = pneg %p127
      %p211 = pneg %p124
      %s212 = smul.u32 32, %s17
      %p213 = scmp.lt.s32.totalorder %s212, 63
      %s214 = scalar_select %p213, %s212, 63
      %s215 = smul.addr %s214, 4
      %s216 = scalar_lea.vmem %s4, %s215
      %p217 = pneg %p153
      %p218 = pneg %p150
      %p219 = scmp.lt.s32.totalorder %s17, 1
      %s220 = scalar_select %p219, %s17, 1
      %s221 = smul.addr %s220, 2
      %s222 = scalar_lea.vmem %s5, %s221
      %s223 = smul.u32 32, %s17
      %p224 = scmp.lt.s32.totalorder %s223, 63
      %s225 = scalar_select %p224, %s223, 63
      %s226 = smul.addr %s225, 4
      %s227 = scalar_lea.vmem %s0, %s226
      %s228 = smul.u32 32, %s17
      %s229 = smul.u32 32, %s17
      %p230 = scmp.lt.s32.totalorder %s229, 63
      %s231 = scalar_select %p230, %s229, 63
      %s232 = smul.addr %s231, 4
      %s233 = scalar_lea.vmem %s4, %s232
      %s234 = smul.u32 32, %s17
      %p235 = scmp.lt.s32.totalorder %s17, 1
      %s236 = scalar_select %p235, %s17, 1
      %s237 = smul.addr %s236, 2
      %s238 = scalar_lea.vmem %s5, %s237
      %240 = vst [vmem:[#allocation2] sm:$0xff] 0.0
      %241 = vst [vmem:[#allocation2 + $0x8] sm:$0xff] 0.0
      %242 = vst [vmem:[#allocation2 + $0x10] sm:$0xff] 0.0
      %243 = vst [vmem:[#allocation2 + $0x18] sm:$0xff] 0.0
      %244 = vst [vmem:[#allocation2 + $0x20] sm:$0xff] 0.0
      %245 = vst [vmem:[#allocation2 + $0x28] sm:$0xff] 0.0
      %246 = vst [vmem:[#allocation2 + $0x30] sm:$0xff] 0.0
      %247 = vst [vmem:[#allocation2 + $0x38] sm:$0xff] 0.0
      %248 = vst [vmem:[#allocation2 + $0x40] sm:$0xff] 0.0
      %249 = vst [vmem:[#allocation2 + $0x48] sm:$0xff] 0.0
      %250 = vst [vmem:[#allocation2 + $0x50] sm:$0xff] 0.0
      %251 = vst [vmem:[#allocation2 + $0x58] sm:$0xff] 0.0
      %252 = vst [vmem:[#allocation2 + $0x300] sm:$0xff] 0.0
      %253 = vst [vmem:[#allocation2 + $0x308] sm:$0xff] 0.0
      %254 = vst [vmem:[#allocation2 + $0x310] sm:$0xff] 0.0
      %255 = vst [vmem:[#allocation2 + $0x318] sm:$0xff] 0.0
      %256 = vst [vmem:[#allocation2 + $0x320] sm:$0xff] 0.0
      %257 = vst [vmem:[#allocation2 + $0x328] sm:$0xff] 0.0
      %258 = vst [vmem:[#allocation2 + $0x330] sm:$0xff] 0.0
      %259 = vst [vmem:[#allocation2 + $0x338] sm:$0xff] 0.0
      %260 = vst [vmem:[#allocation2 + $0x340] sm:$0xff] 0.0
      %261 = vst [vmem:[#allocation2 + $0x348] sm:$0xff] 0.0
      %262 = vst [vmem:[#allocation2 + $0x350] sm:$0xff] 0.0
      %263 = vst [vmem:[#allocation2 + $0x358] sm:$0xff] 0.0
      %v264 = vld [vmem:[%s227] sm:$0xf]
      %v265 = vld [vmem:[%s227 + $0x4] sm:$0xf]
      %v266 = vld [vmem:[%s227 + $0x8] sm:$0xf]
      %v267 = vld [vmem:[%s227 + $0xc] sm:$0xf]
      %v268 = vld [vmem:[%s227 + $0x10] sm:$0xf]
      %v269 = vld [vmem:[%s227 + $0x14] sm:$0xf]
      %v270 = vld [vmem:[%s227 + $0x18] sm:$0xf]
      %v271 = vld [vmem:[%s227 + $0x1c] sm:$0xf]
      %v272 = vld [vmem:[%s227 + $0x20] sm:$0xf]
      %v273 = vld [vmem:[%s227 + $0x24] sm:$0xf]
      %v274 = vld [vmem:[%s227 + $0x28] sm:$0xf]
      %v275 = vld [vmem:[%s227 + $0x2c] sm:$0xf]
      %v276 = vld [vmem:[%s227 + $0x30] sm:$0xf]
      %v277 = vld [vmem:[%s227 + $0x34] sm:$0xf]
      %v278 = vld [vmem:[%s227 + $0x38] sm:$0xf]
      %v279 = vld [vmem:[%s227 + $0x3c] sm:$0xf]
      %v280 = vld [vmem:[%s227 + $0x40] sm:$0xf]
      %v281 = vld [vmem:[%s227 + $0x44] sm:$0xf]
      %v282 = vld [vmem:[%s227 + $0x48] sm:$0xf]
      %v283 = vld [vmem:[%s227 + $0x4c] sm:$0xf]
      %v284 = vld [vmem:[%s227 + $0x50] sm:$0xf]
      %v285 = vld [vmem:[%s227 + $0x54] sm:$0xf]
      %v286 = vld [vmem:[%s227 + $0x58] sm:$0xf]
      %v287 = vld [vmem:[%s227 + $0x5c] sm:$0xf]
      %v288 = vld [vmem:[%s227 + $0x60] sm:$0xf]
      %v289 = vld [vmem:[%s227 + $0x64] sm:$0xf]
      %v290 = vld [vmem:[%s227 + $0x68] sm:$0xf]
      %v291 = vld [vmem:[%s227 + $0x6c] sm:$0xf]
      %v292 = vld [vmem:[%s227 + $0x70] sm:$0xf]
      %v293 = vld [vmem:[%s227 + $0x74] sm:$0xf]
      %v294 = vld [vmem:[%s227 + $0x78] sm:$0xf]
      %v295 = vld [vmem:[%s227 + $0x7c] sm:$0xf]
      %v296 = vld [vmem:[%s1] sm:$0x1]
      %v297 = vunpack.c.l.bf16 %v264
      %v298 = vunpack.c.l.bf16 %v265
      %v299 = vunpack.c.l.bf16 %v266
      %v300 = vunpack.c.l.bf16 %v267
      %v301 = vunpack.c.l.bf16 %v268
      %v302 = vunpack.c.l.bf16 %v269
      %v303 = vunpack.c.l.bf16 %v270
      %v304 = vunpack.c.l.bf16 %v271
      %v305 = vunpack.c.l.bf16 %v272
      %v306 = vunpack.c.l.bf16 %v273
      %v307 = vunpack.c.l.bf16 %v274
      %v308 = vunpack.c.l.bf16 %v275
      %v309 = vunpack.c.l.bf16 %v276
      %v310 = vunpack.c.l.bf16 %v277
      %v311 = vunpack.c.l.bf16 %v278
      %v312 = vunpack.c.l.bf16 %v279
      %v313 = vunpack.c.l.bf16 %v280
      %v314 = vunpack.c.l.bf16 %v281
      %v315 = vunpack.c.l.bf16 %v282
      %v316 = vunpack.c.l.bf16 %v283
      %v317 = vunpack.c.l.bf16 %v284
      %v318 = vunpack.c.l.bf16 %v285
      %v319 = vunpack.c.l.bf16 %v286
      %v320 = vunpack.c.l.bf16 %v287
      %v321 = vunpack.c.l.bf16 %v288
      %v322 = vunpack.c.l.bf16 %v289
      %v323 = vunpack.c.l.bf16 %v290
      %v324 = vunpack.c.l.bf16 %v291
      %v325 = vunpack.c.l.bf16 %v292
      %v326 = vunpack.c.l.bf16 %v293
      %v327 = vunpack.c.l.bf16 %v294
      %v328 = vunpack.c.l.bf16 %v295
      %v330 = vlaneseq
      %v331 = vshrl.u32 %v330, 7
      %v332 = vsub.s32 0, %v331
      %v333 = vrot.slane %v296, %v332
      %v335 = vmul.f32 %v297, %v333
      %v336 = vmul.f32 %v298, %v333
      %v337 = vmul.f32 %v299, %v333
      %v338 = vmul.f32 %v300, %v333
      %v339 = vmul.f32 %v301, %v333
      %v340 = vmul.f32 %v302, %v333
      %v341 = vmul.f32 %v303, %v333
      %v342 = vmul.f32 %v304, %v333
      %v343 = vmul.f32 %v305, %v333
      %v344 = vmul.f32 %v306, %v333
      %v345 = vmul.f32 %v307, %v333
      %v346 = vmul.f32 %v308, %v333
      %v347 = vmul.f32 %v309, %v333
      %v348 = vmul.f32 %v310, %v333
      %v349 = vmul.f32 %v311, %v333
      %v350 = vmul.f32 %v312, %v333
      %v351 = vmul.f32 %v313, %v333
      %v352 = vmul.f32 %v314, %v333
      %v353 = vmul.f32 %v315, %v333
      %v354 = vmul.f32 %v316, %v333
      %v355 = vmul.f32 %v317, %v333
      %v356 = vmul.f32 %v318, %v333
      %v357 = vmul.f32 %v319, %v333
      %v358 = vmul.f32 %v320, %v333
      %v359 = vmul.f32 %v321, %v333
      %v360 = vmul.f32 %v322, %v333
      %v361 = vmul.f32 %v323, %v333
      %v362 = vmul.f32 %v324, %v333
      %v363 = vmul.f32 %v325, %v333
      %v364 = vmul.f32 %v326, %v333
      %v365 = vmul.f32 %v327, %v333
      %v366 = vmul.f32 %v328, %v333
      %v367 = vld [vmem:[%s2] sm:$0x1]
      %v369 = vlaneseq
      %v370 = vshrl.u32 %v369, 7
      %v371 = vsub.s32 0, %v370
      %v372 = vrot.slane %v367, %v371
      %v374 = vadd.f32 %v335, %v372
      %v375 = vadd.f32 %v336, %v372
      %v376 = vadd.f32 %v337, %v372
      %v377 = vadd.f32 %v338, %v372
      %v378 = vadd.f32 %v339, %v372
      %v379 = vadd.f32 %v340, %v372
      %v380 = vadd.f32 %v341, %v372
      %v381 = vadd.f32 %v342, %v372
      %v382 = vadd.f32 %v343, %v372
      %v383 = vadd.f32 %v344, %v372
      %v384 = vadd.f32 %v345, %v372
      %v385 = vadd.f32 %v346, %v372
      %v386 = vadd.f32 %v347, %v372
      %v387 = vadd.f32 %v348, %v372
      %v388 = vadd.f32 %v349, %v372
      %v389 = vadd.f32 %v350, %v372
      %v390 = vadd.f32 %v351, %v372
      %v391 = vadd.f32 %v352, %v372
      %v392 = vadd.f32 %v353, %v372
      %v393 = vadd.f32 %v354, %v372
      %v394 = vadd.f32 %v355, %v372
      %v395 = vadd.f32 %v356, %v372
      %v396 = vadd.f32 %v357, %v372
      %v397 = vadd.f32 %v358, %v372
      %v398 = vadd.f32 %v359, %v372
      %v399 = vadd.f32 %v360, %v372
      %v400 = vadd.f32 %v361, %v372
      %v401 = vadd.f32 %v362, %v372
      %v402 = vadd.f32 %v363, %v372
      %v403 = vadd.f32 %v364, %v372
      %v404 = vadd.f32 %v365, %v372
      %v405 = vadd.f32 %v366, %v372
      %v406 = vmax.f32 %v374, 0.0
      %v407 = vmax.f32 %v375, 0.0
      %v408 = vmax.f32 %v376, 0.0
      %v409 = vmax.f32 %v377, 0.0
      %v410 = vmax.f32 %v378, 0.0
      %v411 = vmax.f32 %v379, 0.0
      %v412 = vmax.f32 %v380, 0.0
      %v413 = vmax.f32 %v381, 0.0
      %v414 = vmax.f32 %v382, 0.0
      %v415 = vmax.f32 %v383, 0.0
      %v416 = vmax.f32 %v384, 0.0
      %v417 = vmax.f32 %v385, 0.0
      %v418 = vmax.f32 %v386, 0.0
      %v419 = vmax.f32 %v387, 0.0
      %v420 = vmax.f32 %v388, 0.0
      %v421 = vmax.f32 %v389, 0.0
      %v422 = vmax.f32 %v390, 0.0
      %v423 = vmax.f32 %v391, 0.0
      %v424 = vmax.f32 %v392, 0.0
      %v425 = vmax.f32 %v393, 0.0
      %v426 = vmax.f32 %v394, 0.0
      %v427 = vmax.f32 %v395, 0.0
      %v428 = vmax.f32 %v396, 0.0
      %v429 = vmax.f32 %v397, 0.0
      %v430 = vmax.f32 %v398, 0.0
      %v431 = vmax.f32 %v399, 0.0
      %v432 = vmax.f32 %v400, 0.0
      %v433 = vmax.f32 %v401, 0.0
      %v434 = vmax.f32 %v402, 0.0
      %v435 = vmax.f32 %v403, 0.0
      %v436 = vmax.f32 %v404, 0.0
      %v437 = vmax.f32 %v405, 0.0
      %v438 = vlaneseq
      %v439 = vshrl.u32 %v438, 7
      %v440 = vadd.s32 %v439, 8
      %v441 = vadd.s32 %v439, 16
      %v442 = vadd.s32 %v439, 24
      %v443 = vadd.s32 %v439, 32
      %v444 = vadd.s32 %v439, 40
      %v445 = vadd.s32 %v439, 48
      %v446 = vadd.s32 %v439, 56
      %v447 = vadd.s32 %v439, 64
      %v448 = vadd.s32 %v439, 72
      %v449 = vadd.s32 %v439, 80
      %v450 = vadd.s32 %v439, 88
      %v451 = vadd.s32 %v439, 96
      %v452 = vadd.s32 %v439, 104
      %v453 = vadd.s32 %v439, 112
      %v454 = vadd.s32 %v439, 120
      %v455 = vadd.s32 %v439, 128
      %v456 = vadd.s32 %v439, 136
      %v457 = vadd.s32 %v439, 144
      %v458 = vadd.s32 %v439, 152
      %v459 = vadd.s32 %v439, 160
      %v460 = vadd.s32 %v439, 168
      %v461 = vadd.s32 %v439, 176
      %v462 = vadd.s32 %v439, 184
      %v463 = vadd.s32 %v439, 192
      %v464 = vadd.s32 %v439, 200
      %v465 = vadd.s32 %v439, 208
      %v466 = vadd.s32 %v439, 216
      %v467 = vadd.s32 %v439, 224
      %v468 = vadd.s32 %v439, 232
      %v469 = vadd.s32 %v439, 240
      %v470 = vadd.s32 %v439, 248
      %vm471 = vcmp.lt.s32.totalorder %v439, 0
      %v472 = vsub.s32 0, %v439
      %v473 = vsel %vm471, %v472, %v439
      %v474 = vshrl.u32 %v473, 4
      %v475 = vand.u32 %v473, 15
      %v476 = vsub.s32 0, %v475
      %v477 = vsel %vm471, %v476, %v475
      %vm478 = vcmp.lt.s32.totalorder %v440, 0
      %v479 = vsub.s32 0, %v440
      %v480 = vsel %vm478, %v479, %v440
      %v481 = vshrl.u32 %v480, 4
      %v482 = vand.u32 %v480, 15
      %v483 = vsub.s32 0, %v482
      %v484 = vsel %vm478, %v483, %v482
      %vm485 = vcmp.lt.s32.totalorder %v441, 0
      %v486 = vsub.s32 0, %v441
      %v487 = vsel %vm485, %v486, %v441
      %v488 = vshrl.u32 %v487, 4
      %v489 = vand.u32 %v487, 15
      %v490 = vsub.s32 0, %v489
      %v491 = vsel %vm485, %v490, %v489
      %vm492 = vcmp.lt.s32.totalorder %v442, 0
      %v493 = vsub.s32 0, %v442
      %v494 = vsel %vm492, %v493, %v442
      %v495 = vshrl.u32 %v494, 4
      %v496 = vand.u32 %v494, 15
      %v497 = vsub.s32 0, %v496
      %v498 = vsel %vm492, %v497, %v496
      %vm499 = vcmp.lt.s32.totalorder %v443, 0
      %v500 = vsub.s32 0, %v443
      %v501 = vsel %vm499, %v500, %v443
      %v502 = vshrl.u32 %v501, 4
      %v503 = vand.u32 %v501, 15
      %v504 = vsub.s32 0, %v503
      %v505 = vsel %vm499, %v504, %v503
      %vm506 = vcmp.lt.s32.totalorder %v444, 0
      %v507 = vsub.s32 0, %v444
      %v508 = vsel %vm506, %v507, %v444
      %v509 = vshrl.u32 %v508, 4
      %v510 = vand.u32 %v508, 15
      %v511 = vsub.s32 0, %v510
      %v512 = vsel %vm506, %v511, %v510
      %vm513 = vcmp.lt.s32.totalorder %v445, 0
      %v514 = vsub.s32 0, %v445
      %v515 = vsel %vm513, %v514, %v445
      %v516 = vshrl.u32 %v515, 4
      %v517 = vand.u32 %v515, 15
      %v518 = vsub.s32 0, %v517
      %v519 = vsel %vm513, %v518, %v517
      %vm520 = vcmp.lt.s32.totalorder %v446, 0
      %v521 = vsub.s32 0, %v446
      %v522 = vsel %vm520, %v521, %v446
      %v523 = vshrl.u32 %v522, 4
      %v524 = vand.u32 %v522, 15
      %v525 = vsub.s32 0, %v524
      %v526 = vsel %vm520, %v525, %v524
      %vm527 = vcmp.lt.s32.totalorder %v447, 0
      %v528 = vsub.s32 0, %v447
      %v529 = vsel %vm527, %v528, %v447
      %v530 = vshrl.u32 %v529, 4
      %v531 = vand.u32 %v529, 15
      %v532 = vsub.s32 0, %v531
      %v533 = vsel %vm527, %v532, %v531
      %vm534 = vcmp.lt.s32.totalorder %v448, 0
      %v535 = vsub.s32 0, %v448
      %v536 = vsel %vm534, %v535, %v448
      %v537 = vshrl.u32 %v536, 4
      %v538 = vand.u32 %v536, 15
      %v539 = vsub.s32 0, %v538
      %v540 = vsel %vm534, %v539, %v538
      %vm541 = vcmp.lt.s32.totalorder %v449, 0
      %v542 = vsub.s32 0, %v449
      %v543 = vsel %vm541, %v542, %v449
      %v544 = vshrl.u32 %v543, 4
      %v545 = vand.u32 %v543, 15
      %v546 = vsub.s32 0, %v545
      %v547 = vsel %vm541, %v546, %v545
      %vm548 = vcmp.lt.s32.totalorder %v450, 0
      %v549 = vsub.s32 0, %v450
      %v550 = vsel %vm548, %v549, %v450
      %v551 = vshrl.u32 %v550, 4
      %v552 = vand.u32 %v550, 15
      %v553 = vsub.s32 0, %v552
      %v554 = vsel %vm548, %v553, %v552
      %vm555 = vcmp.lt.s32.totalorder %v451, 0
      %v556 = vsub.s32 0, %v451
      %v557 = vsel %vm555, %v556, %v451
      %v558 = vshrl.u32 %v557, 4
      %v559 = vand.u32 %v557, 15
      %v560 = vsub.s32 0, %v559
      %v561 = vsel %vm555, %v560, %v559
      %vm562 = vcmp.lt.s32.totalorder %v452, 0
      %v563 = vsub.s32 0, %v452
      %v564 = vsel %vm562, %v563, %v452
      %v565 = vshrl.u32 %v564, 4
      %v566 = vand.u32 %v564, 15
      %v567 = vsub.s32 0, %v566
      %v568 = vsel %vm562, %v567, %v566
      %vm569 = vcmp.lt.s32.totalorder %v453, 0
      %v570 = vsub.s32 0, %v453
      %v571 = vsel %vm569, %v570, %v453
      %v572 = vshrl.u32 %v571, 4
      %v573 = vand.u32 %v571, 15
      %v574 = vsub.s32 0, %v573
      %v575 = vsel %vm569, %v574, %v573
      %vm576 = vcmp.lt.s32.totalorder %v454, 0
      %v577 = vsub.s32 0, %v454
      %v578 = vsel %vm576, %v577, %v454
      %v579 = vshrl.u32 %v578, 4
      %v580 = vand.u32 %v578, 15
      %v581 = vsub.s32 0, %v580
      %v582 = vsel %vm576, %v581, %v580
      %vm583 = vcmp.lt.s32.totalorder %v455, 0
      %v584 = vsub.s32 0, %v455
      %v585 = vsel %vm583, %v584, %v455
      %v586 = vshrl.u32 %v585, 4
      %v587 = vand.u32 %v585, 15
      %v588 = vsub.s32 0, %v587
      %v589 = vsel %vm583, %v588, %v587
      %vm590 = vcmp.lt.s32.totalorder %v456, 0
      %v591 = vsub.s32 0, %v456
      %v592 = vsel %vm590, %v591, %v456
      %v593 = vshrl.u32 %v592, 4
      %v594 = vand.u32 %v592, 15
      %v595 = vsub.s32 0, %v594
      %v596 = vsel %vm590, %v595, %v594
      %vm597 = vcmp.lt.s32.totalorder %v457, 0
      %v598 = vsub.s32 0, %v457
      %v599 = vsel %vm597, %v598, %v457
      %v600 = vshrl.u32 %v599, 4
      %v601 = vand.u32 %v599, 15
      %v602 = vsub.s32 0, %v601
      %v603 = vsel %vm597, %v602, %v601
      %vm604 = vcmp.lt.s32.totalorder %v458, 0
      %v605 = vsub.s32 0, %v458
      %v606 = vsel %vm604, %v605, %v458
      %v607 = vshrl.u32 %v606, 4
      %v608 = vand.u32 %v606, 15
      %v609 = vsub.s32 0, %v608
      %v610 = vsel %vm604, %v609, %v608
      %vm611 = vcmp.lt.s32.totalorder %v459, 0
      %v612 = vsub.s32 0, %v459
      %v613 = vsel %vm611, %v612, %v459
      %v614 = vshrl.u32 %v613, 4
      %v615 = vand.u32 %v613, 15
      %v616 = vsub.s32 0, %v615
      %v617 = vsel %vm611, %v616, %v615
      %vm618 = vcmp.lt.s32.totalorder %v460, 0
      %v619 = vsub.s32 0, %v460
      %v620 = vsel %vm618, %v619, %v460
      %v621 = vshrl.u32 %v620, 4
      %v622 = vand.u32 %v620, 15
      %v623 = vsub.s32 0, %v622
      %v624 = vsel %vm618, %v623, %v622
      %vm625 = vcmp.lt.s32.totalorder %v461, 0
      %v626 = vsub.s32 0, %v461
      %v627 = vsel %vm625, %v626, %v461
      %v628 = vshrl.u32 %v627, 4
      %v629 = vand.u32 %v627, 15
      %v630 = vsub.s32 0, %v629
      %v631 = vsel %vm625, %v630, %v629
      %vm632 = vcmp.lt.s32.totalorder %v462, 0
      %v633 = vsub.s32 0, %v462
      %v634 = vsel %vm632, %v633, %v462
      %v635 = vshrl.u32 %v634, 4
      %v636 = vand.u32 %v634, 15
      %v637 = vsub.s32 0, %v636
      %v638 = vsel %vm632, %v637, %v636
      %vm639 = vcmp.lt.s32.totalorder %v463, 0
      %v640 = vsub.s32 0, %v463
      %v641 = vsel %vm639, %v640, %v463
      %v642 = vshrl.u32 %v641, 4
      %v643 = vand.u32 %v641, 15
      %v644 = vsub.s32 0, %v643
      %v645 = vsel %vm639, %v644, %v643
      %vm646 = vcmp.lt.s32.totalorder %v464, 0
      %v647 = vsub.s32 0, %v464
      %v648 = vsel %vm646, %v647, %v464
      %v649 = vshrl.u32 %v648, 4
      %v650 = vand.u32 %v648, 15
      %v651 = vsub.s32 0, %v650
      %v652 = vsel %vm646, %v651, %v650
      %vm653 = vcmp.lt.s32.totalorder %v465, 0
      %v654 = vsub.s32 0, %v465
      %v655 = vsel %vm653, %v654, %v465
      %v656 = vshrl.u32 %v655, 4
      %v657 = vand.u32 %v655, 15
      %v658 = vsub.s32 0, %v657
      %v659 = vsel %vm653, %v658, %v657
      %vm660 = vcmp.lt.s32.totalorder %v466, 0
      %v661 = vsub.s32 0, %v466
      %v662 = vsel %vm660, %v661, %v466
      %v663 = vshrl.u32 %v662, 4
      %v664 = vand.u32 %v662, 15
      %v665 = vsub.s32 0, %v664
      %v666 = vsel %vm660, %v665, %v664
      %vm667 = vcmp.lt.s32.totalorder %v467, 0
      %v668 = vsub.s32 0, %v467
      %v669 = vsel %vm667, %v668, %v467
      %v670 = vshrl.u32 %v669, 4
      %v671 = vand.u32 %v669, 15
      %v672 = vsub.s32 0, %v671
      %v673 = vsel %vm667, %v672, %v671
      %vm674 = vcmp.lt.s32.totalorder %v468, 0
      %v675 = vsub.s32 0, %v468
      %v676 = vsel %vm674, %v675, %v468
      %v677 = vshrl.u32 %v676, 4
      %v678 = vand.u32 %v676, 15
      %v679 = vsub.s32 0, %v678
      %v680 = vsel %vm674, %v679, %v678
      %vm681 = vcmp.lt.s32.totalorder %v469, 0
      %v682 = vsub.s32 0, %v469
      %v683 = vsel %vm681, %v682, %v469
      %v684 = vshrl.u32 %v683, 4
      %v685 = vand.u32 %v683, 15
      %v686 = vsub.s32 0, %v685
      %v687 = vsel %vm681, %v686, %v685
      %vm688 = vcmp.lt.s32.totalorder %v470, 0
      %v689 = vsub.s32 0, %v470
      %v690 = vsel %vm688, %v689, %v470
      %v691 = vshrl.u32 %v690, 4
      %v692 = vand.u32 %v690, 15
      %v693 = vsub.s32 0, %v692
      %v694 = vsel %vm688, %v693, %v692
      %vm695 = vcmp.ne.s32.totalorder %v477, 0
      %vm696 = vcmp.ne.s32.totalorder %v484, 0
      %vm697 = vcmp.ne.s32.totalorder %v491, 0
      %vm698 = vcmp.ne.s32.totalorder %v498, 0
      %vm699 = vcmp.ne.s32.totalorder %v505, 0
      %vm700 = vcmp.ne.s32.totalorder %v512, 0
      %vm701 = vcmp.ne.s32.totalorder %v519, 0
      %vm702 = vcmp.ne.s32.totalorder %v526, 0
      %vm703 = vcmp.ne.s32.totalorder %v533, 0
      %vm704 = vcmp.ne.s32.totalorder %v540, 0
      %vm705 = vcmp.ne.s32.totalorder %v547, 0
      %vm706 = vcmp.ne.s32.totalorder %v554, 0
      %vm707 = vcmp.ne.s32.totalorder %v561, 0
      %vm708 = vcmp.ne.s32.totalorder %v568, 0
      %vm709 = vcmp.ne.s32.totalorder %v575, 0
      %vm710 = vcmp.ne.s32.totalorder %v582, 0
      %vm711 = vcmp.ne.s32.totalorder %v589, 0
      %vm712 = vcmp.ne.s32.totalorder %v596, 0
      %vm713 = vcmp.ne.s32.totalorder %v603, 0
      %vm714 = vcmp.ne.s32.totalorder %v610, 0
      %vm715 = vcmp.ne.s32.totalorder %v617, 0
      %vm716 = vcmp.ne.s32.totalorder %v624, 0
      %vm717 = vcmp.ne.s32.totalorder %v631, 0
      %vm718 = vcmp.ne.s32.totalorder %v638, 0
      %vm719 = vcmp.ne.s32.totalorder %v645, 0
      %vm720 = vcmp.ne.s32.totalorder %v652, 0
      %vm721 = vcmp.ne.s32.totalorder %v659, 0
      %vm722 = vcmp.ne.s32.totalorder %v666, 0
      %vm723 = vcmp.ne.s32.totalorder %v673, 0
      %vm724 = vcmp.ne.s32.totalorder %v680, 0
      %vm725 = vcmp.ne.s32.totalorder %v687, 0
      %vm726 = vcmp.ne.s32.totalorder %v694, 0
      %vm727 = vcmp.lt.s32.totalorder %v477, 0
      %vm728 = vcmp.lt.s32.totalorder %v484, 0
      %vm729 = vcmp.lt.s32.totalorder %v491, 0
      %vm730 = vcmp.lt.s32.totalorder %v498, 0
      %vm731 = vcmp.lt.s32.totalorder %v505, 0
      %vm732 = vcmp.lt.s32.totalorder %v512, 0
      %vm733 = vcmp.lt.s32.totalorder %v519, 0
      %vm734 = vcmp.lt.s32.totalorder %v526, 0
      %vm735 = vcmp.lt.s32.totalorder %v533, 0
      %vm736 = vcmp.lt.s32.totalorder %v540, 0
      %vm737 = vcmp.lt.s32.totalorder %v547, 0
      %vm738 = vcmp.lt.s32.totalorder %v554, 0
      %vm739 = vcmp.lt.s32.totalorder %v561, 0
      %vm740 = vcmp.lt.s32.totalorder %v568, 0
      %vm741 = vcmp.lt.s32.totalorder %v575, 0
      %vm742 = vcmp.lt.s32.totalorder %v582, 0
      %vm743 = vcmp.lt.s32.totalorder %v589, 0
      %vm744 = vcmp.lt.s32.totalorder %v596, 0
      %vm745 = vcmp.lt.s32.totalorder %v603, 0
      %vm746 = vcmp.lt.s32.totalorder %v610, 0
      %vm747 = vcmp.lt.s32.totalorder %v617, 0
      %vm748 = vcmp.lt.s32.totalorder %v624, 0
      %vm749 = vcmp.lt.s32.totalorder %v631, 0
      %vm750 = vcmp.lt.s32.totalorder %v638, 0
      %vm751 = vcmp.lt.s32.totalorder %v645, 0
      %vm752 = vcmp.lt.s32.totalorder %v652, 0
      %vm753 = vcmp.lt.s32.totalorder %v659, 0
      %vm754 = vcmp.lt.s32.totalorder %v666, 0
      %vm755 = vcmp.lt.s32.totalorder %v673, 0
      %vm756 = vcmp.lt.s32.totalorder %v680, 0
      %vm757 = vcmp.lt.s32.totalorder %v687, 0
      %vm758 = vcmp.lt.s32.totalorder %v694, 0
      %vm759 = vmand %vm727, %vm695
      %vm760 = vmand %vm728, %vm696
      %vm761 = vmand %vm729, %vm697
      %vm762 = vmand %vm730, %vm698
      %vm763 = vmand %vm731, %vm699
      %vm764 = vmand %vm732, %vm700
      %vm765 = vmand %vm733, %vm701
      %vm766 = vmand %vm734, %vm702
      %vm767 = vmand %vm735, %vm703
      %vm768 = vmand %vm736, %vm704
      %vm769 = vmand %vm737, %vm705
      %vm770 = vmand %vm738, %vm706
      %vm771 = vmand %vm739, %vm707
      %vm772 = vmand %vm740, %vm708
      %vm773 = vmand %vm741, %vm709
      %vm774 = vmand %vm742, %vm710
      %vm775 = vmand %vm743, %vm711
      %vm776 = vmand %vm744, %vm712
      %vm777 = vmand %vm745, %vm713
      %vm778 = vmand %vm746, %vm714
      %vm779 = vmand %vm747, %vm715
      %vm780 = vmand %vm748, %vm716
      %vm781 = vmand %vm749, %vm717
      %vm782 = vmand %vm750, %vm718
      %vm783 = vmand %vm751, %vm719
      %vm784 = vmand %vm752, %vm720
      %vm785 = vmand %vm753, %vm721
      %vm786 = vmand %vm754, %vm722
      %vm787 = vmand %vm755, %vm723
      %vm788 = vmand %vm756, %vm724
      %vm789 = vmand %vm757, %vm725
      %vm790 = vmand %vm758, %vm726
      %v791 = vadd.s32 %v477, 16
      %v792 = vadd.s32 %v484, 16
      %v793 = vadd.s32 %v491, 16
      %v794 = vadd.s32 %v498, 16
      %v795 = vadd.s32 %v505, 16
      %v796 = vadd.s32 %v512, 16
      %v797 = vadd.s32 %v519, 16
      %v798 = vadd.s32 %v526, 16
      %v799 = vadd.s32 %v533, 16
      %v800 = vadd.s32 %v540, 16
      %v801 = vadd.s32 %v547, 16
      %v802 = vadd.s32 %v554, 16
      %v803 = vadd.s32 %v561, 16
      %v804 = vadd.s32 %v568, 16
      %v805 = vadd.s32 %v575, 16
      %v806 = vadd.s32 %v582, 16
      %v807 = vadd.s32 %v589, 16
      %v808 = vadd.s32 %v596, 16
      %v809 = vadd.s32 %v603, 16
      %v810 = vadd.s32 %v610, 16
      %v811 = vadd.s32 %v617, 16
      %v812 = vadd.s32 %v624, 16
      %v813 = vadd.s32 %v631, 16
      %v814 = vadd.s32 %v638, 16
      %v815 = vadd.s32 %v645, 16
      %v816 = vadd.s32 %v652, 16
      %v817 = vadd.s32 %v659, 16
      %v818 = vadd.s32 %v666, 16
      %v819 = vadd.s32 %v673, 16
      %v820 = vadd.s32 %v680, 16
      %v821 = vadd.s32 %v687, 16
      %v822 = vadd.s32 %v694, 16
      %v823 = vsel %vm759, %v791, %v477
      %v824 = vsel %vm760, %v792, %v484
      %v825 = vsel %vm761, %v793, %v491
      %v826 = vsel %vm762, %v794, %v498
      %v827 = vsel %vm763, %v795, %v505
      %v828 = vsel %vm764, %v796, %v512
      %v829 = vsel %vm765, %v797, %v519
      %v830 = vsel %vm766, %v798, %v526
      %v831 = vsel %vm767, %v799, %v533
      %v832 = vsel %vm768, %v800, %v540
      %v833 = vsel %vm769, %v801, %v547
      %v834 = vsel %vm770, %v802, %v554
      %v835 = vsel %vm771, %v803, %v561
      %v836 = vsel %vm772, %v804, %v568
      %v837 = vsel %vm773, %v805, %v575
      %v838 = vsel %vm774, %v806, %v582
      %v839 = vsel %vm775, %v807, %v589
      %v840 = vsel %vm776, %v808, %v596
      %v841 = vsel %vm777, %v809, %v603
      %v842 = vsel %vm778, %v810, %v610
      %v843 = vsel %vm779, %v811, %v617
      %v844 = vsel %vm780, %v812, %v624
      %v845 = vsel %vm781, %v813, %v631
      %v846 = vsel %vm782, %v814, %v638
      %v847 = vsel %vm783, %v815, %v645
      %v848 = vsel %vm784, %v816, %v652
      %v849 = vsel %vm785, %v817, %v659
      %v850 = vsel %vm786, %v818, %v666
      %v851 = vsel %vm787, %v819, %v673
      %v852 = vsel %vm788, %v820, %v680
      %v853 = vsel %vm789, %v821, %v687
      %v854 = vsel %vm790, %v822, %v694
      %vm855 = vcmp.ne.s32.totalorder %v823, 15
      %vm856 = vcmp.ne.s32.totalorder %v824, 15
      %vm857 = vcmp.ne.s32.totalorder %v825, 15
      %vm858 = vcmp.ne.s32.totalorder %v826, 15
      %vm859 = vcmp.ne.s32.totalorder %v827, 15
      %vm860 = vcmp.ne.s32.totalorder %v828, 15
      %vm861 = vcmp.ne.s32.totalorder %v829, 15
      %vm862 = vcmp.ne.s32.totalorder %v830, 15
      %vm863 = vcmp.ne.s32.totalorder %v831, 15
      %vm864 = vcmp.ne.s32.totalorder %v832, 15
      %vm865 = vcmp.ne.s32.totalorder %v833, 15
      %vm866 = vcmp.ne.s32.totalorder %v834, 15
      %vm867 = vcmp.ne.s32.totalorder %v835, 15
      %vm868 = vcmp.ne.s32.totalorder %v836, 15
      %vm869 = vcmp.ne.s32.totalorder %v837, 15
      %vm870 = vcmp.ne.s32.totalorder %v838, 15
      %vm871 = vcmp.ne.s32.totalorder %v839, 15
      %vm872 = vcmp.ne.s32.totalorder %v840, 15
      %vm873 = vcmp.ne.s32.totalorder %v841, 15
      %vm874 = vcmp.ne.s32.totalorder %v842, 15
      %vm875 = vcmp.ne.s32.totalorder %v843, 15
      %vm876 = vcmp.ne.s32.totalorder %v844, 15
      %vm877 = vcmp.ne.s32.totalorder %v845, 15
      %vm878 = vcmp.ne.s32.totalorder %v846, 15
      %vm879 = vcmp.ne.s32.totalorder %v847, 15
      %vm880 = vcmp.ne.s32.totalorder %v848, 15
      %vm881 = vcmp.ne.s32.totalorder %v849, 15
      %vm882 = vcmp.ne.s32.totalorder %v850, 15
      %vm883 = vcmp.ne.s32.totalorder %v851, 15
      %vm884 = vcmp.ne.s32.totalorder %v852, 15
      %vm885 = vcmp.ne.s32.totalorder %v853, 15
      %vm886 = vcmp.ne.s32.totalorder %v854, 15
      %v887 = vsel %vm855, 1, 0
      %v888 = vsel %vm856, 1, 0
      %v889 = vsel %vm857, 1, 0
      %v890 = vsel %vm858, 1, 0
      %v891 = vsel %vm859, 1, 0
      %v892 = vsel %vm860, 1, 0
      %v893 = vsel %vm861, 1, 0
      %v894 = vsel %vm862, 1, 0
      %v895 = vsel %vm863, 1, 0
      %v896 = vsel %vm864, 1, 0
      %v897 = vsel %vm865, 1, 0
      %v898 = vsel %vm866, 1, 0
      %v899 = vsel %vm867, 1, 0
      %v900 = vsel %vm868, 1, 0
      %v901 = vsel %vm869, 1, 0
      %v902 = vsel %vm870, 1, 0
      %v903 = vsel %vm871, 1, 0
      %v904 = vsel %vm872, 1, 0
      %v905 = vsel %vm873, 1, 0
      %v906 = vsel %vm874, 1, 0
      %v907 = vsel %vm875, 1, 0
      %v908 = vsel %vm876, 1, 0
      %v909 = vsel %vm877, 1, 0
      %v910 = vsel %vm878, 1, 0
      %v911 = vsel %vm879, 1, 0
      %v912 = vsel %vm880, 1, 0
      %v913 = vsel %vm881, 1, 0
      %v914 = vsel %vm882, 1, 0
      %v915 = vsel %vm883, 1, 0
      %v916 = vsel %vm884, 1, 0
      %v917 = vsel %vm885, 1, 0
      %v918 = vsel %vm886, 1, 0
      %vm919 = vcmp.eq.s32.totalorder %v887, 1
      %vm920 = vcmp.eq.s32.totalorder %v888, 1
      %vm921 = vcmp.eq.s32.totalorder %v889, 1
      %vm922 = vcmp.eq.s32.totalorder %v890, 1
      %vm923 = vcmp.eq.s32.totalorder %v891, 1
      %vm924 = vcmp.eq.s32.totalorder %v892, 1
      %vm925 = vcmp.eq.s32.totalorder %v893, 1
      %vm926 = vcmp.eq.s32.totalorder %v894, 1
      %vm927 = vcmp.eq.s32.totalorder %v895, 1
      %vm928 = vcmp.eq.s32.totalorder %v896, 1
      %vm929 = vcmp.eq.s32.totalorder %v897, 1
      %vm930 = vcmp.eq.s32.totalorder %v898, 1
      %vm931 = vcmp.eq.s32.totalorder %v899, 1
      %vm932 = vcmp.eq.s32.totalorder %v900, 1
      %vm933 = vcmp.eq.s32.totalorder %v901, 1
      %vm934 = vcmp.eq.s32.totalorder %v902, 1
      %vm935 = vcmp.eq.s32.totalorder %v903, 1
      %vm936 = vcmp.eq.s32.totalorder %v904, 1
      %vm937 = vcmp.eq.s32.totalorder %v905, 1
      %vm938 = vcmp.eq.s32.totalorder %v906, 1
      %vm939 = vcmp.eq.s32.totalorder %v907, 1
      %vm940 = vcmp.eq.s32.totalorder %v908, 1
      %vm941 = vcmp.eq.s32.totalorder %v909, 1
      %vm942 = vcmp.eq.s32.totalorder %v910, 1
      %vm943 = vcmp.eq.s32.totalorder %v911, 1
      %vm944 = vcmp.eq.s32.totalorder %v912, 1
      %vm945 = vcmp.eq.s32.totalorder %v913, 1
      %vm946 = vcmp.eq.s32.totalorder %v914, 1
      %vm947 = vcmp.eq.s32.totalorder %v915, 1
      %vm948 = vcmp.eq.s32.totalorder %v916, 1
      %vm949 = vcmp.eq.s32.totalorder %v917, 1
      %vm950 = vcmp.eq.s32.totalorder %v918, 1
      %v951 = vsel %vm919, %v406, 0.0
      %v952 = vsel %vm920, %v407, 0.0
      %v953 = vsel %vm921, %v408, 0.0
      %v954 = vsel %vm922, %v409, 0.0
      %v955 = vsel %vm923, %v410, 0.0
      %v956 = vsel %vm924, %v411, 0.0
      %v957 = vsel %vm925, %v412, 0.0
      %v958 = vsel %vm926, %v413, 0.0
      %v959 = vsel %vm927, %v414, 0.0
      %v960 = vsel %vm928, %v415, 0.0
      %v961 = vsel %vm929, %v416, 0.0
      %v962 = vsel %vm930, %v417, 0.0
      %v963 = vsel %vm931, %v418, 0.0
      %v964 = vsel %vm932, %v419, 0.0
      %v965 = vsel %vm933, %v420, 0.0
      %v966 = vsel %vm934, %v421, 0.0
      %v967 = vsel %vm935, %v422, 0.0
      %v968 = vsel %vm936, %v423, 0.0
      %v969 = vsel %vm937, %v424, 0.0
      %v970 = vsel %vm938, %v425, 0.0
      %v971 = vsel %vm939, %v426, 0.0
      %v972 = vsel %vm940, %v427, 0.0
      %v973 = vsel %vm941, %v428, 0.0
      %v974 = vsel %vm942, %v429, 0.0
      %v975 = vsel %vm943, %v430, 0.0
      %v976 = vsel %vm944, %v431, 0.0
      %v977 = vsel %vm945, %v432, 0.0
      %v978 = vsel %vm946, %v433, 0.0
      %v979 = vsel %vm947, %v434, 0.0
      %v980 = vsel %vm948, %v435, 0.0
      %v981 = vsel %vm949, %v436, 0.0
      %v982 = vsel %vm950, %v437, 0.0
      %vm983 = vcmp.ne.s32.totalorder %v823, 0
      %vm984 = vcmp.ne.s32.totalorder %v824, 0
      %vm985 = vcmp.ne.s32.totalorder %v825, 0
      %vm986 = vcmp.ne.s32.totalorder %v826, 0
      %vm987 = vcmp.ne.s32.totalorder %v827, 0
      %vm988 = vcmp.ne.s32.totalorder %v828, 0
      %vm989 = vcmp.ne.s32.totalorder %v829, 0
      %vm990 = vcmp.ne.s32.totalorder %v830, 0
      %vm991 = vcmp.ne.s32.totalorder %v831, 0
      %vm992 = vcmp.ne.s32.totalorder %v832, 0
      %vm993 = vcmp.ne.s32.totalorder %v833, 0
      %vm994 = vcmp.ne.s32.totalorder %v834, 0
      %vm995 = vcmp.ne.s32.totalorder %v835, 0
      %vm996 = vcmp.ne.s32.totalorder %v836, 0
      %vm997 = vcmp.ne.s32.totalorder %v837, 0
      %vm998 = vcmp.ne.s32.totalorder %v838, 0
      %vm999 = vcmp.ne.s32.totalorder %v839, 0
      %vm1000 = vcmp.ne.s32.totalorder %v840, 0
      %vm1001 = vcmp.ne.s32.totalorder %v841, 0
      %vm1002 = vcmp.ne.s32.totalorder %v842, 0
      %vm1003 = vcmp.ne.s32.totalorder %v843, 0
      %vm1004 = vcmp.ne.s32.totalorder %v844, 0
      %vm1005 = vcmp.ne.s32.totalorder %v845, 0
      %vm1006 = vcmp.ne.s32.totalorder %v846, 0
      %vm1007 = vcmp.ne.s32.totalorder %v847, 0
      %vm1008 = vcmp.ne.s32.totalorder %v848, 0
      %vm1009 = vcmp.ne.s32.totalorder %v849, 0
      %vm1010 = vcmp.ne.s32.totalorder %v850, 0
      %vm1011 = vcmp.ne.s32.totalorder %v851, 0
      %vm1012 = vcmp.ne.s32.totalorder %v852, 0
      %vm1013 = vcmp.ne.s32.totalorder %v853, 0
      %vm1014 = vcmp.ne.s32.totalorder %v854, 0
      %v1015 = vsel %vm983, 1, 0
      %v1016 = vsel %vm984, 1, 0
      %v1017 = vsel %vm985, 1, 0
      %v1018 = vsel %vm986, 1, 0
      %v1019 = vsel %vm987, 1, 0
      %v1020 = vsel %vm988, 1, 0
      %v1021 = vsel %vm989, 1, 0
      %v1022 = vsel %vm990, 1, 0
      %v1023 = vsel %vm991, 1, 0
      %v1024 = vsel %vm992, 1, 0
      %v1025 = vsel %vm993, 1, 0
      %v1026 = vsel %vm994, 1, 0
      %v1027 = vsel %vm995, 1, 0
      %v1028 = vsel %vm996, 1, 0
      %v1029 = vsel %vm997, 1, 0
      %v1030 = vsel %vm998, 1, 0
      %v1031 = vsel %vm999, 1, 0
      %v1032 = vsel %vm1000, 1, 0
      %v1033 = vsel %vm1001, 1, 0
      %v1034 = vsel %vm1002, 1, 0
      %v1035 = vsel %vm1003, 1, 0
      %v1036 = vsel %vm1004, 1, 0
      %v1037 = vsel %vm1005, 1, 0
      %v1038 = vsel %vm1006, 1, 0
      %v1039 = vsel %vm1007, 1, 0
      %v1040 = vsel %vm1008, 1, 0
      %v1041 = vsel %vm1009, 1, 0
      %v1042 = vsel %vm1010, 1, 0
      %v1043 = vsel %vm1011, 1, 0
      %v1044 = vsel %vm1012, 1, 0
      %v1045 = vsel %vm1013, 1, 0
      %v1046 = vsel %vm1014, 1, 0
      %vm1047 = vcmp.eq.s32.totalorder %v1015, 1
      %vm1048 = vcmp.eq.s32.totalorder %v1016, 1
      %vm1049 = vcmp.eq.s32.totalorder %v1017, 1
      %vm1050 = vcmp.eq.s32.totalorder %v1018, 1
      %vm1051 = vcmp.eq.s32.totalorder %v1019, 1
      %vm1052 = vcmp.eq.s32.totalorder %v1020, 1
      %vm1053 = vcmp.eq.s32.totalorder %v1021, 1
      %vm1054 = vcmp.eq.s32.totalorder %v1022, 1
      %vm1055 = vcmp.eq.s32.totalorder %v1023, 1
      %vm1056 = vcmp.eq.s32.totalorder %v1024, 1
      %vm1057 = vcmp.eq.s32.totalorder %v1025, 1
      %vm1058 = vcmp.eq.s32.totalorder %v1026, 1
      %vm1059 = vcmp.eq.s32.totalorder %v1027, 1
      %vm1060 = vcmp.eq.s32.totalorder %v1028, 1
      %vm1061 = vcmp.eq.s32.totalorder %v1029, 1
      %vm1062 = vcmp.eq.s32.totalorder %v1030, 1
      %vm1063 = vcmp.eq.s32.totalorder %v1031, 1
      %vm1064 = vcmp.eq.s32.totalorder %v1032, 1
      %vm1065 = vcmp.eq.s32.totalorder %v1033, 1
      %vm1066 = vcmp.eq.s32.totalorder %v1034, 1
      %vm1067 = vcmp.eq.s32.totalorder %v1035, 1
      %vm1068 = vcmp.eq.s32.totalorder %v1036, 1
      %vm1069 = vcmp.eq.s32.totalorder %v1037, 1
      %vm1070 = vcmp.eq.s32.totalorder %v1038, 1
      %vm1071 = vcmp.eq.s32.totalorder %v1039, 1
      %vm1072 = vcmp.eq.s32.totalorder %v1040, 1
      %vm1073 = vcmp.eq.s32.totalorder %v1041, 1
      %vm1074 = vcmp.eq.s32.totalorder %v1042, 1
      %vm1075 = vcmp.eq.s32.totalorder %v1043, 1
      %vm1076 = vcmp.eq.s32.totalorder %v1044, 1
      %vm1077 = vcmp.eq.s32.totalorder %v1045, 1
      %vm1078 = vcmp.eq.s32.totalorder %v1046, 1
      %v1079 = vsel %vm1047, %v406, 0.0
      %v1080 = vsel %vm1048, %v407, 0.0
      %v1081 = vsel %vm1049, %v408, 0.0
      %v1082 = vsel %vm1050, %v409, 0.0
      %v1083 = vsel %vm1051, %v410, 0.0
      %v1084 = vsel %vm1052, %v411, 0.0
      %v1085 = vsel %vm1053, %v412, 0.0
      %v1086 = vsel %vm1054, %v413, 0.0
      %v1087 = vsel %vm1055, %v414, 0.0
      %v1088 = vsel %vm1056, %v415, 0.0
      %v1089 = vsel %vm1057, %v416, 0.0
      %v1090 = vsel %vm1058, %v417, 0.0
      %v1091 = vsel %vm1059, %v418, 0.0
      %v1092 = vsel %vm1060, %v419, 0.0
      %v1093 = vsel %vm1061, %v420, 0.0
      %v1094 = vsel %vm1062, %v421, 0.0
      %v1095 = vsel %vm1063, %v422, 0.0
      %v1096 = vsel %vm1064, %v423, 0.0
      %v1097 = vsel %vm1065, %v424, 0.0
      %v1098 = vsel %vm1066, %v425, 0.0
      %v1099 = vsel %vm1067, %v426, 0.0
      %v1100 = vsel %vm1068, %v427, 0.0
      %v1101 = vsel %vm1069, %v428, 0.0
      %v1102 = vsel %vm1070, %v429, 0.0
      %v1103 = vsel %vm1071, %v430, 0.0
      %v1104 = vsel %vm1072, %v431, 0.0
      %v1105 = vsel %vm1073, %v432, 0.0
      %v1106 = vsel %vm1074, %v433, 0.0
      %v1107 = vsel %vm1075, %v434, 0.0
      %v1108 = vsel %vm1076, %v435, 0.0
      %v1109 = vsel %vm1077, %v436, 0.0
      %v1110 = vsel %vm1078, %v437, 0.0
      %vm1143 = vcmask 1040384
      %v1144 = vrot.slane %v951, 7
      %v1145 = vrot.slane %v952, 7
      %v1146 = vsel %vm1143, %v1144, %v1145
      %v1147 = vrot.slane %v953, 7
      %v1148 = vsel %vm1143, %v1145, %v1147
      %v1149 = vrot.slane %v954, 7
      %v1150 = vsel %vm1143, %v1147, %v1149
      %v1151 = vrot.slane %v955, 7
      %v1152 = vsel %vm1143, %v1149, %v1151
      %v1153 = vrot.slane %v956, 7
      %v1154 = vsel %vm1143, %v1151, %v1153
      %v1155 = vrot.slane %v957, 7
      %v1156 = vsel %vm1143, %v1153, %v1155
      %v1157 = vrot.slane %v958, 7
      %v1158 = vsel %vm1143, %v1155, %v1157
      %v1159 = vrot.slane %v959, 7
      %v1160 = vsel %vm1143, %v1157, %v1159
      %v1161 = vrot.slane %v960, 7
      %v1162 = vsel %vm1143, %v1159, %v1161
      %v1163 = vrot.slane %v961, 7
      %v1164 = vsel %vm1143, %v1161, %v1163
      %v1165 = vrot.slane %v962, 7
      %v1166 = vsel %vm1143, %v1163, %v1165
      %v1167 = vrot.slane %v963, 7
      %v1168 = vsel %vm1143, %v1165, %v1167
      %v1169 = vrot.slane %v964, 7
      %v1170 = vsel %vm1143, %v1167, %v1169
      %v1171 = vrot.slane %v965, 7
      %v1172 = vsel %vm1143, %v1169, %v1171
      %v1173 = vrot.slane %v966, 7
      %v1174 = vsel %vm1143, %v1171, %v1173
      %v1175 = vrot.slane %v967, 7
      %v1176 = vsel %vm1143, %v1173, %v1175
      %v1177 = vrot.slane %v968, 7
      %v1178 = vsel %vm1143, %v1175, %v1177
      %v1179 = vrot.slane %v969, 7
      %v1180 = vsel %vm1143, %v1177, %v1179
      %v1181 = vrot.slane %v970, 7
      %v1182 = vsel %vm1143, %v1179, %v1181
      %v1183 = vrot.slane %v971, 7
      %v1184 = vsel %vm1143, %v1181, %v1183
      %v1185 = vrot.slane %v972, 7
      %v1186 = vsel %vm1143, %v1183, %v1185
      %v1187 = vrot.slane %v973, 7
      %v1188 = vsel %vm1143, %v1185, %v1187
      %v1189 = vrot.slane %v974, 7
      %v1190 = vsel %vm1143, %v1187, %v1189
      %v1191 = vrot.slane %v975, 7
      %v1192 = vsel %vm1143, %v1189, %v1191
      %v1193 = vrot.slane %v976, 7
      %v1194 = vsel %vm1143, %v1191, %v1193
      %v1195 = vrot.slane %v977, 7
      %v1196 = vsel %vm1143, %v1193, %v1195
      %v1197 = vrot.slane %v978, 7
      %v1198 = vsel %vm1143, %v1195, %v1197
      %v1199 = vrot.slane %v979, 7
      %v1200 = vsel %vm1143, %v1197, %v1199
      %v1201 = vrot.slane %v980, 7
      %v1202 = vsel %vm1143, %v1199, %v1201
      %v1203 = vrot.slane %v981, 7
      %v1204 = vsel %vm1143, %v1201, %v1203
      %v1205 = vrot.slane %v982, 7
      %v1206 = vsel %vm1143, %v1203, %v1205
      %1240 = vst [vmem:[#allocation2 + $0x30] sm:$0xfe] %v1144
      %1241 = vst [vmem:[#allocation2 + $0x48] sm:$0xff] %v1146
      %1242 = vst [vmem:[#allocation2 + $0x60] sm:$0xff] %v1148
      %1243 = vst [vmem:[#allocation2 + $0x78] sm:$0xff] %v1150
      %1244 = vst [vmem:[#allocation2 + $0x90] sm:$0xff] %v1152
      %1245 = vst [vmem:[#allocation2 + $0xa8] sm:$0xff] %v1154
      %1246 = vst [vmem:[#allocation2 + $0xc0] sm:$0xff] %v1156
      %1247 = vst [vmem:[#allocation2 + $0xd8] sm:$0xff] %v1158
      %1248 = vst [vmem:[#allocation2 + $0xf0] sm:$0xff] %v1160
      %1249 = vst [vmem:[#allocation2 + $0x108] sm:$0xff] %v1162
      %1250 = vst [vmem:[#allocation2 + $0x120] sm:$0xff] %v1164
      %1251 = vst [vmem:[#allocation2 + $0x138] sm:$0xff] %v1166
      %1252 = vst [vmem:[#allocation2 + $0x150] sm:$0xff] %v1168
      %1253 = vst [vmem:[#allocation2 + $0x168] sm:$0xff] %v1170
      %1254 = vst [vmem:[#allocation2 + $0x180] sm:$0xff] %v1172
      %1255 = vst [vmem:[#allocation2 + $0x198] sm:$0xff] %v1174
      %1256 = vst [vmem:[#allocation2 + $0x1b0] sm:$0xff] %v1176
      %1257 = vst [vmem:[#allocation2 + $0x1c8] sm:$0xff] %v1178
      %1258 = vst [vmem:[#allocation2 + $0x1e0] sm:$0xff] %v1180
      %1259 = vst [vmem:[#allocation2 + $0x1f8] sm:$0xff] %v1182
      %1260 = vst [vmem:[#allocation2 + $0x210] sm:$0xff] %v1184
      %1261 = vst [vmem:[#allocation2 + $0x228] sm:$0xff] %v1186
      %1262 = vst [vmem:[#allocation2 + $0x240] sm:$0xff] %v1188
      %1263 = vst [vmem:[#allocation2 + $0x258] sm:$0xff] %v1190
      %1264 = vst [vmem:[#allocation2 + $0x270] sm:$0xff] %v1192
      %1265 = vst [vmem:[#allocation2 + $0x288] sm:$0xff] %v1194
      %1266 = vst [vmem:[#allocation2 + $0x2a0] sm:$0xff] %v1196
      %1267 = vst [vmem:[#allocation2 + $0x2b8] sm:$0xff] %v1198
      %1268 = vst [vmem:[#allocation2 + $0x2d0] sm:$0xff] %v1200
      %1269 = vst [vmem:[#allocation2 + $0x2e8] sm:$0xff] %v1202
      %1270 = vst [vmem:[#allocation2 + $0x300] sm:$0xff] %v1204
      %1271 = vst [vmem:[#allocation2 + $0x318] sm:$0xff] %v1206
      %1272 = vst [vmem:[#allocation2 + $0x330] sm:$0x1] %v1205
      %1273 = vst [vmem:[#allocation2 + $0x38] sm:$0xff] %v406
      %1274 = vst [vmem:[#allocation2 + $0x50] sm:$0xff] %v407
      %1275 = vst [vmem:[#allocation2 + $0x68] sm:$0xff] %v408
      %1276 = vst [vmem:[#allocation2 + $0x80] sm:$0xff] %v409
      %1277 = vst [vmem:[#allocation2 + $0x98] sm:$0xff] %v410
      %1278 = vst [vmem:[#allocation2 + $0xb0] sm:$0xff] %v411
      %1279 = vst [vmem:[#allocation2 + $0xc8] sm:$0xff] %v412
      %1280 = vst [vmem:[#allocation2 + $0xe0] sm:$0xff] %v413
      %1281 = vst [vmem:[#allocation2 + $0xf8] sm:$0xff] %v414
      %1282 = vst [vmem:[#allocation2 + $0x110] sm:$0xff] %v415
      %1283 = vst [vmem:[#allocation2 + $0x128] sm:$0xff] %v416
      %1284 = vst [vmem:[#allocation2 + $0x140] sm:$0xff] %v417
      %1285 = vst [vmem:[#allocation2 + $0x158] sm:$0xff] %v418
      %1286 = vst [vmem:[#allocation2 + $0x170] sm:$0xff] %v419
      %1287 = vst [vmem:[#allocation2 + $0x188] sm:$0xff] %v420
      %1288 = vst [vmem:[#allocation2 + $0x1a0] sm:$0xff] %v421
      %1289 = vst [vmem:[#allocation2 + $0x1b8] sm:$0xff] %v422
      %1290 = vst [vmem:[#allocation2 + $0x1d0] sm:$0xff] %v423
      %1291 = vst [vmem:[#allocation2 + $0x1e8] sm:$0xff] %v424
      %1292 = vst [vmem:[#allocation2 + $0x200] sm:$0xff] %v425
      %1293 = vst [vmem:[#allocation2 + $0x218] sm:$0xff] %v426
      %1294 = vst [vmem:[#allocation2 + $0x230] sm:$0xff] %v427
      %1295 = vst [vmem:[#allocation2 + $0x248] sm:$0xff] %v428
      %1296 = vst [vmem:[#allocation2 + $0x260] sm:$0xff] %v429
      %1297 = vst [vmem:[#allocation2 + $0x278] sm:$0xff] %v430
      %1298 = vst [vmem:[#allocation2 + $0x290] sm:$0xff] %v431
      %1299 = vst [vmem:[#allocation2 + $0x2a8] sm:$0xff] %v432
      %1300 = vst [vmem:[#allocation2 + $0x2c0] sm:$0xff] %v433
      %1301 = vst [vmem:[#allocation2 + $0x2d8] sm:$0xff] %v434
      %1302 = vst [vmem:[#allocation2 + $0x2f0] sm:$0xff] %v435
      %1303 = vst [vmem:[#allocation2 + $0x308] sm:$0xff] %v436
      %1304 = vst [vmem:[#allocation2 + $0x320] sm:$0xff] %v437
      %vm1337 = vcmask 1046528
      %v1338 = vrot.slane %v1079, 1
      %v1339 = vrot.slane %v1080, 1
      %v1340 = vsel %vm1337, %v1338, %v1339
      %v1341 = vrot.slane %v1081, 1
      %v1342 = vsel %vm1337, %v1339, %v1341
      %v1343 = vrot.slane %v1082, 1
      %v1344 = vsel %vm1337, %v1341, %v1343
      %v1345 = vrot.slane %v1083, 1
      %v1346 = vsel %vm1337, %v1343, %v1345
      %v1347 = vrot.slane %v1084, 1
      %v1348 = vsel %vm1337, %v1345, %v1347
      %v1349 = vrot.slane %v1085, 1
      %v1350 = vsel %vm1337, %v1347, %v1349
      %v1351 = vrot.slane %v1086, 1
      %v1352 = vsel %vm1337, %v1349, %v1351
      %v1353 = vrot.slane %v1087, 1
      %v1354 = vsel %vm1337, %v1351, %v1353
      %v1355 = vrot.slane %v1088, 1
      %v1356 = vsel %vm1337, %v1353, %v1355
      %v1357 = vrot.slane %v1089, 1
      %v1358 = vsel %vm1337, %v1355, %v1357
      %v1359 = vrot.slane %v1090, 1
      %v1360 = vsel %vm1337, %v1357, %v1359
      %v1361 = vrot.slane %v1091, 1
      %v1362 = vsel %vm1337, %v1359, %v1361
      %v1363 = vrot.slane %v1092, 1
      %v1364 = vsel %vm1337, %v1361, %v1363
      %v1365 = vrot.slane %v1093, 1
      %v1366 = vsel %vm1337, %v1363, %v1365
      %v1367 = vrot.slane %v1094, 1
      %v1368 = vsel %vm1337, %v1365, %v1367
      %v1369 = vrot.slane %v1095, 1
      %v1370 = vsel %vm1337, %v1367, %v1369
      %v1371 = vrot.slane %v1096, 1
      %v1372 = vsel %vm1337, %v1369, %v1371
      %v1373 = vrot.slane %v1097, 1
      %v1374 = vsel %vm1337, %v1371, %v1373
      %v1375 = vrot.slane %v1098, 1
      %v1376 = vsel %vm1337, %v1373, %v1375
      %v1377 = vrot.slane %v1099, 1
      %v1378 = vsel %vm1337, %v1375, %v1377
      %v1379 = vrot.slane %v1100, 1
      %v1380 = vsel %vm1337, %v1377, %v1379
      %v1381 = vrot.slane %v1101, 1
      %v1382 = vsel %vm1337, %v1379, %v1381
      %v1383 = vrot.slane %v1102, 1
      %v1384 = vsel %vm1337, %v1381, %v1383
      %v1385 = vrot.slane %v1103, 1
      %v1386 = vsel %vm1337, %v1383, %v1385
      %v1387 = vrot.slane %v1104, 1
      %v1388 = vsel %vm1337, %v1385, %v1387
      %v1389 = vrot.slane %v1105, 1
      %v1390 = vsel %vm1337, %v1387, %v1389
      %v1391 = vrot.slane %v1106, 1
      %v1392 = vsel %vm1337, %v1389, %v1391
      %v1393 = vrot.slane %v1107, 1
      %v1394 = vsel %vm1337, %v1391, %v1393
      %v1395 = vrot.slane %v1108, 1
      %v1396 = vsel %vm1337, %v1393, %v1395
      %v1397 = vrot.slane %v1109, 1
      %v1398 = vsel %vm1337, %v1395, %v1397
      %v1399 = vrot.slane %v1110, 1
      %v1400 = vsel %vm1337, %v1397, %v1399
      %1434 = vst [vmem:[#allocation2 + $0x28] sm:$0x80] %v1338
      %1435 = vst [vmem:[#allocation2 + $0x40] sm:$0xff] %v1340
      %1436 = vst [vmem:[#allocation2 + $0x58] sm:$0xff] %v1342
      %1437 = vst [vmem:[#allocation2 + $0x70] sm:$0xff] %v1344
      %1438 = vst [vmem:[#allocation2 + $0x88] sm:$0xff] %v1346
      %1439 = vst [vmem:[#allocation2 + $0xa0] sm:$0xff] %v1348
      %1440 = vst [vmem:[#allocation2 + $0xb8] sm:$0xff] %v1350
      %1441 = vst [vmem:[#allocation2 + $0xd0] sm:$0xff] %v1352
      %1442 = vst [vmem:[#allocation2 + $0xe8] sm:$0xff] %v1354
      %1443 = vst [vmem:[#allocation2 + $0x100] sm:$0xff] %v1356
      %1444 = vst [vmem:[#allocation2 + $0x118] sm:$0xff] %v1358
      %1445 = vst [vmem:[#allocation2 + $0x130] sm:$0xff] %v1360
      %1446 = vst [vmem:[#allocation2 + $0x148] sm:$0xff] %v1362
      %1447 = vst [vmem:[#allocation2 + $0x160] sm:$0xff] %v1364
      %1448 = vst [vmem:[#allocation2 + $0x178] sm:$0xff] %v1366
      %1449 = vst [vmem:[#allocation2 + $0x190] sm:$0xff] %v1368
      %1450 = vst [vmem:[#allocation2 + $0x1a8] sm:$0xff] %v1370
      %1451 = vst [vmem:[#allocation2 + $0x1c0] sm:$0xff] %v1372
      %1452 = vst [vmem:[#allocation2 + $0x1d8] sm:$0xff] %v1374
      %1453 = vst [vmem:[#allocation2 + $0x1f0] sm:$0xff] %v1376
      %1454 = vst [vmem:[#allocation2 + $0x208] sm:$0xff] %v1378
      %1455 = vst [vmem:[#allocation2 + $0x220] sm:$0xff] %v1380
      %1456 = vst [vmem:[#allocation2 + $0x238] sm:$0xff] %v1382
      %1457 = vst [vmem:[#allocation2 + $0x250] sm:$0xff] %v1384
      %1458 = vst [vmem:[#allocation2 + $0x268] sm:$0xff] %v1386
      %1459 = vst [vmem:[#allocation2 + $0x280] sm:$0xff] %v1388
      %1460 = vst [vmem:[#allocation2 + $0x298] sm:$0xff] %v1390
      %1461 = vst [vmem:[#allocation2 + $0x2b0] sm:$0xff] %v1392
      %1462 = vst [vmem:[#allocation2 + $0x2c8] sm:$0xff] %v1394
      %1463 = vst [vmem:[#allocation2 + $0x2e0] sm:$0xff] %v1396
      %1464 = vst [vmem:[#allocation2 + $0x2f8] sm:$0xff] %v1398
      %1465 = vst [vmem:[#allocation2 + $0x310] sm:$0xff] %v1400
      %1466 = vst [vmem:[#allocation2 + $0x328] sm:$0x7f] %v1399
      %v1467 = vld [vmem:[#allocation2] sm:$0xff]
      %v1468 = vld [vmem:[#allocation2 + $0x8] sm:$0xff]
      %v1469 = vld [vmem:[#allocation2 + $0x10] sm:$0xff]
      %v1470 = vld [vmem:[#allocation2 + $0x18] sm:$0xff]
      %v1471 = vld [vmem:[#allocation2 + $0x20] sm:$0xff]
      %v1472 = vld [vmem:[#allocation2 + $0x28] sm:$0xff]
      %v1473 = vld [vmem:[#allocation2 + $0x30] sm:$0xff]
      %v1474 = vld [vmem:[#allocation2 + $0x38] sm:$0xff]
      %v1475 = vld [vmem:[#allocation2 + $0x40] sm:$0xff]
      %v1476 = vld [vmem:[#allocation2 + $0x48] sm:$0xff]
      %v1477 = vld [vmem:[#allocation2 + $0x50] sm:$0xff]
      %v1478 = vld [vmem:[#allocation2 + $0x58] sm:$0xff]
      %v1479 = vld [vmem:[#allocation2 + $0x60] sm:$0xff]
      %v1480 = vld [vmem:[#allocation2 + $0x68] sm:$0xff]
      %v1481 = vld [vmem:[#allocation2 + $0x70] sm:$0xff]
      %v1482 = vld [vmem:[#allocation2 + $0x78] sm:$0xff]
      %v1483 = vld [vmem:[#allocation2 + $0x80] sm:$0xff]
      %v1484 = vld [vmem:[#allocation2 + $0x88] sm:$0xff]
      %v1485 = vld [vmem:[#allocation2 + $0x90] sm:$0xff]
      %v1486 = vld [vmem:[#allocation2 + $0x98] sm:$0xff]
      %v1487 = vld [vmem:[#allocation2 + $0xa0] sm:$0xff]
      %v1488 = vld [vmem:[#allocation2 + $0xa8] sm:$0xff]
      %v1489 = vld [vmem:[#allocation2 + $0xb0] sm:$0xff]
      %v1490 = vld [vmem:[#allocation2 + $0xb8] sm:$0xff]
      %v1491 = vld [vmem:[#allocation2 + $0xc0] sm:$0xff]
      %v1492 = vld [vmem:[#allocation2 + $0xc8] sm:$0xff]
      %v1493 = vld [vmem:[#allocation2 + $0xd0] sm:$0xff]
      %v1494 = vld [vmem:[#allocation2 + $0xd8] sm:$0xff]
      %v1495 = vld [vmem:[#allocation2 + $0xe0] sm:$0xff]
      %v1496 = vld [vmem:[#allocation2 + $0xe8] sm:$0xff]
      %v1497 = vld [vmem:[#allocation2 + $0xf0] sm:$0xff]
      %v1498 = vld [vmem:[#allocation2 + $0xf8] sm:$0xff]
      %v1499 = vld [vmem:[#allocation2 + $0x100] sm:$0xff]
      %v1500 = vld [vmem:[#allocation2 + $0x108] sm:$0xff]
      %v1501 = vld [vmem:[#allocation2 + $0x110] sm:$0xff]
      %v1502 = vld [vmem:[#allocation2 + $0x118] sm:$0xff]
      %v1503 = vld [vmem:[#allocation2 + $0x120] sm:$0xff]
      %v1504 = vld [vmem:[#allocation2 + $0x128] sm:$0xff]
      %v1505 = vld [vmem:[#allocation2 + $0x130] sm:$0xff]
      %v1506 = vld [vmem:[#allocation2 + $0x138] sm:$0xff]
      %v1507 = vld [vmem:[#allocation2 + $0x140] sm:$0xff]
      %v1508 = vld [vmem:[#allocation2 + $0x148] sm:$0xff]
      %v1509 = vld [vmem:[#allocation2 + $0x150] sm:$0xff]
      %v1510 = vld [vmem:[#allocation2 + $0x158] sm:$0xff]
      %v1511 = vld [vmem:[#allocation2 + $0x160] sm:$0xff]
      %v1512 = vld [vmem:[#allocation2 + $0x168] sm:$0xff]
      %v1513 = vld [vmem:[#allocation2 + $0x170] sm:$0xff]
      %v1514 = vld [vmem:[#allocation2 + $0x178] sm:$0xff]
      %v1515 = vld [vmem:[#allocation2 + $0x180] sm:$0xff]
      %v1516 = vld [vmem:[#allocation2 + $0x188] sm:$0xff]
      %v1517 = vld [vmem:[#allocation2 + $0x190] sm:$0xff]
      %v1518 = vld [vmem:[#allocation2 + $0x198] sm:$0xff]
      %v1519 = vld [vmem:[#allocation2 + $0x1a0] sm:$0xff]
      %v1520 = vld [vmem:[#allocation2 + $0x1a8] sm:$0xff]
      %v1521 = vld [vmem:[#allocation2 + $0x1b0] sm:$0xff]
      %v1522 = vld [vmem:[#allocation2 + $0x1b8] sm:$0xff]
      %v1523 = vld [vmem:[#allocation2 + $0x1c0] sm:$0xff]
      %v1524 = vld [vmem:[#allocation2 + $0x1c8] sm:$0xff]
      %v1525 = vld [vmem:[#allocation2 + $0x1d0] sm:$0xff]
      %v1526 = vld [vmem:[#allocation2 + $0x1d8] sm:$0xff]
      %v1527 = vld [vmem:[#allocation2 + $0x1e0] sm:$0xff]
      %v1528 = vld [vmem:[#allocation2 + $0x1e8] sm:$0xff]
      %v1529 = vld [vmem:[#allocation2 + $0x1f0] sm:$0xff]
      %v1530 = vld [vmem:[#allocation2 + $0x1f8] sm:$0xff]
      %v1531 = vld [vmem:[#allocation2 + $0x200] sm:$0xff]
      %v1532 = vld [vmem:[#allocation2 + $0x208] sm:$0xff]
      %v1533 = vld [vmem:[#allocation2 + $0x210] sm:$0xff]
      %v1534 = vld [vmem:[#allocation2 + $0x218] sm:$0xff]
      %v1535 = vld [vmem:[#allocation2 + $0x220] sm:$0xff]
      %v1536 = vld [vmem:[#allocation2 + $0x228] sm:$0xff]
      %v1537 = vld [vmem:[#allocation2 + $0x230] sm:$0xff]
      %v1538 = vld [vmem:[#allocation2 + $0x238] sm:$0xff]
      %v1539 = vld [vmem:[#allocation2 + $0x240] sm:$0xff]
      %v1540 = vld [vmem:[#allocation2 + $0x248] sm:$0xff]
      %v1541 = vld [vmem:[#allocation2 + $0x250] sm:$0xff]
      %v1542 = vld [vmem:[#allocation2 + $0x258] sm:$0xff]
      %v1543 = vld [vmem:[#allocation2 + $0x260] sm:$0xff]
      %v1544 = vld [vmem:[#allocation2 + $0x268] sm:$0xff]
      %v1545 = vld [vmem:[#allocation2 + $0x270] sm:$0xff]
      %v1546 = vld [vmem:[#allocation2 + $0x278] sm:$0xff]
      %v1547 = vld [vmem:[#allocation2 + $0x280] sm:$0xff]
      %v1548 = vld [vmem:[#allocation2 + $0x288] sm:$0xff]
      %v1549 = vld [vmem:[#allocation2 + $0x290] sm:$0xff]
      %v1550 = vld [vmem:[#allocation2 + $0x298] sm:$0xff]
      %v1551 = vld [vmem:[#allocation2 + $0x2a0] sm:$0xff]
      %v1552 = vld [vmem:[#allocation2 + $0x2a8] sm:$0xff]
      %v1553 = vld [vmem:[#allocation2 + $0x2b0] sm:$0xff]
      %v1554 = vld [vmem:[#allocation2 + $0x2b8] sm:$0xff]
      %v1555 = vld [vmem:[#allocation2 + $0x2c0] sm:$0xff]
      %v1556 = vld [vmem:[#allocation2 + $0x2c8] sm:$0xff]
      %v1557 = vld [vmem:[#allocation2 + $0x2d0] sm:$0xff]
      %v1558 = vld [vmem:[#allocation2 + $0x2d8] sm:$0xff]
      %v1559 = vld [vmem:[#allocation2 + $0x2e0] sm:$0xff]
      %v1560 = vld [vmem:[#allocation2 + $0x2e8] sm:$0xff]
      %v1561 = vld [vmem:[#allocation2 + $0x2f0] sm:$0xff]
      %v1562 = vld [vmem:[#allocation2 + $0x2f8] sm:$0xff]
      %v1563 = vpack.c.bf16 %v1470, %v1467
      %v1564 = vpack.c.bf16 %v1471, %v1468
      %v1565 = vpack.c.bf16 %v1472, %v1469
      %v1566 = vpack.c.bf16 %v1476, %v1473
      %v1567 = vpack.c.bf16 %v1477, %v1474
      %v1568 = vpack.c.bf16 %v1478, %v1475
      %v1569 = vpack.c.bf16 %v1482, %v1479
      %v1570 = vpack.c.bf16 %v1483, %v1480
      %v1571 = vpack.c.bf16 %v1484, %v1481
      %v1572 = vpack.c.bf16 %v1488, %v1485
      %v1573 = vpack.c.bf16 %v1489, %v1486
      %v1574 = vpack.c.bf16 %v1490, %v1487
      %v1575 = vpack.c.bf16 %v1494, %v1491
      %v1576 = vpack.c.bf16 %v1495, %v1492
      %v1577 = vpack.c.bf16 %v1496, %v1493
      %v1578 = vpack.c.bf16 %v1500, %v1497
      %v1579 = vpack.c.bf16 %v1501, %v1498
      %v1580 = vpack.c.bf16 %v1502, %v1499
      %v1581 = vpack.c.bf16 %v1506, %v1503
      %v1582 = vpack.c.bf16 %v1507, %v1504
      %v1583 = vpack.c.bf16 %v1508, %v1505
      %v1584 = vpack.c.bf16 %v1512, %v1509
      %v1585 = vpack.c.bf16 %v1513, %v1510
      %v1586 = vpack.c.bf16 %v1514, %v1511
      %v1587 = vpack.c.bf16 %v1518, %v1515
      %v1588 = vpack.c.bf16 %v1519, %v1516
      %v1589 = vpack.c.bf16 %v1520, %v1517
      %v1590 = vpack.c.bf16 %v1524, %v1521
      %v1591 = vpack.c.bf16 %v1525, %v1522
      %v1592 = vpack.c.bf16 %v1526, %v1523
      %v1593 = vpack.c.bf16 %v1530, %v1527
      %v1594 = vpack.c.bf16 %v1531, %v1528
      %v1595 = vpack.c.bf16 %v1532, %v1529
      %v1596 = vpack.c.bf16 %v1536, %v1533
      %v1597 = vpack.c.bf16 %v1537, %v1534
      %v1598 = vpack.c.bf16 %v1538, %v1535
      %v1599 = vpack.c.bf16 %v1542, %v1539
      %v1600 = vpack.c.bf16 %v1543, %v1540
      %v1601 = vpack.c.bf16 %v1544, %v1541
      %v1602 = vpack.c.bf16 %v1548, %v1545
      %v1603 = vpack.c.bf16 %v1549, %v1546
      %v1604 = vpack.c.bf16 %v1550, %v1547
      %v1605 = vpack.c.bf16 %v1554, %v1551
      %v1606 = vpack.c.bf16 %v1555, %v1552
      %v1607 = vpack.c.bf16 %v1556, %v1553
      %v1608 = vpack.c.bf16 %v1560, %v1557
      %v1609 = vpack.c.bf16 %v1561, %v1558
      %v1610 = vpack.c.bf16 %v1562, %v1559
      %v1611 = vld [vmem:[%s3] sm:$0xf]
      %v1612 = vld [vmem:[%s3 + $0x4] sm:$0xf]
      %v1613 = vld [vmem:[%s3 + $0x8] sm:$0xf]
      %v1614 = vld [vmem:[%s3 + $0xc] sm:$0xf]
      %v1615 = vld [vmem:[%s3 + $0x10] sm:$0xf]
      %v1616 = vld [vmem:[%s3 + $0x14] sm:$0xf]
      %v1617 = vld [vmem:[%s3 + $0x18] sm:$0xf]
      %v1618 = vld [vmem:[%s3 + $0x1c] sm:$0xf]
      %v1619 = vld [vmem:[%s3 + $0x20] sm:$0xf]
      %v1620 = vld [vmem:[%s3 + $0x24] sm:$0xf]
      %v1621 = vld [vmem:[%s3 + $0x28] sm:$0xf]
      %v1622 = vld [vmem:[%s3 + $0x2c] sm:$0xf]
      %v1623 = vld [vmem:[%s3 + $0x30] sm:$0xf]
      %v1624 = vld [vmem:[%s3 + $0x34] sm:$0xf]
      %v1625 = vld [vmem:[%s3 + $0x38] sm:$0xf]
      %v1626 = vld [vmem:[%s3 + $0x3c] sm:$0xf]
      %v1627 = vld [vmem:[%s3 + $0x40] sm:$0xf]
      %v1628 = vld [vmem:[%s3 + $0x44] sm:$0xf]
      %v1629 = vld [vmem:[%s3 + $0x48] sm:$0xf]
      %v1630 = vld [vmem:[%s3 + $0x4c] sm:$0xf]
      %v1631 = vld [vmem:[%s3 + $0x50] sm:$0xf]
      %v1632 = vld [vmem:[%s3 + $0x54] sm:$0xf]
      %v1633 = vld [vmem:[%s3 + $0x58] sm:$0xf]
      %v1634 = vld [vmem:[%s3 + $0x5c] sm:$0xf]
      %v1635 = vld [vmem:[%s3 + $0x60] sm:$0xf]
      %v1636 = vld [vmem:[%s3 + $0x64] sm:$0xf]
      %v1637 = vld [vmem:[%s3 + $0x68] sm:$0xf]
      %v1638 = vld [vmem:[%s3 + $0x6c] sm:$0xf]
      %v1639 = vld [vmem:[%s3 + $0x70] sm:$0xf]
      %v1640 = vld [vmem:[%s3 + $0x74] sm:$0xf]
      %v1641 = vld [vmem:[%s3 + $0x78] sm:$0xf]
      %v1642 = vld [vmem:[%s3 + $0x7c] sm:$0xf]
      %v1643 = vld [vmem:[%s3 + $0x80] sm:$0xf]
      %v1644 = vld [vmem:[%s3 + $0x84] sm:$0xf]
      %v1645 = vld [vmem:[%s3 + $0x88] sm:$0xf]
      %v1646 = vld [vmem:[%s3 + $0x8c] sm:$0xf]
      %v1647 = vld [vmem:[%s3 + $0x90] sm:$0xf]
      %v1648 = vld [vmem:[%s3 + $0x94] sm:$0xf]
      %v1649 = vld [vmem:[%s3 + $0x98] sm:$0xf]
      %v1650 = vld [vmem:[%s3 + $0x9c] sm:$0xf]
      %v1651 = vld [vmem:[%s3 + $0xa0] sm:$0xf]
      %v1652 = vld [vmem:[%s3 + $0xa4] sm:$0xf]
      %v1653 = vld [vmem:[%s3 + $0xa8] sm:$0xf]
      %v1654 = vld [vmem:[%s3 + $0xac] sm:$0xf]
      %v1655 = vld [vmem:[%s3 + $0xb0] sm:$0xf]
      %v1656 = vld [vmem:[%s3 + $0xb4] sm:$0xf]
      %v1657 = vld [vmem:[%s3 + $0xb8] sm:$0xf]
      %v1658 = vld [vmem:[%s3 + $0xbc] sm:$0xf]
      %v1659 = vld [vmem:[#allocation2 + $0x300] sm:$0xff]
      %v1660 = vld [vmem:[#allocation2 + $0x308] sm:$0xff]
      %v1661 = vld [vmem:[#allocation2 + $0x310] sm:$0xff]
      %v1662 = vld [vmem:[#allocation2 + $0x318] sm:$0xff]
      %v1663 = vld [vmem:[#allocation2 + $0x320] sm:$0xff]
      %v1664 = vld [vmem:[#allocation2 + $0x328] sm:$0xff]
      %v1665 = vpack.c.bf16 %v1662, %v1659
      %v1666 = vpack.c.bf16 %v1663, %v1660
      %v1667 = vpack.c.bf16 %v1664, %v1661
      %s1668 = scalar_lea.vmem %s3, 192
      %v1669 = vld [vmem:[%s1668] sm:$0xf]
      %v1670 = vld [vmem:[%s1668 + $0x4] sm:$0xf]
      %v1671 = vld [vmem:[%s1668 + $0x8] sm:$0xf]
      %v1672 = vld [vmem:[%s1668 + $0xc] sm:$0xf]
      %v1673 = vld [vmem:[%s1668 + $0x10] sm:$0xf]
      %v1674 = vld [vmem:[%s1668 + $0x14] sm:$0xf]
      %v1675 = vld [vmem:[%s1668 + $0x18] sm:$0xf]
      %v1676 = vld [vmem:[%s1668 + $0x1c] sm:$0xf]
      %v1677 = vld [vmem:[%s1668 + $0x20] sm:$0xf]
      %v1678 = vld [vmem:[%s1668 + $0x24] sm:$0xf]
      %v1679 = vld [vmem:[%s1668 + $0x28] sm:$0xf]
      %v1680 = vld [vmem:[%s1668 + $0x2c] sm:$0xf]
      %v1681 = vld [vmem:[%s1668 + $0x30] sm:$0xf]
      %v1682 = vld [vmem:[%s1668 + $0x34] sm:$0xf]
      %v1683 = vld [vmem:[%s1668 + $0x38] sm:$0xf]
      %v1684 = vld [vmem:[%s1668 + $0x3c] sm:$0xf]
      %v1685 = vld [vmem:[%s1668 + $0x40] sm:$0xf]
      %v1686 = vld [vmem:[%s1668 + $0x44] sm:$0xf]
      %v1687 = vld [vmem:[%s1668 + $0x48] sm:$0xf]
      %v1688 = vld [vmem:[%s1668 + $0x4c] sm:$0xf]
      %v1689 = vld [vmem:[%s1668 + $0x50] sm:$0xf]
      %v1690 = vld [vmem:[%s1668 + $0x54] sm:$0xf]
      %v1691 = vld [vmem:[%s1668 + $0x58] sm:$0xf]
      %v1692 = vld [vmem:[%s1668 + $0x5c] sm:$0xf]
      %v1693 = vld [vmem:[%s1668 + $0x60] sm:$0xf]
      %v1694 = vld [vmem:[%s1668 + $0x64] sm:$0xf]
      %v1695 = vld [vmem:[%s1668 + $0x68] sm:$0xf]
      %v1696 = vld [vmem:[%s1668 + $0x6c] sm:$0xf]
      %v1697 = vld [vmem:[%s1668 + $0x70] sm:$0xf]
      %v1698 = vld [vmem:[%s1668 + $0x74] sm:$0xf]
      %v1699 = vld [vmem:[%s1668 + $0x78] sm:$0xf]
      %v1700 = vld [vmem:[%s1668 + $0x7c] sm:$0xf]
      %v1701 = vld [vmem:[%s1668 + $0x80] sm:$0xf]
      %v1702 = vld [vmem:[%s1668 + $0x84] sm:$0xf]
      %v1703 = vld [vmem:[%s1668 + $0x88] sm:$0xf]
      %v1704 = vld [vmem:[%s1668 + $0x8c] sm:$0xf]
      %v1705 = vld [vmem:[%s1668 + $0x90] sm:$0xf]
      %v1706 = vld [vmem:[%s1668 + $0x94] sm:$0xf]
      %v1707 = vld [vmem:[%s1668 + $0x98] sm:$0xf]
      %v1708 = vld [vmem:[%s1668 + $0x9c] sm:$0xf]
      %v1709 = vld [vmem:[%s1668 + $0xa0] sm:$0xf]
      %v1710 = vld [vmem:[%s1668 + $0xa4] sm:$0xf]
      %v1711 = vld [vmem:[%s1668 + $0xa8] sm:$0xf]
      %v1712 = vld [vmem:[%s1668 + $0xac] sm:$0xf]
      %v1713 = vld [vmem:[%s1668 + $0xb0] sm:$0xf]
      %v1714 = vld [vmem:[%s1668 + $0xb4] sm:$0xf]
      %v1715 = vld [vmem:[%s1668 + $0xb8] sm:$0xf]
      %v1716 = vld [vmem:[%s1668 + $0xbc] sm:$0xf]
      %v1765 = vunpack.c.l.b16 %v1669
      %v1766 = vunpack.c.l.b16 %v1670
      %v1767 = vunpack.c.l.b16 %v1671
      %v1768 = vunpack.c.l.b16 %v1672
      %v1769 = vunpack.c.l.b16 %v1673
      %v1770 = vunpack.c.l.b16 %v1674
      %v1771 = vunpack.c.l.b16 %v1675
      %v1772 = vunpack.c.l.b16 %v1676
      %v1773 = vunpack.c.l.b16 %v1677
      %v1774 = vunpack.c.l.b16 %v1678
      %v1775 = vunpack.c.l.b16 %v1679
      %v1776 = vunpack.c.l.b16 %v1680
      %v1777 = vunpack.c.l.b16 %v1681
      %v1778 = vunpack.c.l.b16 %v1682
      %v1779 = vunpack.c.l.b16 %v1683
      %v1780 = vunpack.c.l.b16 %v1684
      %v1781 = vunpack.c.l.b16 %v1685
      %v1782 = vunpack.c.l.b16 %v1686
      %v1783 = vunpack.c.l.b16 %v1687
      %v1784 = vunpack.c.l.b16 %v1688
      %v1785 = vunpack.c.l.b16 %v1689
      %v1786 = vunpack.c.l.b16 %v1690
      %v1787 = vunpack.c.l.b16 %v1691
      %v1788 = vunpack.c.l.b16 %v1692
      %v1789 = vunpack.c.l.b16 %v1693
      %v1790 = vunpack.c.l.b16 %v1694
      %v1791 = vunpack.c.l.b16 %v1695
      %v1792 = vunpack.c.l.b16 %v1696
      %v1793 = vunpack.c.l.b16 %v1697
      %v1794 = vunpack.c.l.b16 %v1698
      %v1795 = vunpack.c.l.b16 %v1699
      %v1796 = vunpack.c.l.b16 %v1700
      %v1797 = vunpack.c.l.b16 %v1701
      %v1798 = vunpack.c.l.b16 %v1702
      %v1799 = vunpack.c.l.b16 %v1703
      %v1800 = vunpack.c.l.b16 %v1704
      %v1801 = vunpack.c.l.b16 %v1705
      %v1802 = vunpack.c.l.b16 %v1706
      %v1803 = vunpack.c.l.b16 %v1707
      %v1804 = vunpack.c.l.b16 %v1708
      %v1805 = vunpack.c.l.b16 %v1709
      %v1806 = vunpack.c.l.b16 %v1710
      %v1807 = vunpack.c.l.b16 %v1711
      %v1808 = vunpack.c.l.b16 %v1712
      %v1809 = vunpack.c.l.b16 %v1713
      %v1810 = vunpack.c.l.b16 %v1714
      %v1811 = vunpack.c.l.b16 %v1715
      %v1812 = vunpack.c.l.b16 %v1716
      %v1813 = vpack.c.b16 %v1766, %v1765
      %v1814 = vpack.c.b16 %v1768, %v1767
      %v1815 = vpack.c.b16 %v1770, %v1769
      %v1816 = vpack.c.b16 %v1772, %v1771
      %v1817 = vpack.c.b16 %v1774, %v1773
      %v1818 = vpack.c.b16 %v1776, %v1775
      %v1819 = vpack.c.b16 %v1778, %v1777
      %v1820 = vpack.c.b16 %v1780, %v1779
      %v1821 = vpack.c.b16 %v1782, %v1781
      %v1822 = vpack.c.b16 %v1784, %v1783
      %v1823 = vpack.c.b16 %v1786, %v1785
      %v1824 = vpack.c.b16 %v1788, %v1787
      %v1825 = vpack.c.b16 %v1790, %v1789
      %v1826 = vpack.c.b16 %v1792, %v1791
      %v1827 = vpack.c.b16 %v1794, %v1793
      %v1828 = vpack.c.b16 %v1796, %v1795
      %v1829 = vpack.c.b16 %v1798, %v1797
      %v1830 = vpack.c.b16 %v1800, %v1799
      %v1831 = vpack.c.b16 %v1802, %v1801
      %v1832 = vpack.c.b16 %v1804, %v1803
      %v1833 = vpack.c.b16 %v1806, %v1805
      %v1834 = vpack.c.b16 %v1808, %v1807
      %v1835 = vpack.c.b16 %v1810, %v1809
      %v1836 = vpack.c.b16 %v1812, %v1811
      %1861 = vmatprep.subr.bf16.mxu0 0
      %1862 = vmatpush1.bf16.msra.mxu0 %v1820
      %1863 = vmatprep.subr.bf16.mxu0 0
      %1864 = vmatpush1.bf16.msra.mxu0 %v1819
      %1865 = vmatprep.subr.bf16.mxu0 0
      %1866 = vmatpush1.bf16.msra.mxu0 %v1818
      %1867 = vmatprep.subr.bf16.mxu0 0
      %1868 = vmatpush1.bf16.msra.mxu0 %v1817
      %1869 = vmatprep.subr.bf16.mxu0 0
      %1870 = vmatpush1.bf16.msra.mxu0 %v1816
      %1871 = vmatprep.subr.bf16.mxu0 0
      %1872 = vmatpush1.bf16.msra.mxu0 %v1815
      %1873 = vmatprep.subr.bf16.mxu0 0
      %1874 = vmatpush1.bf16.msra.mxu0 %v1814
      %1875 = vmatprep.subr.bf16.mxu0 0
      %1876 = vmatpush1.bf16.msra.mxu0 %v1813
      %1877 = vmatprep.subr.bf16.mxu0 0
      %1878 = vmatpush2.bf16.msra.mxu0 %v1828
      %1879 = vmatprep.subr.bf16.mxu0 0
      %1880 = vmatpush2.bf16.msra.mxu0 %v1827
      %1881 = vmatprep.subr.bf16.mxu0 0
      %1882 = vmatpush2.bf16.msra.mxu0 %v1826
      %1883 = vmatprep.subr.bf16.mxu0 0
      %1884 = vmatpush2.bf16.msra.mxu0 %v1825
      %1885 = vmatprep.subr.bf16.mxu0 0
      %1886 = vmatpush2.bf16.msra.mxu0 %v1824
      %1887 = vmatprep.subr.bf16.mxu0 0
      %1888 = vmatpush2.bf16.msra.mxu0 %v1823
      %1889 = vmatprep.subr.bf16.mxu0 0
      %1890 = vmatpush2.bf16.msra.mxu0 %v1822
      %1891 = vmatprep.subr.bf16.mxu0 0
      %1892 = vmatpush2.bf16.msra.mxu0 %v1821
      %1893 = vmatprep.mubr.bf16.mxu0 %v1567
      %1894 = vmatmul.mubr.bf16.gmra.mxu0 %v1566
      %v1895 = vpop.f32.mrf.mxu0
      %v1896 = vadd.f32 0.0, %v1895
      %v1897 = vpop.f32.mrf.mxu0
      %v1898 = vpop.f32.mrf.mxu0
      %v1899 = vadd.f32 0.0, %v1898
      %v1900 = vpop.f32.mrf.mxu0
      %1901 = vmatprep.mubr.bf16.mxu0 %v1570
      %1902 = vmatmul.mubr.bf16.gmra.mxu0 %v1569
      %v1903 = vpop.f32.mrf.mxu0
      %v1904 = vadd.f32 0.0, %v1903
      %v1905 = vpop.f32.mrf.mxu0
      %v1906 = vpop.f32.mrf.mxu0
      %v1907 = vadd.f32 0.0, %v1906
      %v1908 = vpop.f32.mrf.mxu0
      %1909 = vmatprep.mubr.bf16.mxu0 %v1573
      %1910 = vmatmul.mubr.bf16.gmra.mxu0 %v1572
      %v1911 = vpop.f32.mrf.mxu0
      %v1912 = vadd.f32 0.0, %v1911
      %v1913 = vpop.f32.mrf.mxu0
      %v1914 = vpop.f32.mrf.mxu0
      %v1915 = vadd.f32 0.0, %v1914
      %v1916 = vpop.f32.mrf.mxu0
      %1917 = vmatprep.mubr.bf16.mxu0 %v1576
      %1918 = vmatmul.mubr.bf16.gmra.mxu0 %v1575
      %v1919 = vpop.f32.mrf.mxu0
      %v1920 = vadd.f32 0.0, %v1919
      %v1921 = vpop.f32.mrf.mxu0
      %v1922 = vpop.f32.mrf.mxu0
      %v1923 = vadd.f32 0.0, %v1922
      %v1924 = vpop.f32.mrf.mxu0
      %1925 = vmatprep.mubr.bf16.mxu0 %v1579
      %1926 = vmatmul.mubr.bf16.gmra.mxu0 %v1578
      %v1927 = vpop.f32.mrf.mxu0
      %v1928 = vadd.f32 0.0, %v1927
      %v1929 = vpop.f32.mrf.mxu0
      %v1930 = vpop.f32.mrf.mxu0
      %v1931 = vadd.f32 0.0, %v1930
      %v1932 = vpop.f32.mrf.mxu0
      %1933 = vmatprep.mubr.bf16.mxu0 %v1582
      %1934 = vmatmul.mubr.bf16.gmra.mxu0 %v1581
      %v1935 = vpop.f32.mrf.mxu0
      %v1936 = vadd.f32 0.0, %v1935
      %v1937 = vpop.f32.mrf.mxu0
      %v1938 = vpop.f32.mrf.mxu0
      %v1939 = vadd.f32 0.0, %v1938
      %v1940 = vpop.f32.mrf.mxu0
      %1941 = vmatprep.mubr.bf16.mxu0 %v1585
      %1942 = vmatmul.mubr.bf16.gmra.mxu0 %v1584
      %v1943 = vpop.f32.mrf.mxu0
      %v1944 = vadd.f32 0.0, %v1943
      %v1945 = vpop.f32.mrf.mxu0
      %v1946 = vpop.f32.mrf.mxu0
      %v1947 = vadd.f32 0.0, %v1946
      %v1948 = vpop.f32.mrf.mxu0
      %1949 = vmatprep.mubr.bf16.mxu0 %v1588
      %1950 = vmatmul.mubr.bf16.gmra.mxu0 %v1587
      %v1951 = vpop.f32.mrf.mxu0
      %v1952 = vadd.f32 0.0, %v1951
      %v1953 = vpop.f32.mrf.mxu0
      %v1954 = vpop.f32.mrf.mxu0
      %v1955 = vadd.f32 0.0, %v1954
      %v1956 = vpop.f32.mrf.mxu0
      %1957 = vmatprep.mubr.bf16.mxu0 %v1591
      %1958 = vmatmul.mubr.bf16.gmra.mxu0 %v1590
      %v1959 = vpop.f32.mrf.mxu0
      %v1960 = vadd.f32 0.0, %v1959
      %v1961 = vpop.f32.mrf.mxu0
      %v1962 = vpop.f32.mrf.mxu0
      %v1963 = vadd.f32 0.0, %v1962
      %v1964 = vpop.f32.mrf.mxu0
      %1965 = vmatprep.mubr.bf16.mxu0 %v1594
      %1966 = vmatmul.mubr.bf16.gmra.mxu0 %v1593
      %v1967 = vpop.f32.mrf.mxu0
      %v1968 = vadd.f32 0.0, %v1967
      %v1969 = vpop.f32.mrf.mxu0
      %v1970 = vpop.f32.mrf.mxu0
      %v1971 = vadd.f32 0.0, %v1970
      %v1972 = vpop.f32.mrf.mxu0
      %1973 = vmatprep.mubr.bf16.mxu0 %v1597
      %1974 = vmatmul.mubr.bf16.gmra.mxu0 %v1596
      %v1975 = vpop.f32.mrf.mxu0
      %v1976 = vadd.f32 0.0, %v1975
      %v1977 = vpop.f32.mrf.mxu0
      %v1978 = vpop.f32.mrf.mxu0
      %v1979 = vadd.f32 0.0, %v1978
      %v1980 = vpop.f32.mrf.mxu0
      %1981 = vmatprep.mubr.bf16.mxu0 %v1600
      %1982 = vmatmul.mubr.bf16.gmra.mxu0 %v1599
      %v1983 = vpop.f32.mrf.mxu0
      %v1984 = vadd.f32 0.0, %v1983
      %v1985 = vpop.f32.mrf.mxu0
      %v1986 = vpop.f32.mrf.mxu0
      %v1987 = vadd.f32 0.0, %v1986
      %v1988 = vpop.f32.mrf.mxu0
      %1989 = vmatprep.mubr.bf16.mxu0 %v1603
      %1990 = vmatmul.mubr.bf16.gmra.mxu0 %v1602
      %v1991 = vpop.f32.mrf.mxu0
      %v1992 = vadd.f32 0.0, %v1991
      %v1993 = vpop.f32.mrf.mxu0
      %v1994 = vpop.f32.mrf.mxu0
      %v1995 = vadd.f32 0.0, %v1994
      %v1996 = vpop.f32.mrf.mxu0
      %1997 = vmatprep.mubr.bf16.mxu0 %v1606
      %1998 = vmatmul.mubr.bf16.gmra.mxu0 %v1605
      %v1999 = vpop.f32.mrf.mxu0
      %v2000 = vadd.f32 0.0, %v1999
      %v2001 = vpop.f32.mrf.mxu0
      %v2002 = vpop.f32.mrf.mxu0
      %v2003 = vadd.f32 0.0, %v2002
      %v2004 = vpop.f32.mrf.mxu0
      %2005 = vmatprep.mubr.bf16.mxu0 %v1609
      %2006 = vmatmul.mubr.bf16.gmra.mxu0 %v1608
      %v2007 = vpop.f32.mrf.mxu0
      %v2008 = vadd.f32 0.0, %v2007
      %v2009 = vpop.f32.mrf.mxu0
      %v2010 = vpop.f32.mrf.mxu0
      %v2011 = vadd.f32 0.0, %v2010
      %v2012 = vpop.f32.mrf.mxu0
      %2013 = vmatprep.mubr.bf16.mxu0 %v1666
      %2014 = vmatmul.mubr.bf16.gmra.mxu0 %v1665
      %v2015 = vpop.f32.mrf.mxu0
      %v2016 = vadd.f32 0.0, %v2015
      %v2017 = vpop.f32.mrf.mxu0
      %v2018 = vpop.f32.mrf.mxu0
      %v2019 = vadd.f32 0.0, %v2018
      %v2020 = vpop.f32.mrf.mxu0
      %2021 = vdwg.mxu0
      %2022 = vmatprep.subr.bf16.mxu0 0
      %2023 = vmatpush1.bf16.msra.mxu0 %v1836
      %2024 = vmatprep.subr.bf16.mxu0 0
      %2025 = vmatpush1.bf16.msra.mxu0 %v1835
      %2026 = vmatprep.subr.bf16.mxu0 0
      %2027 = vmatpush1.bf16.msra.mxu0 %v1834
      %2028 = vmatprep.subr.bf16.mxu0 0
      %2029 = vmatpush1.bf16.msra.mxu0 %v1833
      %2030 = vmatprep.subr.bf16.mxu0 0
      %2031 = vmatpush1.bf16.msra.mxu0 %v1832
      %2032 = vmatprep.subr.bf16.mxu0 0
      %2033 = vmatpush1.bf16.msra.mxu0 %v1831
      %2034 = vmatprep.subr.bf16.mxu0 0
      %2035 = vmatpush1.bf16.msra.mxu0 %v1830
      %2036 = vmatprep.subr.bf16.mxu0 0
      %2037 = vmatpush1.bf16.msra.mxu0 %v1829
      %2038 = vmatprep.subr.bf16.mxu0 0
      %2039 = vmatpush2.bf16.msra.mxu0 0
      %2040 = vmatprep.subr.bf16.mxu0 0
      %2041 = vmatpush2.bf16.msra.mxu0 0
      %2042 = vmatprep.subr.bf16.mxu0 0
      %2043 = vmatpush2.bf16.msra.mxu0 0
      %2044 = vmatprep.subr.bf16.mxu0 0
      %2045 = vmatpush2.bf16.msra.mxu0 0
      %2046 = vmatprep.subr.bf16.mxu0 0
      %2047 = vmatpush2.bf16.msra.mxu0 0
      %2048 = vmatprep.subr.bf16.mxu0 0
      %2049 = vmatpush2.bf16.msra.mxu0 0
      %2050 = vmatprep.subr.bf16.mxu0 0
      %2051 = vmatpush2.bf16.msra.mxu0 0
      %2052 = vmatprep.subr.bf16.mxu0 0
      %2053 = vmatpush2.bf16.msra.mxu0 0
      %2054 = vmatprep.mubr.bf16.mxu0 0
      %2055 = vmatmul.mubr.bf16.gmra.mxu0 %v1568
      %v2056 = vpop.f32.mrf.mxu0
      %v2057 = vadd.f32 %v1896, %v2056
      %v2058 = vpop.f32.mrf.mxu0
      %v2059 = vpop.f32.mrf.mxu0
      %v2060 = vadd.f32 %v1899, %v2059
      %v2061 = vpop.f32.mrf.mxu0
      %2062 = vmatprep.mubr.bf16.mxu0 0
      %2063 = vmatmul.mubr.bf16.gmra.mxu0 %v1571
      %v2064 = vpop.f32.mrf.mxu0
      %v2065 = vadd.f32 %v1904, %v2064
      %v2066 = vpop.f32.mrf.mxu0
      %v2067 = vpop.f32.mrf.mxu0
      %v2068 = vadd.f32 %v1907, %v2067
      %v2069 = vpop.f32.mrf.mxu0
      %2070 = vmatprep.mubr.bf16.mxu0 0
      %2071 = vmatmul.mubr.bf16.gmra.mxu0 %v1574
      %v2072 = vpop.f32.mrf.mxu0
      %v2073 = vadd.f32 %v1912, %v2072
      %v2074 = vpop.f32.mrf.mxu0
      %v2075 = vpop.f32.mrf.mxu0
      %v2076 = vadd.f32 %v1915, %v2075
      %v2077 = vpop.f32.mrf.mxu0
      %2078 = vmatprep.mubr.bf16.mxu0 0
      %2079 = vmatmul.mubr.bf16.gmra.mxu0 %v1577
      %v2080 = vpop.f32.mrf.mxu0
      %v2081 = vadd.f32 %v1920, %v2080
      %v2082 = vpop.f32.mrf.mxu0
      %v2083 = vpop.f32.mrf.mxu0
      %v2084 = vadd.f32 %v1923, %v2083
      %v2085 = vpop.f32.mrf.mxu0
      %2086 = vmatprep.mubr.bf16.mxu0 0
      %2087 = vmatmul.mubr.bf16.gmra.mxu0 %v1580
      %v2088 = vpop.f32.mrf.mxu0
      %v2089 = vadd.f32 %v1928, %v2088
      %v2090 = vpop.f32.mrf.mxu0
      %v2091 = vpop.f32.mrf.mxu0
      %v2092 = vadd.f32 %v1931, %v2091
      %v2093 = vpop.f32.mrf.mxu0
      %2094 = vmatprep.mubr.bf16.mxu0 0
      %2095 = vmatmul.mubr.bf16.gmra.mxu0 %v1583
      %v2096 = vpop.f32.mrf.mxu0
      %v2097 = vadd.f32 %v1936, %v2096
      %v2098 = vpop.f32.mrf.mxu0
      %v2099 = vpop.f32.mrf.mxu0
      %v2100 = vadd.f32 %v1939, %v2099
      %v2101 = vpop.f32.mrf.mxu0
      %2102 = vmatprep.mubr.bf16.mxu0 0
      %2103 = vmatmul.mubr.bf16.gmra.mxu0 %v1586
      %v2104 = vpop.f32.mrf.mxu0
      %v2105 = vadd.f32 %v1944, %v2104
      %v2106 = vpop.f32.mrf.mxu0
      %v2107 = vpop.f32.mrf.mxu0
      %v2108 = vadd.f32 %v1947, %v2107
      %v2109 = vpop.f32.mrf.mxu0
      %2110 = vmatprep.mubr.bf16.mxu0 0
      %2111 = vmatmul.mubr.bf16.gmra.mxu0 %v1589
      %v2112 = vpop.f32.mrf.mxu0
      %v2113 = vadd.f32 %v1952, %v2112
      %v2114 = vpop.f32.mrf.mxu0
      %v2115 = vpop.f32.mrf.mxu0
      %v2116 = vadd.f32 %v1955, %v2115
      %v2117 = vpop.f32.mrf.mxu0
      %2118 = vmatprep.mubr.bf16.mxu0 0
      %2119 = vmatmul.mubr.bf16.gmra.mxu0 %v1592
      %v2120 = vpop.f32.mrf.mxu0
      %v2121 = vadd.f32 %v1960, %v2120
      %v2122 = vpop.f32.mrf.mxu0
      %v2123 = vpop.f32.mrf.mxu0
      %v2124 = vadd.f32 %v1963, %v2123
      %v2125 = vpop.f32.mrf.mxu0
      %2126 = vmatprep.mubr.bf16.mxu0 0
      %2127 = vmatmul.mubr.bf16.gmra.mxu0 %v1595
      %v2128 = vpop.f32.mrf.mxu0
      %v2129 = vadd.f32 %v1968, %v2128
      %v2130 = vpop.f32.mrf.mxu0
      %v2131 = vpop.f32.mrf.mxu0
      %v2132 = vadd.f32 %v1971, %v2131
      %v2133 = vpop.f32.mrf.mxu0
      %2134 = vmatprep.mubr.bf16.mxu0 0
      %2135 = vmatmul.mubr.bf16.gmra.mxu0 %v1598
      %v2136 = vpop.f32.mrf.mxu0
      %v2137 = vadd.f32 %v1976, %v2136
      %v2138 = vpop.f32.mrf.mxu0
      %v2139 = vpop.f32.mrf.mxu0
      %v2140 = vadd.f32 %v1979, %v2139
      %v2141 = vpop.f32.mrf.mxu0
      %2142 = vmatprep.mubr.bf16.mxu0 0
      %2143 = vmatmul.mubr.bf16.gmra.mxu0 %v1601
      %v2144 = vpop.f32.mrf.mxu0
      %v2145 = vadd.f32 %v1984, %v2144
      %v2146 = vpop.f32.mrf.mxu0
      %v2147 = vpop.f32.mrf.mxu0
      %v2148 = vadd.f32 %v1987, %v2147
      %v2149 = vpop.f32.mrf.mxu0
      %2150 = vmatprep.mubr.bf16.mxu0 0
      %2151 = vmatmul.mubr.bf16.gmra.mxu0 %v1604
      %v2152 = vpop.f32.mrf.mxu0
      %v2153 = vadd.f32 %v1992, %v2152
      %v2154 = vpop.f32.mrf.mxu0
      %v2155 = vpop.f32.mrf.mxu0
      %v2156 = vadd.f32 %v1995, %v2155
      %v2157 = vpop.f32.mrf.mxu0
      %2158 = vmatprep.mubr.bf16.mxu0 0
      %2159 = vmatmul.mubr.bf16.gmra.mxu0 %v1607
      %v2160 = vpop.f32.mrf.mxu0
      %v2161 = vadd.f32 %v2000, %v2160
      %v2162 = vpop.f32.mrf.mxu0
      %v2163 = vpop.f32.mrf.mxu0
      %v2164 = vadd.f32 %v2003, %v2163
      %v2165 = vpop.f32.mrf.mxu0
      %2166 = vmatprep.mubr.bf16.mxu0 0
      %2167 = vmatmul.mubr.bf16.gmra.mxu0 %v1610
      %v2168 = vpop.f32.mrf.mxu0
      %v2169 = vadd.f32 %v2008, %v2168
      %v2170 = vpop.f32.mrf.mxu0
      %v2171 = vpop.f32.mrf.mxu0
      %v2172 = vadd.f32 %v2011, %v2171
      %v2173 = vpop.f32.mrf.mxu0
      %2174 = vmatprep.mubr.bf16.mxu0 0
      %2175 = vmatmul.mubr.bf16.gmra.mxu0 %v1667
      %v2176 = vpop.f32.mrf.mxu0
      %v2177 = vadd.f32 %v2016, %v2176
      %v2178 = vpop.f32.mrf.mxu0
      %v2179 = vpop.f32.mrf.mxu0
      %v2180 = vadd.f32 %v2019, %v2179
      %v2181 = vpop.f32.mrf.mxu0
      %2182 = vdwg.mxu0
      %v2231 = vunpack.c.l.b16 %v1611
      %v2232 = vunpack.c.l.b16 %v1612
      %v2233 = vunpack.c.l.b16 %v1613
      %v2234 = vunpack.c.l.b16 %v1614
      %v2235 = vunpack.c.l.b16 %v1615
      %v2236 = vunpack.c.l.b16 %v1616
      %v2237 = vunpack.c.l.b16 %v1617
      %v2238 = vunpack.c.l.b16 %v1618
      %v2239 = vunpack.c.l.b16 %v1619
      %v2240 = vunpack.c.l.b16 %v1620
      %v2241 = vunpack.c.l.b16 %v1621
      %v2242 = vunpack.c.l.b16 %v1622
      %v2243 = vunpack.c.l.b16 %v1623
      %v2244 = vunpack.c.l.b16 %v1624
      %v2245 = vunpack.c.l.b16 %v1625
      %v2246 = vunpack.c.l.b16 %v1626
      %v2247 = vunpack.c.l.b16 %v1627
      %v2248 = vunpack.c.l.b16 %v1628
      %v2249 = vunpack.c.l.b16 %v1629
      %v2250 = vunpack.c.l.b16 %v1630
      %v2251 = vunpack.c.l.b16 %v1631
      %v2252 = vunpack.c.l.b16 %v1632
      %v2253 = vunpack.c.l.b16 %v1633
      %v2254 = vunpack.c.l.b16 %v1634
      %v2255 = vunpack.c.l.b16 %v1635
      %v2256 = vunpack.c.l.b16 %v1636
      %v2257 = vunpack.c.l.b16 %v1637
      %v2258 = vunpack.c.l.b16 %v1638
      %v2259 = vunpack.c.l.b16 %v1639
      %v2260 = vunpack.c.l.b16 %v1640
      %v2261 = vunpack.c.l.b16 %v1641
      %v2262 = vunpack.c.l.b16 %v1642
      %v2263 = vunpack.c.l.b16 %v1643
      %v2264 = vunpack.c.l.b16 %v1644
      %v2265 = vunpack.c.l.b16 %v1645
      %v2266 = vunpack.c.l.b16 %v1646
      %v2267 = vunpack.c.l.b16 %v1647
      %v2268 = vunpack.c.l.b16 %v1648
      %v2269 = vunpack.c.l.b16 %v1649
      %v2270 = vunpack.c.l.b16 %v1650
      %v2271 = vunpack.c.l.b16 %v1651
      %v2272 = vunpack.c.l.b16 %v1652
      %v2273 = vunpack.c.l.b16 %v1653
      %v2274 = vunpack.c.l.b16 %v1654
      %v2275 = vunpack.c.l.b16 %v1655
      %v2276 = vunpack.c.l.b16 %v1656
      %v2277 = vunpack.c.l.b16 %v1657
      %v2278 = vunpack.c.l.b16 %v1658
      %v2279 = vpack.c.b16 %v2232, %v2231
      %v2280 = vpack.c.b16 %v2234, %v2233
      %v2281 = vpack.c.b16 %v2236, %v2235
      %v2282 = vpack.c.b16 %v2238, %v2237
      %v2283 = vpack.c.b16 %v2240, %v2239
      %v2284 = vpack.c.b16 %v2242, %v2241
      %v2285 = vpack.c.b16 %v2244, %v2243
      %v2286 = vpack.c.b16 %v2246, %v2245
      %v2287 = vpack.c.b16 %v2248, %v2247
      %v2288 = vpack.c.b16 %v2250, %v2249
      %v2289 = vpack.c.b16 %v2252, %v2251
      %v2290 = vpack.c.b16 %v2254, %v2253
      %v2291 = vpack.c.b16 %v2256, %v2255
      %v2292 = vpack.c.b16 %v2258, %v2257
      %v2293 = vpack.c.b16 %v2260, %v2259
      %v2294 = vpack.c.b16 %v2262, %v2261
      %v2295 = vpack.c.b16 %v2264, %v2263
      %v2296 = vpack.c.b16 %v2266, %v2265
      %v2297 = vpack.c.b16 %v2268, %v2267
      %v2298 = vpack.c.b16 %v2270, %v2269
      %v2299 = vpack.c.b16 %v2272, %v2271
      %v2300 = vpack.c.b16 %v2274, %v2273
      %v2301 = vpack.c.b16 %v2276, %v2275
      %v2302 = vpack.c.b16 %v2278, %v2277
      %2327 = vmatprep.subr.bf16.mxu0 0
      %2328 = vmatpush1.bf16.msra.mxu0 %v2286
      %2329 = vmatprep.subr.bf16.mxu0 0
      %2330 = vmatpush1.bf16.msra.mxu0 %v2285
      %2331 = vmatprep.subr.bf16.mxu0 0
      %2332 = vmatpush1.bf16.msra.mxu0 %v2284
      %2333 = vmatprep.subr.bf16.mxu0 0
      %2334 = vmatpush1.bf16.msra.mxu0 %v2283
      %2335 = vmatprep.subr.bf16.mxu0 0
      %2336 = vmatpush1.bf16.msra.mxu0 %v2282
      %2337 = vmatprep.subr.bf16.mxu0 0
      %2338 = vmatpush1.bf16.msra.mxu0 %v2281
      %2339 = vmatprep.subr.bf16.mxu0 0
      %2340 = vmatpush1.bf16.msra.mxu0 %v2280
      %2341 = vmatprep.subr.bf16.mxu0 0
      %2342 = vmatpush1.bf16.msra.mxu0 %v2279
      %2343 = vmatprep.subr.bf16.mxu0 0
      %2344 = vmatpush2.bf16.msra.mxu0 %v2294
      %2345 = vmatprep.subr.bf16.mxu0 0
      %2346 = vmatpush2.bf16.msra.mxu0 %v2293
      %2347 = vmatprep.subr.bf16.mxu0 0
      %2348 = vmatpush2.bf16.msra.mxu0 %v2292
      %2349 = vmatprep.subr.bf16.mxu0 0
      %2350 = vmatpush2.bf16.msra.mxu0 %v2291
      %2351 = vmatprep.subr.bf16.mxu0 0
      %2352 = vmatpush2.bf16.msra.mxu0 %v2290
      %2353 = vmatprep.subr.bf16.mxu0 0
      %2354 = vmatpush2.bf16.msra.mxu0 %v2289
      %2355 = vmatprep.subr.bf16.mxu0 0
      %2356 = vmatpush2.bf16.msra.mxu0 %v2288
      %2357 = vmatprep.subr.bf16.mxu0 0
      %2358 = vmatpush2.bf16.msra.mxu0 %v2287
      %2359 = vmatprep.mubr.bf16.mxu0 %v1564
      %2360 = vmatmul.mubr.bf16.gmra.mxu0 %v1563
      %v2361 = vpop.f32.mrf.mxu0
      %v2362 = vadd.f32 %v2057, %v2361
      %v2363 = vpop.f32.mrf.mxu0
      %v2364 = vpop.f32.mrf.mxu0
      %v2365 = vadd.f32 %v2060, %v2364
      %v2366 = vpop.f32.mrf.mxu0
      %2367 = vmatprep.mubr.bf16.mxu0 %v1567
      %2368 = vmatmul.mubr.bf16.gmra.mxu0 %v1566
      %v2369 = vpop.f32.mrf.mxu0
      %v2370 = vadd.f32 %v2065, %v2369
      %v2371 = vpop.f32.mrf.mxu0
      %v2372 = vpop.f32.mrf.mxu0
      %v2373 = vadd.f32 %v2068, %v2372
      %v2374 = vpop.f32.mrf.mxu0
      %2375 = vmatprep.mubr.bf16.mxu0 %v1570
      %2376 = vmatmul.mubr.bf16.gmra.mxu0 %v1569
      %v2377 = vpop.f32.mrf.mxu0
      %v2378 = vadd.f32 %v2073, %v2377
      %v2379 = vpop.f32.mrf.mxu0
      %v2380 = vpop.f32.mrf.mxu0
      %v2381 = vadd.f32 %v2076, %v2380
      %v2382 = vpop.f32.mrf.mxu0
      %2383 = vmatprep.mubr.bf16.mxu0 %v1573
      %2384 = vmatmul.mubr.bf16.gmra.mxu0 %v1572
      %v2385 = vpop.f32.mrf.mxu0
      %v2386 = vadd.f32 %v2081, %v2385
      %v2387 = vpop.f32.mrf.mxu0
      %v2388 = vpop.f32.mrf.mxu0
      %v2389 = vadd.f32 %v2084, %v2388
      %v2390 = vpop.f32.mrf.mxu0
      %2391 = vmatprep.mubr.bf16.mxu0 %v1576
      %2392 = vmatmul.mubr.bf16.gmra.mxu0 %v1575
      %v2393 = vpop.f32.mrf.mxu0
      %v2394 = vadd.f32 %v2089, %v2393
      %v2395 = vpop.f32.mrf.mxu0
      %v2396 = vpop.f32.mrf.mxu0
      %v2397 = vadd.f32 %v2092, %v2396
      %v2398 = vpop.f32.mrf.mxu0
      %2399 = vmatprep.mubr.bf16.mxu0 %v1579
      %2400 = vmatmul.mubr.bf16.gmra.mxu0 %v1578
      %v2401 = vpop.f32.mrf.mxu0
      %v2402 = vadd.f32 %v2097, %v2401
      %v2403 = vpop.f32.mrf.mxu0
      %v2404 = vpop.f32.mrf.mxu0
      %v2405 = vadd.f32 %v2100, %v2404
      %v2406 = vpop.f32.mrf.mxu0
      %2407 = vmatprep.mubr.bf16.mxu0 %v1582
      %2408 = vmatmul.mubr.bf16.gmra.mxu0 %v1581
      %v2409 = vpop.f32.mrf.mxu0
      %v2410 = vadd.f32 %v2105, %v2409
      %v2411 = vpop.f32.mrf.mxu0
      %v2412 = vpop.f32.mrf.mxu0
      %v2413 = vadd.f32 %v2108, %v2412
      %v2414 = vpop.f32.mrf.mxu0
      %2415 = vmatprep.mubr.bf16.mxu0 %v1585
      %2416 = vmatmul.mubr.bf16.gmra.mxu0 %v1584
      %v2417 = vpop.f32.mrf.mxu0
      %v2418 = vadd.f32 %v2113, %v2417
      %v2419 = vpop.f32.mrf.mxu0
      %v2420 = vpop.f32.mrf.mxu0
      %v2421 = vadd.f32 %v2116, %v2420
      %v2422 = vpop.f32.mrf.mxu0
      %2423 = vmatprep.mubr.bf16.mxu0 %v1588
      %2424 = vmatmul.mubr.bf16.gmra.mxu0 %v1587
      %v2425 = vpop.f32.mrf.mxu0
      %v2426 = vadd.f32 %v2121, %v2425
      %v2427 = vpop.f32.mrf.mxu0
      %v2428 = vpop.f32.mrf.mxu0
      %v2429 = vadd.f32 %v2124, %v2428
      %v2430 = vpop.f32.mrf.mxu0
      %2431 = vmatprep.mubr.bf16.mxu0 %v1591
      %2432 = vmatmul.mubr.bf16.gmra.mxu0 %v1590
      %v2433 = vpop.f32.mrf.mxu0
      %v2434 = vadd.f32 %v2129, %v2433
      %v2435 = vpop.f32.mrf.mxu0
      %v2436 = vpop.f32.mrf.mxu0
      %v2437 = vadd.f32 %v2132, %v2436
      %v2438 = vpop.f32.mrf.mxu0
      %2439 = vmatprep.mubr.bf16.mxu0 %v1594
      %2440 = vmatmul.mubr.bf16.gmra.mxu0 %v1593
      %v2441 = vpop.f32.mrf.mxu0
      %v2442 = vadd.f32 %v2137, %v2441
      %v2443 = vpop.f32.mrf.mxu0
      %v2444 = vpop.f32.mrf.mxu0
      %v2445 = vadd.f32 %v2140, %v2444
      %v2446 = vpop.f32.mrf.mxu0
      %2447 = vmatprep.mubr.bf16.mxu0 %v1597
      %2448 = vmatmul.mubr.bf16.gmra.mxu0 %v1596
      %v2449 = vpop.f32.mrf.mxu0
      %v2450 = vadd.f32 %v2145, %v2449
      %v2451 = vpop.f32.mrf.mxu0
      %v2452 = vpop.f32.mrf.mxu0
      %v2453 = vadd.f32 %v2148, %v2452
      %v2454 = vpop.f32.mrf.mxu0
      %2455 = vmatprep.mubr.bf16.mxu0 %v1600
      %2456 = vmatmul.mubr.bf16.gmra.mxu0 %v1599
      %v2457 = vpop.f32.mrf.mxu0
      %v2458 = vadd.f32 %v2153, %v2457
      %v2459 = vpop.f32.mrf.mxu0
      %v2460 = vpop.f32.mrf.mxu0
      %v2461 = vadd.f32 %v2156, %v2460
      %v2462 = vpop.f32.mrf.mxu0
      %2463 = vmatprep.mubr.bf16.mxu0 %v1603
      %2464 = vmatmul.mubr.bf16.gmra.mxu0 %v1602
      %v2465 = vpop.f32.mrf.mxu0
      %v2466 = vadd.f32 %v2161, %v2465
      %v2467 = vpop.f32.mrf.mxu0
      %v2468 = vpop.f32.mrf.mxu0
      %v2469 = vadd.f32 %v2164, %v2468
      %v2470 = vpop.f32.mrf.mxu0
      %2471 = vmatprep.mubr.bf16.mxu0 %v1606
      %2472 = vmatmul.mubr.bf16.gmra.mxu0 %v1605
      %v2473 = vpop.f32.mrf.mxu0
      %v2474 = vadd.f32 %v2169, %v2473
      %v2475 = vpop.f32.mrf.mxu0
      %v2476 = vpop.f32.mrf.mxu0
      %v2477 = vadd.f32 %v2172, %v2476
      %v2478 = vpop.f32.mrf.mxu0
      %2479 = vmatprep.mubr.bf16.mxu0 %v1609
      %2480 = vmatmul.mubr.bf16.gmra.mxu0 %v1608
      %v2481 = vpop.f32.mrf.mxu0
      %v2482 = vadd.f32 %v2177, %v2481
      %v2483 = vpop.f32.mrf.mxu0
      %v2484 = vpop.f32.mrf.mxu0
      %v2485 = vadd.f32 %v2180, %v2484
      %v2486 = vpop.f32.mrf.mxu0
      %2487 = vdwg.mxu0
      %2488 = vmatprep.subr.bf16.mxu0 0
      %2489 = vmatpush1.bf16.msra.mxu0 %v2302
      %2490 = vmatprep.subr.bf16.mxu0 0
      %2491 = vmatpush1.bf16.msra.mxu0 %v2301
      %2492 = vmatprep.subr.bf16.mxu0 0
      %2493 = vmatpush1.bf16.msra.mxu0 %v2300
      %2494 = vmatprep.subr.bf16.mxu0 0
      %2495 = vmatpush1.bf16.msra.mxu0 %v2299
      %2496 = vmatprep.subr.bf16.mxu0 0
      %2497 = vmatpush1.bf16.msra.mxu0 %v2298
      %2498 = vmatprep.subr.bf16.mxu0 0
      %2499 = vmatpush1.bf16.msra.mxu0 %v2297
      %2500 = vmatprep.subr.bf16.mxu0 0
      %2501 = vmatpush1.bf16.msra.mxu0 %v2296
      %2502 = vmatprep.subr.bf16.mxu0 0
      %2503 = vmatpush1.bf16.msra.mxu0 %v2295
      %2504 = vmatprep.subr.bf16.mxu0 0
      %2505 = vmatpush2.bf16.msra.mxu0 0
      %2506 = vmatprep.subr.bf16.mxu0 0
      %2507 = vmatpush2.bf16.msra.mxu0 0
      %2508 = vmatprep.subr.bf16.mxu0 0
      %2509 = vmatpush2.bf16.msra.mxu0 0
      %2510 = vmatprep.subr.bf16.mxu0 0
      %2511 = vmatpush2.bf16.msra.mxu0 0
      %2512 = vmatprep.subr.bf16.mxu0 0
      %2513 = vmatpush2.bf16.msra.mxu0 0
      %2514 = vmatprep.subr.bf16.mxu0 0
      %2515 = vmatpush2.bf16.msra.mxu0 0
      %2516 = vmatprep.subr.bf16.mxu0 0
      %2517 = vmatpush2.bf16.msra.mxu0 0
      %2518 = vmatprep.subr.bf16.mxu0 0
      %2519 = vmatpush2.bf16.msra.mxu0 0
      %2520 = vmatprep.mubr.bf16.mxu0 0
      %2521 = vmatmul.mubr.bf16.gmra.mxu0 %v1565
      %v2522 = vpop.f32.mrf.mxu0
      %v2523 = vadd.f32 %v2362, %v2522
      %v2524 = vpop.f32.mrf.mxu0
      %v2525 = vpop.f32.mrf.mxu0
      %v2526 = vadd.f32 %v2365, %v2525
      %v2527 = vpop.f32.mrf.mxu0
      %2528 = vmatprep.mubr.bf16.mxu0 0
      %2529 = vmatmul.mubr.bf16.gmra.mxu0 %v1568
      %v2530 = vpop.f32.mrf.mxu0
      %v2531 = vadd.f32 %v2370, %v2530
      %v2532 = vpop.f32.mrf.mxu0
      %v2533 = vpop.f32.mrf.mxu0
      %v2534 = vadd.f32 %v2373, %v2533
      %v2535 = vpop.f32.mrf.mxu0
      %2536 = vmatprep.mubr.bf16.mxu0 0
      %2537 = vmatmul.mubr.bf16.gmra.mxu0 %v1571
      %v2538 = vpop.f32.mrf.mxu0
      %v2539 = vadd.f32 %v2378, %v2538
      %v2540 = vpop.f32.mrf.mxu0
      %v2541 = vpop.f32.mrf.mxu0
      %v2542 = vadd.f32 %v2381, %v2541
      %v2543 = vpop.f32.mrf.mxu0
      %2544 = vmatprep.mubr.bf16.mxu0 0
      %2545 = vmatmul.mubr.bf16.gmra.mxu0 %v1574
      %v2546 = vpop.f32.mrf.mxu0
      %v2547 = vadd.f32 %v2386, %v2546
      %v2548 = vpop.f32.mrf.mxu0
      %v2549 = vpop.f32.mrf.mxu0
      %v2550 = vadd.f32 %v2389, %v2549
      %v2551 = vpop.f32.mrf.mxu0
      %2552 = vmatprep.mubr.bf16.mxu0 0
      %2553 = vmatmul.mubr.bf16.gmra.mxu0 %v1577
      %v2554 = vpop.f32.mrf.mxu0
      %v2555 = vadd.f32 %v2394, %v2554
      %v2556 = vpop.f32.mrf.mxu0
      %v2557 = vpop.f32.mrf.mxu0
      %v2558 = vadd.f32 %v2397, %v2557
      %v2559 = vpop.f32.mrf.mxu0
      %2560 = vmatprep.mubr.bf16.mxu0 0
      %2561 = vmatmul.mubr.bf16.gmra.mxu0 %v1580
      %v2562 = vpop.f32.mrf.mxu0
      %v2563 = vadd.f32 %v2402, %v2562
      %v2564 = vpop.f32.mrf.mxu0
      %v2565 = vpop.f32.mrf.mxu0
      %v2566 = vadd.f32 %v2405, %v2565
      %v2567 = vpop.f32.mrf.mxu0
      %2568 = vmatprep.mubr.bf16.mxu0 0
      %2569 = vmatmul.mubr.bf16.gmra.mxu0 %v1583
      %v2570 = vpop.f32.mrf.mxu0
      %v2571 = vadd.f32 %v2410, %v2570
      %v2572 = vpop.f32.mrf.mxu0
      %v2573 = vpop.f32.mrf.mxu0
      %v2574 = vadd.f32 %v2413, %v2573
      %v2575 = vpop.f32.mrf.mxu0
      %2576 = vmatprep.mubr.bf16.mxu0 0
      %2577 = vmatmul.mubr.bf16.gmra.mxu0 %v1586
      %v2578 = vpop.f32.mrf.mxu0
      %v2579 = vadd.f32 %v2418, %v2578
      %v2580 = vpop.f32.mrf.mxu0
      %v2581 = vpop.f32.mrf.mxu0
      %v2582 = vadd.f32 %v2421, %v2581
      %v2583 = vpop.f32.mrf.mxu0
      %2584 = vmatprep.mubr.bf16.mxu0 0
      %2585 = vmatmul.mubr.bf16.gmra.mxu0 %v1589
      %v2586 = vpop.f32.mrf.mxu0
      %v2587 = vadd.f32 %v2426, %v2586
      %v2588 = vpop.f32.mrf.mxu0
      %v2589 = vpop.f32.mrf.mxu0
      %v2590 = vadd.f32 %v2429, %v2589
      %v2591 = vpop.f32.mrf.mxu0
      %2592 = vmatprep.mubr.bf16.mxu0 0
      %2593 = vmatmul.mubr.bf16.gmra.mxu0 %v1592
      %v2594 = vpop.f32.mrf.mxu0
      %v2595 = vadd.f32 %v2434, %v2594
      %v2596 = vpop.f32.mrf.mxu0
      %v2597 = vpop.f32.mrf.mxu0
      %v2598 = vadd.f32 %v2437, %v2597
      %v2599 = vpop.f32.mrf.mxu0
      %2600 = vmatprep.mubr.bf16.mxu0 0
      %2601 = vmatmul.mubr.bf16.gmra.mxu0 %v1595
      %v2602 = vpop.f32.mrf.mxu0
      %v2603 = vadd.f32 %v2442, %v2602
      %v2604 = vpop.f32.mrf.mxu0
      %v2605 = vpop.f32.mrf.mxu0
      %v2606 = vadd.f32 %v2445, %v2605
      %v2607 = vpop.f32.mrf.mxu0
      %2608 = vmatprep.mubr.bf16.mxu0 0
      %2609 = vmatmul.mubr.bf16.gmra.mxu0 %v1598
      %v2610 = vpop.f32.mrf.mxu0
      %v2611 = vadd.f32 %v2450, %v2610
      %v2612 = vpop.f32.mrf.mxu0
      %v2613 = vpop.f32.mrf.mxu0
      %v2614 = vadd.f32 %v2453, %v2613
      %v2615 = vpop.f32.mrf.mxu0
      %2616 = vmatprep.mubr.bf16.mxu0 0
      %2617 = vmatmul.mubr.bf16.gmra.mxu0 %v1601
      %v2618 = vpop.f32.mrf.mxu0
      %v2619 = vadd.f32 %v2458, %v2618
      %v2620 = vpop.f32.mrf.mxu0
      %v2621 = vpop.f32.mrf.mxu0
      %v2622 = vadd.f32 %v2461, %v2621
      %v2623 = vpop.f32.mrf.mxu0
      %2624 = vmatprep.mubr.bf16.mxu0 0
      %2625 = vmatmul.mubr.bf16.gmra.mxu0 %v1604
      %v2626 = vpop.f32.mrf.mxu0
      %v2627 = vadd.f32 %v2466, %v2626
      %v2628 = vpop.f32.mrf.mxu0
      %v2629 = vpop.f32.mrf.mxu0
      %v2630 = vadd.f32 %v2469, %v2629
      %v2631 = vpop.f32.mrf.mxu0
      %2632 = vmatprep.mubr.bf16.mxu0 0
      %2633 = vmatmul.mubr.bf16.gmra.mxu0 %v1607
      %v2634 = vpop.f32.mrf.mxu0
      %v2635 = vadd.f32 %v2474, %v2634
      %v2636 = vpop.f32.mrf.mxu0
      %v2637 = vpop.f32.mrf.mxu0
      %v2638 = vadd.f32 %v2477, %v2637
      %v2639 = vpop.f32.mrf.mxu0
      %2640 = vmatprep.mubr.bf16.mxu0 0
      %2641 = vmatmul.mubr.bf16.gmra.mxu0 %v1610
      %v2642 = vpop.f32.mrf.mxu0
      %v2643 = vadd.f32 %v2482, %v2642
      %v2644 = vpop.f32.mrf.mxu0
      %v2645 = vpop.f32.mrf.mxu0
      %v2646 = vadd.f32 %v2485, %v2645
      %v2647 = vpop.f32.mrf.mxu0
      %2648 = vdwg.mxu0
      %v2649 = vld [vmem:[#allocation2 + $0x60] sm:$0xff]
      %v2650 = vld [vmem:[#allocation2 + $0x68] sm:$0xff]
      %v2651 = vld [vmem:[#allocation2 + $0x70] sm:$0xff]
      %v2652 = vld [vmem:[#allocation2 + $0x78] sm:$0xff]
      %v2653 = vld [vmem:[#allocation2 + $0x80] sm:$0xff]
      %v2654 = vld [vmem:[#allocation2 + $0x88] sm:$0xff]
      %v2655 = vld [vmem:[#allocation2 + $0x90] sm:$0xff]
      %v2656 = vld [vmem:[#allocation2 + $0x98] sm:$0xff]
      %v2657 = vld [vmem:[#allocation2 + $0xa0] sm:$0xff]
      %v2658 = vld [vmem:[#allocation2 + $0xa8] sm:$0xff]
      %v2659 = vld [vmem:[#allocation2 + $0xb0] sm:$0xff]
      %v2660 = vld [vmem:[#allocation2 + $0xb8] sm:$0xff]
      %v2661 = vld [vmem:[#allocation2 + $0xc0] sm:$0xff]
      %v2662 = vld [vmem:[#allocation2 + $0xc8] sm:$0xff]
      %v2663 = vld [vmem:[#allocation2 + $0xd0] sm:$0xff]
      %v2664 = vld [vmem:[#allocation2 + $0xd8] sm:$0xff]
      %v2665 = vld [vmem:[#allocation2 + $0xe0] sm:$0xff]
      %v2666 = vld [vmem:[#allocation2 + $0xe8] sm:$0xff]
      %v2667 = vld [vmem:[#allocation2 + $0xf0] sm:$0xff]
      %v2668 = vld [vmem:[#allocation2 + $0xf8] sm:$0xff]
      %v2669 = vld [vmem:[#allocation2 + $0x100] sm:$0xff]
      %v2670 = vld [vmem:[#allocation2 + $0x108] sm:$0xff]
      %v2671 = vld [vmem:[#allocation2 + $0x110] sm:$0xff]
      %v2672 = vld [vmem:[#allocation2 + $0x118] sm:$0xff]
      %v2673 = vld [vmem:[#allocation2 + $0x120] sm:$0xff]
      %v2674 = vld [vmem:[#allocation2 + $0x128] sm:$0xff]
      %v2675 = vld [vmem:[#allocation2 + $0x130] sm:$0xff]
      %v2676 = vld [vmem:[#allocation2 + $0x138] sm:$0xff]
      %v2677 = vld [vmem:[#allocation2 + $0x140] sm:$0xff]
      %v2678 = vld [vmem:[#allocation2 + $0x148] sm:$0xff]
      %v2679 = vld [vmem:[#allocation2 + $0x150] sm:$0xff]
      %v2680 = vld [vmem:[#allocation2 + $0x158] sm:$0xff]
      %v2681 = vld [vmem:[#allocation2 + $0x160] sm:$0xff]
      %v2682 = vld [vmem:[#allocation2 + $0x168] sm:$0xff]
      %v2683 = vld [vmem:[#allocation2 + $0x170] sm:$0xff]
      %v2684 = vld [vmem:[#allocation2 + $0x178] sm:$0xff]
      %v2685 = vld [vmem:[#allocation2 + $0x180] sm:$0xff]
      %v2686 = vld [vmem:[#allocation2 + $0x188] sm:$0xff]
      %v2687 = vld [vmem:[#allocation2 + $0x190] sm:$0xff]
      %v2688 = vld [vmem:[#allocation2 + $0x198] sm:$0xff]
      %v2689 = vld [vmem:[#allocation2 + $0x1a0] sm:$0xff]
      %v2690 = vld [vmem:[#allocation2 + $0x1a8] sm:$0xff]
      %v2691 = vld [vmem:[#allocation2 + $0x1b0] sm:$0xff]
      %v2692 = vld [vmem:[#allocation2 + $0x1b8] sm:$0xff]
      %v2693 = vld [vmem:[#allocation2 + $0x1c0] sm:$0xff]
      %v2694 = vld [vmem:[#allocation2 + $0x1c8] sm:$0xff]
      %v2695 = vld [vmem:[#allocation2 + $0x1d0] sm:$0xff]
      %v2696 = vld [vmem:[#allocation2 + $0x1d8] sm:$0xff]
      %v2697 = vld [vmem:[#allocation2 + $0x1e0] sm:$0xff]
      %v2698 = vld [vmem:[#allocation2 + $0x1e8] sm:$0xff]
      %v2699 = vld [vmem:[#allocation2 + $0x1f0] sm:$0xff]
      %v2700 = vld [vmem:[#allocation2 + $0x1f8] sm:$0xff]
      %v2701 = vld [vmem:[#allocation2 + $0x200] sm:$0xff]
      %v2702 = vld [vmem:[#allocation2 + $0x208] sm:$0xff]
      %v2703 = vld [vmem:[#allocation2 + $0x210] sm:$0xff]
      %v2704 = vld [vmem:[#allocation2 + $0x218] sm:$0xff]
      %v2705 = vld [vmem:[#allocation2 + $0x220] sm:$0xff]
      %v2706 = vld [vmem:[#allocation2 + $0x228] sm:$0xff]
      %v2707 = vld [vmem:[#allocation2 + $0x230] sm:$0xff]
      %v2708 = vld [vmem:[#allocation2 + $0x238] sm:$0xff]
      %v2709 = vld [vmem:[#allocation2 + $0x240] sm:$0xff]
      %v2710 = vld [vmem:[#allocation2 + $0x248] sm:$0xff]
      %v2711 = vld [vmem:[#allocation2 + $0x250] sm:$0xff]
      %v2712 = vld [vmem:[#allocation2 + $0x258] sm:$0xff]
      %v2713 = vld [vmem:[#allocation2 + $0x260] sm:$0xff]
      %v2714 = vld [vmem:[#allocation2 + $0x268] sm:$0xff]
      %v2715 = vld [vmem:[#allocation2 + $0x270] sm:$0xff]
      %v2716 = vld [vmem:[#allocation2 + $0x278] sm:$0xff]
      %v2717 = vld [vmem:[#allocation2 + $0x280] sm:$0xff]
      %v2718 = vld [vmem:[#allocation2 + $0x288] sm:$0xff]
      %v2719 = vld [vmem:[#allocation2 + $0x290] sm:$0xff]
      %v2720 = vld [vmem:[#allocation2 + $0x298] sm:$0xff]
      %v2721 = vld [vmem:[#allocation2 + $0x2a0] sm:$0xff]
      %v2722 = vld [vmem:[#allocation2 + $0x2a8] sm:$0xff]
      %v2723 = vld [vmem:[#allocation2 + $0x2b0] sm:$0xff]
      %v2724 = vld [vmem:[#allocation2 + $0x2b8] sm:$0xff]
      %v2725 = vld [vmem:[#allocation2 + $0x2c0] sm:$0xff]
      %v2726 = vld [vmem:[#allocation2 + $0x2c8] sm:$0xff]
      %v2727 = vld [vmem:[#allocation2 + $0x2d0] sm:$0xff]
      %v2728 = vld [vmem:[#allocation2 + $0x2d8] sm:$0xff]
      %v2729 = vld [vmem:[#allocation2 + $0x2e0] sm:$0xff]
      %v2730 = vld [vmem:[#allocation2 + $0x2e8] sm:$0xff]
      %v2731 = vld [vmem:[#allocation2 + $0x2f0] sm:$0xff]
      %v2732 = vld [vmem:[#allocation2 + $0x2f8] sm:$0xff]
      %v2733 = vld [vmem:[#allocation2 + $0x300] sm:$0xff]
      %v2734 = vld [vmem:[#allocation2 + $0x308] sm:$0xff]
      %v2735 = vld [vmem:[#allocation2 + $0x310] sm:$0xff]
      %v2736 = vld [vmem:[#allocation2 + $0x318] sm:$0xff]
      %v2737 = vld [vmem:[#allocation2 + $0x320] sm:$0xff]
      %v2738 = vld [vmem:[#allocation2 + $0x328] sm:$0xff]
      %v2739 = vld [vmem:[#allocation2 + $0x330] sm:$0xff]
      %v2740 = vld [vmem:[#allocation2 + $0x338] sm:$0xff]
      %v2741 = vld [vmem:[#allocation2 + $0x340] sm:$0xff]
      %v2742 = vld [vmem:[#allocation2 + $0x348] sm:$0xff]
      %v2743 = vld [vmem:[#allocation2 + $0x350] sm:$0xff]
      %v2744 = vld [vmem:[#allocation2 + $0x358] sm:$0xff]
      %v2745 = vpack.c.bf16 %v2652, %v2649
      %v2746 = vpack.c.bf16 %v2653, %v2650
      %v2747 = vpack.c.bf16 %v2654, %v2651
      %v2748 = vpack.c.bf16 %v2658, %v2655
      %v2749 = vpack.c.bf16 %v2659, %v2656
      %v2750 = vpack.c.bf16 %v2660, %v2657
      %v2751 = vpack.c.bf16 %v2664, %v2661
      %v2752 = vpack.c.bf16 %v2665, %v2662
      %v2753 = vpack.c.bf16 %v2666, %v2663
      %v2754 = vpack.c.bf16 %v2670, %v2667
      %v2755 = vpack.c.bf16 %v2671, %v2668
      %v2756 = vpack.c.bf16 %v2672, %v2669
      %v2757 = vpack.c.bf16 %v2676, %v2673
      %v2758 = vpack.c.bf16 %v2677, %v2674
      %v2759 = vpack.c.bf16 %v2678, %v2675
      %v2760 = vpack.c.bf16 %v2682, %v2679
      %v2761 = vpack.c.bf16 %v2683, %v2680
      %v2762 = vpack.c.bf16 %v2684, %v2681
      %v2763 = vpack.c.bf16 %v2688, %v2685
      %v2764 = vpack.c.bf16 %v2689, %v2686
      %v2765 = vpack.c.bf16 %v2690, %v2687
      %v2766 = vpack.c.bf16 %v2694, %v2691
      %v2767 = vpack.c.bf16 %v2695, %v2692
      %v2768 = vpack.c.bf16 %v2696, %v2693
      %v2769 = vpack.c.bf16 %v2700, %v2697
      %v2770 = vpack.c.bf16 %v2701, %v2698
      %v2771 = vpack.c.bf16 %v2702, %v2699
      %v2772 = vpack.c.bf16 %v2706, %v2703
      %v2773 = vpack.c.bf16 %v2707, %v2704
      %v2774 = vpack.c.bf16 %v2708, %v2705
      %v2775 = vpack.c.bf16 %v2712, %v2709
      %v2776 = vpack.c.bf16 %v2713, %v2710
      %v2777 = vpack.c.bf16 %v2714, %v2711
      %v2778 = vpack.c.bf16 %v2718, %v2715
      %v2779 = vpack.c.bf16 %v2719, %v2716
      %v2780 = vpack.c.bf16 %v2720, %v2717
      %v2781 = vpack.c.bf16 %v2724, %v2721
      %v2782 = vpack.c.bf16 %v2725, %v2722
      %v2783 = vpack.c.bf16 %v2726, %v2723
      %v2784 = vpack.c.bf16 %v2730, %v2727
      %v2785 = vpack.c.bf16 %v2731, %v2728
      %v2786 = vpack.c.bf16 %v2732, %v2729
      %v2787 = vpack.c.bf16 %v2736, %v2733
      %v2788 = vpack.c.bf16 %v2737, %v2734
      %v2789 = vpack.c.bf16 %v2738, %v2735
      %v2790 = vpack.c.bf16 %v2742, %v2739
      %v2791 = vpack.c.bf16 %v2743, %v2740
      %v2792 = vpack.c.bf16 %v2744, %v2741
      %s2793 = scalar_lea.vmem %s3, 384
      %v2794 = vld [vmem:[%s2793] sm:$0xf]
      %v2795 = vld [vmem:[%s2793 + $0x4] sm:$0xf]
      %v2796 = vld [vmem:[%s2793 + $0x8] sm:$0xf]
      %v2797 = vld [vmem:[%s2793 + $0xc] sm:$0xf]
      %v2798 = vld [vmem:[%s2793 + $0x10] sm:$0xf]
      %v2799 = vld [vmem:[%s2793 + $0x14] sm:$0xf]
      %v2800 = vld [vmem:[%s2793 + $0x18] sm:$0xf]
      %v2801 = vld [vmem:[%s2793 + $0x1c] sm:$0xf]
      %v2802 = vld [vmem:[%s2793 + $0x20] sm:$0xf]
      %v2803 = vld [vmem:[%s2793 + $0x24] sm:$0xf]
      %v2804 = vld [vmem:[%s2793 + $0x28] sm:$0xf]
      %v2805 = vld [vmem:[%s2793 + $0x2c] sm:$0xf]
      %v2806 = vld [vmem:[%s2793 + $0x30] sm:$0xf]
      %v2807 = vld [vmem:[%s2793 + $0x34] sm:$0xf]
      %v2808 = vld [vmem:[%s2793 + $0x38] sm:$0xf]
      %v2809 = vld [vmem:[%s2793 + $0x3c] sm:$0xf]
      %v2810 = vld [vmem:[%s2793 + $0x40] sm:$0xf]
      %v2811 = vld [vmem:[%s2793 + $0x44] sm:$0xf]
      %v2812 = vld [vmem:[%s2793 + $0x48] sm:$0xf]
      %v2813 = vld [vmem:[%s2793 + $0x4c] sm:$0xf]
      %v2814 = vld [vmem:[%s2793 + $0x50] sm:$0xf]
      %v2815 = vld [vmem:[%s2793 + $0x54] sm:$0xf]
      %v2816 = vld [vmem:[%s2793 + $0x58] sm:$0xf]
      %v2817 = vld [vmem:[%s2793 + $0x5c] sm:$0xf]
      %v2818 = vld [vmem:[%s2793 + $0x60] sm:$0xf]
      %v2819 = vld [vmem:[%s2793 + $0x64] sm:$0xf]
      %v2820 = vld [vmem:[%s2793 + $0x68] sm:$0xf]
      %v2821 = vld [vmem:[%s2793 + $0x6c] sm:$0xf]
      %v2822 = vld [vmem:[%s2793 + $0x70] sm:$0xf]
      %v2823 = vld [vmem:[%s2793 + $0x74] sm:$0xf]
      %v2824 = vld [vmem:[%s2793 + $0x78] sm:$0xf]
      %v2825 = vld [vmem:[%s2793 + $0x7c] sm:$0xf]
      %v2826 = vld [vmem:[%s2793 + $0x80] sm:$0xf]
      %v2827 = vld [vmem:[%s2793 + $0x84] sm:$0xf]
      %v2828 = vld [vmem:[%s2793 + $0x88] sm:$0xf]
      %v2829 = vld [vmem:[%s2793 + $0x8c] sm:$0xf]
      %v2830 = vld [vmem:[%s2793 + $0x90] sm:$0xf]
      %v2831 = vld [vmem:[%s2793 + $0x94] sm:$0xf]
      %v2832 = vld [vmem:[%s2793 + $0x98] sm:$0xf]
      %v2833 = vld [vmem:[%s2793 + $0x9c] sm:$0xf]
      %v2834 = vld [vmem:[%s2793 + $0xa0] sm:$0xf]
      %v2835 = vld [vmem:[%s2793 + $0xa4] sm:$0xf]
      %v2836 = vld [vmem:[%s2793 + $0xa8] sm:$0xf]
      %v2837 = vld [vmem:[%s2793 + $0xac] sm:$0xf]
      %v2838 = vld [vmem:[%s2793 + $0xb0] sm:$0xf]
      %v2839 = vld [vmem:[%s2793 + $0xb4] sm:$0xf]
      %v2840 = vld [vmem:[%s2793 + $0xb8] sm:$0xf]
      %v2841 = vld [vmem:[%s2793 + $0xbc] sm:$0xf]
      %v2890 = vunpack.c.l.b16 %v2794
      %v2891 = vunpack.c.l.b16 %v2795
      %v2892 = vunpack.c.l.b16 %v2796
      %v2893 = vunpack.c.l.b16 %v2797
      %v2894 = vunpack.c.l.b16 %v2798
      %v2895 = vunpack.c.l.b16 %v2799
      %v2896 = vunpack.c.l.b16 %v2800
      %v2897 = vunpack.c.l.b16 %v2801
      %v2898 = vunpack.c.l.b16 %v2802
      %v2899 = vunpack.c.l.b16 %v2803
      %v2900 = vunpack.c.l.b16 %v2804
      %v2901 = vunpack.c.l.b16 %v2805
      %v2902 = vunpack.c.l.b16 %v2806
      %v2903 = vunpack.c.l.b16 %v2807
      %v2904 = vunpack.c.l.b16 %v2808
      %v2905 = vunpack.c.l.b16 %v2809
      %v2906 = vunpack.c.l.b16 %v2810
      %v2907 = vunpack.c.l.b16 %v2811
      %v2908 = vunpack.c.l.b16 %v2812
      %v2909 = vunpack.c.l.b16 %v2813
      %v2910 = vunpack.c.l.b16 %v2814
      %v2911 = vunpack.c.l.b16 %v2815
      %v2912 = vunpack.c.l.b16 %v2816
      %v2913 = vunpack.c.l.b16 %v2817
      %v2914 = vunpack.c.l.b16 %v2818
      %v2915 = vunpack.c.l.b16 %v2819
      %v2916 = vunpack.c.l.b16 %v2820
      %v2917 = vunpack.c.l.b16 %v2821
      %v2918 = vunpack.c.l.b16 %v2822
      %v2919 = vunpack.c.l.b16 %v2823
      %v2920 = vunpack.c.l.b16 %v2824
      %v2921 = vunpack.c.l.b16 %v2825
      %v2922 = vunpack.c.l.b16 %v2826
      %v2923 = vunpack.c.l.b16 %v2827
      %v2924 = vunpack.c.l.b16 %v2828
      %v2925 = vunpack.c.l.b16 %v2829
      %v2926 = vunpack.c.l.b16 %v2830
      %v2927 = vunpack.c.l.b16 %v2831
      %v2928 = vunpack.c.l.b16 %v2832
      %v2929 = vunpack.c.l.b16 %v2833
      %v2930 = vunpack.c.l.b16 %v2834
      %v2931 = vunpack.c.l.b16 %v2835
      %v2932 = vunpack.c.l.b16 %v2836
      %v2933 = vunpack.c.l.b16 %v2837
      %v2934 = vunpack.c.l.b16 %v2838
      %v2935 = vunpack.c.l.b16 %v2839
      %v2936 = vunpack.c.l.b16 %v2840
      %v2937 = vunpack.c.l.b16 %v2841
      %v2938 = vpack.c.b16 %v2891, %v2890
      %v2939 = vpack.c.b16 %v2893, %v2892
      %v2940 = vpack.c.b16 %v2895, %v2894
      %v2941 = vpack.c.b16 %v2897, %v2896
      %v2942 = vpack.c.b16 %v2899, %v2898
      %v2943 = vpack.c.b16 %v2901, %v2900
      %v2944 = vpack.c.b16 %v2903, %v2902
      %v2945 = vpack.c.b16 %v2905, %v2904
      %v2946 = vpack.c.b16 %v2907, %v2906
      %v2947 = vpack.c.b16 %v2909, %v2908
      %v2948 = vpack.c.b16 %v2911, %v2910
      %v2949 = vpack.c.b16 %v2913, %v2912
      %v2950 = vpack.c.b16 %v2915, %v2914
      %v2951 = vpack.c.b16 %v2917, %v2916
      %v2952 = vpack.c.b16 %v2919, %v2918
      %v2953 = vpack.c.b16 %v2921, %v2920
      %v2954 = vpack.c.b16 %v2923, %v2922
      %v2955 = vpack.c.b16 %v2925, %v2924
      %v2956 = vpack.c.b16 %v2927, %v2926
      %v2957 = vpack.c.b16 %v2929, %v2928
      %v2958 = vpack.c.b16 %v2931, %v2930
      %v2959 = vpack.c.b16 %v2933, %v2932
      %v2960 = vpack.c.b16 %v2935, %v2934
      %v2961 = vpack.c.b16 %v2937, %v2936
      %2986 = vmatprep.subr.bf16.mxu0 0
      %2987 = vmatpush1.bf16.msra.mxu0 %v2945
      %2988 = vmatprep.subr.bf16.mxu0 0
      %2989 = vmatpush1.bf16.msra.mxu0 %v2944
      %2990 = vmatprep.subr.bf16.mxu0 0
      %2991 = vmatpush1.bf16.msra.mxu0 %v2943
      %2992 = vmatprep.subr.bf16.mxu0 0
      %2993 = vmatpush1.bf16.msra.mxu0 %v2942
      %2994 = vmatprep.subr.bf16.mxu0 0
      %2995 = vmatpush1.bf16.msra.mxu0 %v2941
      %2996 = vmatprep.subr.bf16.mxu0 0
      %2997 = vmatpush1.bf16.msra.mxu0 %v2940
      %2998 = vmatprep.subr.bf16.mxu0 0
      %2999 = vmatpush1.bf16.msra.mxu0 %v2939
      %3000 = vmatprep.subr.bf16.mxu0 0
      %3001 = vmatpush1.bf16.msra.mxu0 %v2938
      %3002 = vmatprep.subr.bf16.mxu0 0
      %3003 = vmatpush2.bf16.msra.mxu0 %v2953
      %3004 = vmatprep.subr.bf16.mxu0 0
      %3005 = vmatpush2.bf16.msra.mxu0 %v2952
      %3006 = vmatprep.subr.bf16.mxu0 0
      %3007 = vmatpush2.bf16.msra.mxu0 %v2951
      %3008 = vmatprep.subr.bf16.mxu0 0
      %3009 = vmatpush2.bf16.msra.mxu0 %v2950
      %3010 = vmatprep.subr.bf16.mxu0 0
      %3011 = vmatpush2.bf16.msra.mxu0 %v2949
      %3012 = vmatprep.subr.bf16.mxu0 0
      %3013 = vmatpush2.bf16.msra.mxu0 %v2948
      %3014 = vmatprep.subr.bf16.mxu0 0
      %3015 = vmatpush2.bf16.msra.mxu0 %v2947
      %3016 = vmatprep.subr.bf16.mxu0 0
      %3017 = vmatpush2.bf16.msra.mxu0 %v2946
      %3018 = vmatprep.mubr.bf16.mxu0 %v2746
      %3019 = vmatmul.mubr.bf16.gmra.mxu0 %v2745
      %v3020 = vpop.f32.mrf.mxu0
      %v3021 = vadd.f32 0.0, %v3020
      %v3022 = vpop.f32.mrf.mxu0
      %v3023 = vpop.f32.mrf.mxu0
      %v3024 = vadd.f32 0.0, %v3023
      %v3025 = vpop.f32.mrf.mxu0
      %3026 = vmatprep.mubr.bf16.mxu0 %v2749
      %3027 = vmatmul.mubr.bf16.gmra.mxu0 %v2748
      %v3028 = vpop.f32.mrf.mxu0
      %v3029 = vadd.f32 0.0, %v3028
      %v3030 = vpop.f32.mrf.mxu0
      %v3031 = vpop.f32.mrf.mxu0
      %v3032 = vadd.f32 0.0, %v3031
      %v3033 = vpop.f32.mrf.mxu0
      %3034 = vmatprep.mubr.bf16.mxu0 %v2752
      %3035 = vmatmul.mubr.bf16.gmra.mxu0 %v2751
      %v3036 = vpop.f32.mrf.mxu0
      %v3037 = vadd.f32 0.0, %v3036
      %v3038 = vpop.f32.mrf.mxu0
      %v3039 = vpop.f32.mrf.mxu0
      %v3040 = vadd.f32 0.0, %v3039
      %v3041 = vpop.f32.mrf.mxu0
      %3042 = vmatprep.mubr.bf16.mxu0 %v2755
      %3043 = vmatmul.mubr.bf16.gmra.mxu0 %v2754
      %v3044 = vpop.f32.mrf.mxu0
      %v3045 = vadd.f32 0.0, %v3044
      %v3046 = vpop.f32.mrf.mxu0
      %v3047 = vpop.f32.mrf.mxu0
      %v3048 = vadd.f32 0.0, %v3047
      %v3049 = vpop.f32.mrf.mxu0
      %3050 = vmatprep.mubr.bf16.mxu0 %v2758
      %3051 = vmatmul.mubr.bf16.gmra.mxu0 %v2757
      %v3052 = vpop.f32.mrf.mxu0
      %v3053 = vadd.f32 0.0, %v3052
      %v3054 = vpop.f32.mrf.mxu0
      %v3055 = vpop.f32.mrf.mxu0
      %v3056 = vadd.f32 0.0, %v3055
      %v3057 = vpop.f32.mrf.mxu0
      %3058 = vmatprep.mubr.bf16.mxu0 %v2761
      %3059 = vmatmul.mubr.bf16.gmra.mxu0 %v2760
      %v3060 = vpop.f32.mrf.mxu0
      %v3061 = vadd.f32 0.0, %v3060
      %v3062 = vpop.f32.mrf.mxu0
      %v3063 = vpop.f32.mrf.mxu0
      %v3064 = vadd.f32 0.0, %v3063
      %v3065 = vpop.f32.mrf.mxu0
      %3066 = vmatprep.mubr.bf16.mxu0 %v2764
      %3067 = vmatmul.mubr.bf16.gmra.mxu0 %v2763
      %v3068 = vpop.f32.mrf.mxu0
      %v3069 = vadd.f32 0.0, %v3068
      %v3070 = vpop.f32.mrf.mxu0
      %v3071 = vpop.f32.mrf.mxu0
      %v3072 = vadd.f32 0.0, %v3071
      %v3073 = vpop.f32.mrf.mxu0
      %3074 = vmatprep.mubr.bf16.mxu0 %v2767
      %3075 = vmatmul.mubr.bf16.gmra.mxu0 %v2766
      %v3076 = vpop.f32.mrf.mxu0
      %v3077 = vadd.f32 0.0, %v3076
      %v3078 = vpop.f32.mrf.mxu0
      %v3079 = vpop.f32.mrf.mxu0
      %v3080 = vadd.f32 0.0, %v3079
      %v3081 = vpop.f32.mrf.mxu0
      %3082 = vmatprep.mubr.bf16.mxu0 %v2770
      %3083 = vmatmul.mubr.bf16.gmra.mxu0 %v2769
      %v3084 = vpop.f32.mrf.mxu0
      %v3085 = vadd.f32 0.0, %v3084
      %v3086 = vpop.f32.mrf.mxu0
      %v3087 = vpop.f32.mrf.mxu0
      %v3088 = vadd.f32 0.0, %v3087
      %v3089 = vpop.f32.mrf.mxu0
      %3090 = vmatprep.mubr.bf16.mxu0 %v2773
      %3091 = vmatmul.mubr.bf16.gmra.mxu0 %v2772
      %v3092 = vpop.f32.mrf.mxu0
      %v3093 = vadd.f32 0.0, %v3092
      %v3094 = vpop.f32.mrf.mxu0
      %v3095 = vpop.f32.mrf.mxu0
      %v3096 = vadd.f32 0.0, %v3095
      %v3097 = vpop.f32.mrf.mxu0
      %3098 = vmatprep.mubr.bf16.mxu0 %v2776
      %3099 = vmatmul.mubr.bf16.gmra.mxu0 %v2775
      %v3100 = vpop.f32.mrf.mxu0
      %v3101 = vadd.f32 0.0, %v3100
      %v3102 = vpop.f32.mrf.mxu0
      %v3103 = vpop.f32.mrf.mxu0
      %v3104 = vadd.f32 0.0, %v3103
      %v3105 = vpop.f32.mrf.mxu0
      %3106 = vmatprep.mubr.bf16.mxu0 %v2779
      %3107 = vmatmul.mubr.bf16.gmra.mxu0 %v2778
      %v3108 = vpop.f32.mrf.mxu0
      %v3109 = vadd.f32 0.0, %v3108
      %v3110 = vpop.f32.mrf.mxu0
      %v3111 = vpop.f32.mrf.mxu0
      %v3112 = vadd.f32 0.0, %v3111
      %v3113 = vpop.f32.mrf.mxu0
      %3114 = vmatprep.mubr.bf16.mxu0 %v2782
      %3115 = vmatmul.mubr.bf16.gmra.mxu0 %v2781
      %v3116 = vpop.f32.mrf.mxu0
      %v3117 = vadd.f32 0.0, %v3116
      %v3118 = vpop.f32.mrf.mxu0
      %v3119 = vpop.f32.mrf.mxu0
      %v3120 = vadd.f32 0.0, %v3119
      %v3121 = vpop.f32.mrf.mxu0
      %3122 = vmatprep.mubr.bf16.mxu0 %v2785
      %3123 = vmatmul.mubr.bf16.gmra.mxu0 %v2784
      %v3124 = vpop.f32.mrf.mxu0
      %v3125 = vadd.f32 0.0, %v3124
      %v3126 = vpop.f32.mrf.mxu0
      %v3127 = vpop.f32.mrf.mxu0
      %v3128 = vadd.f32 0.0, %v3127
      %v3129 = vpop.f32.mrf.mxu0
      %3130 = vmatprep.mubr.bf16.mxu0 %v2788
      %3131 = vmatmul.mubr.bf16.gmra.mxu0 %v2787
      %v3132 = vpop.f32.mrf.mxu0
      %v3133 = vadd.f32 0.0, %v3132
      %v3134 = vpop.f32.mrf.mxu0
      %v3135 = vpop.f32.mrf.mxu0
      %v3136 = vadd.f32 0.0, %v3135
      %v3137 = vpop.f32.mrf.mxu0
      %3138 = vmatprep.mubr.bf16.mxu0 %v2791
      %3139 = vmatmul.mubr.bf16.gmra.mxu0 %v2790
      %v3140 = vpop.f32.mrf.mxu0
      %v3141 = vadd.f32 0.0, %v3140
      %v3142 = vpop.f32.mrf.mxu0
      %v3143 = vpop.f32.mrf.mxu0
      %v3144 = vadd.f32 0.0, %v3143
      %v3145 = vpop.f32.mrf.mxu0
      %3146 = vdwg.mxu0
      %3147 = vmatprep.subr.bf16.mxu0 0
      %3148 = vmatpush1.bf16.msra.mxu0 %v2961
      %3149 = vmatprep.subr.bf16.mxu0 0
      %3150 = vmatpush1.bf16.msra.mxu0 %v2960
      %3151 = vmatprep.subr.bf16.mxu0 0
      %3152 = vmatpush1.bf16.msra.mxu0 %v2959
      %3153 = vmatprep.subr.bf16.mxu0 0
      %3154 = vmatpush1.bf16.msra.mxu0 %v2958
      %3155 = vmatprep.subr.bf16.mxu0 0
      %3156 = vmatpush1.bf16.msra.mxu0 %v2957
      %3157 = vmatprep.subr.bf16.mxu0 0
      %3158 = vmatpush1.bf16.msra.mxu0 %v2956
      %3159 = vmatprep.subr.bf16.mxu0 0
      %3160 = vmatpush1.bf16.msra.mxu0 %v2955
      %3161 = vmatprep.subr.bf16.mxu0 0
      %3162 = vmatpush1.bf16.msra.mxu0 %v2954
      %3163 = vmatprep.subr.bf16.mxu0 0
      %3164 = vmatpush2.bf16.msra.mxu0 0
      %3165 = vmatprep.subr.bf16.mxu0 0
      %3166 = vmatpush2.bf16.msra.mxu0 0
      %3167 = vmatprep.subr.bf16.mxu0 0
      %3168 = vmatpush2.bf16.msra.mxu0 0
      %3169 = vmatprep.subr.bf16.mxu0 0
      %3170 = vmatpush2.bf16.msra.mxu0 0
      %3171 = vmatprep.subr.bf16.mxu0 0
      %3172 = vmatpush2.bf16.msra.mxu0 0
      %3173 = vmatprep.subr.bf16.mxu0 0
      %3174 = vmatpush2.bf16.msra.mxu0 0
      %3175 = vmatprep.subr.bf16.mxu0 0
      %3176 = vmatpush2.bf16.msra.mxu0 0
      %3177 = vmatprep.subr.bf16.mxu0 0
      %3178 = vmatpush2.bf16.msra.mxu0 0
      %3179 = vmatprep.mubr.bf16.mxu0 0
      %3180 = vmatmul.mubr.bf16.gmra.mxu0 %v2747
      %v3181 = vpop.f32.mrf.mxu0
      %v3182 = vadd.f32 %v3021, %v3181
      %v3183 = vpop.f32.mrf.mxu0
      %v3184 = vpop.f32.mrf.mxu0
      %v3185 = vadd.f32 %v3024, %v3184
      %v3186 = vpop.f32.mrf.mxu0
      %3187 = vmatprep.mubr.bf16.mxu0 0
      %3188 = vmatmul.mubr.bf16.gmra.mxu0 %v2750
      %v3189 = vpop.f32.mrf.mxu0
      %v3190 = vadd.f32 %v3029, %v3189
      %v3191 = vpop.f32.mrf.mxu0
      %v3192 = vpop.f32.mrf.mxu0
      %v3193 = vadd.f32 %v3032, %v3192
      %v3194 = vpop.f32.mrf.mxu0
      %3195 = vmatprep.mubr.bf16.mxu0 0
      %3196 = vmatmul.mubr.bf16.gmra.mxu0 %v2753
      %v3197 = vpop.f32.mrf.mxu0
      %v3198 = vadd.f32 %v3037, %v3197
      %v3199 = vpop.f32.mrf.mxu0
      %v3200 = vpop.f32.mrf.mxu0
      %v3201 = vadd.f32 %v3040, %v3200
      %v3202 = vpop.f32.mrf.mxu0
      %3203 = vmatprep.mubr.bf16.mxu0 0
      %3204 = vmatmul.mubr.bf16.gmra.mxu0 %v2756
      %v3205 = vpop.f32.mrf.mxu0
      %v3206 = vadd.f32 %v3045, %v3205
      %v3207 = vpop.f32.mrf.mxu0
      %v3208 = vpop.f32.mrf.mxu0
      %v3209 = vadd.f32 %v3048, %v3208
      %v3210 = vpop.f32.mrf.mxu0
      %3211 = vmatprep.mubr.bf16.mxu0 0
      %3212 = vmatmul.mubr.bf16.gmra.mxu0 %v2759
      %v3213 = vpop.f32.mrf.mxu0
      %v3214 = vadd.f32 %v3053, %v3213
      %v3215 = vpop.f32.mrf.mxu0
      %v3216 = vpop.f32.mrf.mxu0
      %v3217 = vadd.f32 %v3056, %v3216
      %v3218 = vpop.f32.mrf.mxu0
      %3219 = vmatprep.mubr.bf16.mxu0 0
      %3220 = vmatmul.mubr.bf16.gmra.mxu0 %v2762
      %v3221 = vpop.f32.mrf.mxu0
      %v3222 = vadd.f32 %v3061, %v3221
      %v3223 = vpop.f32.mrf.mxu0
      %v3224 = vpop.f32.mrf.mxu0
      %v3225 = vadd.f32 %v3064, %v3224
      %v3226 = vpop.f32.mrf.mxu0
      %3227 = vmatprep.mubr.bf16.mxu0 0
      %3228 = vmatmul.mubr.bf16.gmra.mxu0 %v2765
      %v3229 = vpop.f32.mrf.mxu0
      %v3230 = vadd.f32 %v3069, %v3229
      %v3231 = vpop.f32.mrf.mxu0
      %v3232 = vpop.f32.mrf.mxu0
      %v3233 = vadd.f32 %v3072, %v3232
      %v3234 = vpop.f32.mrf.mxu0
      %3235 = vmatprep.mubr.bf16.mxu0 0
      %3236 = vmatmul.mubr.bf16.gmra.mxu0 %v2768
      %v3237 = vpop.f32.mrf.mxu0
      %v3238 = vadd.f32 %v3077, %v3237
      %v3239 = vpop.f32.mrf.mxu0
      %v3240 = vpop.f32.mrf.mxu0
      %v3241 = vadd.f32 %v3080, %v3240
      %v3242 = vpop.f32.mrf.mxu0
      %3243 = vmatprep.mubr.bf16.mxu0 0
      %3244 = vmatmul.mubr.bf16.gmra.mxu0 %v2771
      %v3245 = vpop.f32.mrf.mxu0
      %v3246 = vadd.f32 %v3085, %v3245
      %v3247 = vpop.f32.mrf.mxu0
      %v3248 = vpop.f32.mrf.mxu0
      %v3249 = vadd.f32 %v3088, %v3248
      %v3250 = vpop.f32.mrf.mxu0
      %3251 = vmatprep.mubr.bf16.mxu0 0
      %3252 = vmatmul.mubr.bf16.gmra.mxu0 %v2774
      %v3253 = vpop.f32.mrf.mxu0
      %v3254 = vadd.f32 %v3093, %v3253
      %v3255 = vpop.f32.mrf.mxu0
      %v3256 = vpop.f32.mrf.mxu0
      %v3257 = vadd.f32 %v3096, %v3256
      %v3258 = vpop.f32.mrf.mxu0
      %3259 = vmatprep.mubr.bf16.mxu0 0
      %3260 = vmatmul.mubr.bf16.gmra.mxu0 %v2777
      %v3261 = vpop.f32.mrf.mxu0
      %v3262 = vadd.f32 %v3101, %v3261
      %v3263 = vpop.f32.mrf.mxu0
      %v3264 = vpop.f32.mrf.mxu0
      %v3265 = vadd.f32 %v3104, %v3264
      %v3266 = vpop.f32.mrf.mxu0
      %3267 = vmatprep.mubr.bf16.mxu0 0
      %3268 = vmatmul.mubr.bf16.gmra.mxu0 %v2780
      %v3269 = vpop.f32.mrf.mxu0
      %v3270 = vadd.f32 %v3109, %v3269
      %v3271 = vpop.f32.mrf.mxu0
      %v3272 = vpop.f32.mrf.mxu0
      %v3273 = vadd.f32 %v3112, %v3272
      %v3274 = vpop.f32.mrf.mxu0
      %3275 = vmatprep.mubr.bf16.mxu0 0
      %3276 = vmatmul.mubr.bf16.gmra.mxu0 %v2783
      %v3277 = vpop.f32.mrf.mxu0
      %v3278 = vadd.f32 %v3117, %v3277
      %v3279 = vpop.f32.mrf.mxu0
      %v3280 = vpop.f32.mrf.mxu0
      %v3281 = vadd.f32 %v3120, %v3280
      %v3282 = vpop.f32.mrf.mxu0
      %3283 = vmatprep.mubr.bf16.mxu0 0
      %3284 = vmatmul.mubr.bf16.gmra.mxu0 %v2786
      %v3285 = vpop.f32.mrf.mxu0
      %v3286 = vadd.f32 %v3125, %v3285
      %v3287 = vpop.f32.mrf.mxu0
      %v3288 = vpop.f32.mrf.mxu0
      %v3289 = vadd.f32 %v3128, %v3288
      %v3290 = vpop.f32.mrf.mxu0
      %3291 = vmatprep.mubr.bf16.mxu0 0
      %3292 = vmatmul.mubr.bf16.gmra.mxu0 %v2789
      %v3293 = vpop.f32.mrf.mxu0
      %v3294 = vadd.f32 %v3133, %v3293
      %v3295 = vpop.f32.mrf.mxu0
      %v3296 = vpop.f32.mrf.mxu0
      %v3297 = vadd.f32 %v3136, %v3296
      %v3298 = vpop.f32.mrf.mxu0
      %3299 = vmatprep.mubr.bf16.mxu0 0
      %3300 = vmatmul.mubr.bf16.gmra.mxu0 %v2792
      %v3301 = vpop.f32.mrf.mxu0
      %v3302 = vadd.f32 %v3141, %v3301
      %v3303 = vpop.f32.mrf.mxu0
      %v3304 = vpop.f32.mrf.mxu0
      %v3305 = vadd.f32 %v3144, %v3304
      %v3306 = vpop.f32.mrf.mxu0
      %3307 = vdwg.mxu0
      %v3308 = vadd.f32 %v2523, %v3182
      %v3309 = vadd.f32 %v2526, %v3185
      %v3310 = vadd.f32 %v2531, %v3190
      %v3311 = vadd.f32 %v2534, %v3193
      %v3312 = vadd.f32 %v2539, %v3198
      %v3313 = vadd.f32 %v2542, %v3201
      %v3314 = vadd.f32 %v2547, %v3206
      %v3315 = vadd.f32 %v2550, %v3209
      %v3316 = vadd.f32 %v2555, %v3214
      %v3317 = vadd.f32 %v2558, %v3217
      %v3318 = vadd.f32 %v2563, %v3222
      %v3319 = vadd.f32 %v2566, %v3225
      %v3320 = vadd.f32 %v2571, %v3230
      %v3321 = vadd.f32 %v2574, %v3233
      %v3322 = vadd.f32 %v2579, %v3238
      %v3323 = vadd.f32 %v2582, %v3241
      %v3324 = vadd.f32 %v2587, %v3246
      %v3325 = vadd.f32 %v2590, %v3249
      %v3326 = vadd.f32 %v2595, %v3254
      %v3327 = vadd.f32 %v2598, %v3257
      %v3328 = vadd.f32 %v2603, %v3262
      %v3329 = vadd.f32 %v2606, %v3265
      %v3330 = vadd.f32 %v2611, %v3270
      %v3331 = vadd.f32 %v2614, %v3273
      %v3332 = vadd.f32 %v2619, %v3278
      %v3333 = vadd.f32 %v2622, %v3281
      %v3334 = vadd.f32 %v2627, %v3286
      %v3335 = vadd.f32 %v2630, %v3289
      %v3336 = vadd.f32 %v2635, %v3294
      %v3337 = vadd.f32 %v2638, %v3297
      %v3338 = vadd.f32 %v2643, %v3302
      %v3339 = vadd.f32 %v2646, %v3305
      %v3340 = vpack.c.bf16 %v3309, %v3308
      %v3341 = vpack.c.bf16 %v3311, %v3310
      %v3342 = vpack.c.bf16 %v3313, %v3312
      %v3343 = vpack.c.bf16 %v3315, %v3314
      %v3344 = vpack.c.bf16 %v3317, %v3316
      %v3345 = vpack.c.bf16 %v3319, %v3318
      %v3346 = vpack.c.bf16 %v3321, %v3320
      %v3347 = vpack.c.bf16 %v3323, %v3322
      %v3348 = vpack.c.bf16 %v3325, %v3324
      %v3349 = vpack.c.bf16 %v3327, %v3326
      %v3350 = vpack.c.bf16 %v3329, %v3328
      %v3351 = vpack.c.bf16 %v3331, %v3330
      %v3352 = vpack.c.bf16 %v3333, %v3332
      %v3353 = vpack.c.bf16 %v3335, %v3334
      %v3354 = vpack.c.bf16 %v3337, %v3336
      %v3355 = vpack.c.bf16 %v3339, %v3338
      %v3372 = vunpack.c.l.b16 %v3340
      %v3373 = vunpack.c.h.b16 %v3340
      %v3374 = vunpack.c.l.b16 %v3341
      %v3375 = vunpack.c.h.b16 %v3341
      %v3376 = vunpack.c.l.b16 %v3342
      %v3377 = vunpack.c.h.b16 %v3342
      %v3378 = vunpack.c.l.b16 %v3343
      %v3379 = vunpack.c.h.b16 %v3343
      %v3380 = vunpack.c.l.b16 %v3344
      %v3381 = vunpack.c.h.b16 %v3344
      %v3382 = vunpack.c.l.b16 %v3345
      %v3383 = vunpack.c.h.b16 %v3345
      %v3384 = vunpack.c.l.b16 %v3346
      %v3385 = vunpack.c.h.b16 %v3346
      %v3386 = vunpack.c.l.b16 %v3347
      %v3387 = vunpack.c.h.b16 %v3347
      %v3388 = vunpack.c.l.b16 %v3348
      %v3389 = vunpack.c.h.b16 %v3348
      %v3390 = vunpack.c.l.b16 %v3349
      %v3391 = vunpack.c.h.b16 %v3349
      %v3392 = vunpack.c.l.b16 %v3350
      %v3393 = vunpack.c.h.b16 %v3350
      %v3394 = vunpack.c.l.b16 %v3351
      %v3395 = vunpack.c.h.b16 %v3351
      %v3396 = vunpack.c.l.b16 %v3352
      %v3397 = vunpack.c.h.b16 %v3352
      %v3398 = vunpack.c.l.b16 %v3353
      %v3399 = vunpack.c.h.b16 %v3353
      %v3400 = vunpack.c.l.b16 %v3354
      %v3401 = vunpack.c.h.b16 %v3354
      %v3402 = vunpack.c.l.b16 %v3355
      %v3403 = vunpack.c.h.b16 %v3355
      %v3404 = vpack.c.b16 %v3372, %v3372
      %v3405 = vpack.c.b16 %v3373, %v3373
      %v3406 = vpack.c.b16 %v3374, %v3374
      %v3407 = vpack.c.b16 %v3375, %v3375
      %v3408 = vpack.c.b16 %v3376, %v3376
      %v3409 = vpack.c.b16 %v3377, %v3377
      %v3410 = vpack.c.b16 %v3378, %v3378
      %v3411 = vpack.c.b16 %v3379, %v3379
      %v3412 = vpack.c.b16 %v3380, %v3380
      %v3413 = vpack.c.b16 %v3381, %v3381
      %v3414 = vpack.c.b16 %v3382, %v3382
      %v3415 = vpack.c.b16 %v3383, %v3383
      %v3416 = vpack.c.b16 %v3384, %v3384
      %v3417 = vpack.c.b16 %v3385, %v3385
      %v3418 = vpack.c.b16 %v3386, %v3386
      %v3419 = vpack.c.b16 %v3387, %v3387
      %v3420 = vpack.c.b16 %v3388, %v3388
      %v3421 = vpack.c.b16 %v3389, %v3389
      %v3422 = vpack.c.b16 %v3390, %v3390
      %v3423 = vpack.c.b16 %v3391, %v3391
      %v3424 = vpack.c.b16 %v3392, %v3392
      %v3425 = vpack.c.b16 %v3393, %v3393
      %v3426 = vpack.c.b16 %v3394, %v3394
      %v3427 = vpack.c.b16 %v3395, %v3395
      %v3428 = vpack.c.b16 %v3396, %v3396
      %v3429 = vpack.c.b16 %v3397, %v3397
      %v3430 = vpack.c.b16 %v3398, %v3398
      %v3431 = vpack.c.b16 %v3399, %v3399
      %v3432 = vpack.c.b16 %v3400, %v3400
      %v3433 = vpack.c.b16 %v3401, %v3401
      %v3434 = vpack.c.b16 %v3402, %v3402
      %v3435 = vpack.c.b16 %v3403, %v3403
      %3468 = vst [vmem:[%s233] sm:$0xf] %v3404
      %3469 = vst [vmem:[%s233 + $0x4] sm:$0xf] %v3405
      %3470 = vst [vmem:[%s233 + $0x8] sm:$0xf] %v3406
      %3471 = vst [vmem:[%s233 + $0xc] sm:$0xf] %v3407
      %3472 = vst [vmem:[%s233 + $0x10] sm:$0xf] %v3408
      %3473 = vst [vmem:[%s233 + $0x14] sm:$0xf] %v3409
      %3474 = vst [vmem:[%s233 + $0x18] sm:$0xf] %v3410
      %3475 = vst [vmem:[%s233 + $0x1c] sm:$0xf] %v3411
      %3476 = vst [vmem:[%s233 + $0x20] sm:$0xf] %v3412
      %3477 = vst [vmem:[%s233 + $0x24] sm:$0xf] %v3413
      %3478 = vst [vmem:[%s233 + $0x28] sm:$0xf] %v3414
      %3479 = vst [vmem:[%s233 + $0x2c] sm:$0xf] %v3415
      %3480 = vst [vmem:[%s233 + $0x30] sm:$0xf] %v3416
      %3481 = vst [vmem:[%s233 + $0x34] sm:$0xf] %v3417
      %3482 = vst [vmem:[%s233 + $0x38] sm:$0xf] %v3418
      %3483 = vst [vmem:[%s233 + $0x3c] sm:$0xf] %v3419
      %3484 = vst [vmem:[%s233 + $0x40] sm:$0xf] %v3420
      %3485 = vst [vmem:[%s233 + $0x44] sm:$0xf] %v3421
      %3486 = vst [vmem:[%s233 + $0x48] sm:$0xf] %v3422
      %3487 = vst [vmem:[%s233 + $0x4c] sm:$0xf] %v3423
      %3488 = vst [vmem:[%s233 + $0x50] sm:$0xf] %v3424
      %3489 = vst [vmem:[%s233 + $0x54] sm:$0xf] %v3425
      %3490 = vst [vmem:[%s233 + $0x58] sm:$0xf] %v3426
      %3491 = vst [vmem:[%s233 + $0x5c] sm:$0xf] %v3427
      %3492 = vst [vmem:[%s233 + $0x60] sm:$0xf] %v3428
      %3493 = vst [vmem:[%s233 + $0x64] sm:$0xf] %v3429
      %3494 = vst [vmem:[%s233 + $0x68] sm:$0xf] %v3430
      %3495 = vst [vmem:[%s233 + $0x6c] sm:$0xf] %v3431
      %3496 = vst [vmem:[%s233 + $0x70] sm:$0xf] %v3432
      %3497 = vst [vmem:[%s233 + $0x74] sm:$0xf] %v3433
      %3498 = vst [vmem:[%s233 + $0x78] sm:$0xf] %v3434
      %3499 = vst [vmem:[%s233 + $0x7c] sm:$0xf] %v3435
      %v3500 = vadd.f32 %v3308, %v3309
      %v3501 = vadd.f32 %v3500, %v3310
      %v3502 = vadd.f32 %v3501, %v3311
      %v3503 = vadd.f32 %v3502, %v3312
      %v3504 = vadd.f32 %v3503, %v3313
      %v3505 = vadd.f32 %v3504, %v3314
      %v3506 = vadd.f32 %v3505, %v3315
      %v3507 = vadd.f32 %v3506, %v3316
      %v3508 = vadd.f32 %v3507, %v3317
      %v3509 = vadd.f32 %v3508, %v3318
      %v3510 = vadd.f32 %v3509, %v3319
      %v3511 = vadd.f32 %v3510, %v3320
      %v3512 = vadd.f32 %v3511, %v3321
      %v3513 = vadd.f32 %v3512, %v3322
      %v3514 = vadd.f32 %v3513, %v3323
      %v3515 = vadd.f32 %v3514, %v3324
      %v3516 = vadd.f32 %v3515, %v3325
      %v3517 = vadd.f32 %v3516, %v3326
      %v3518 = vadd.f32 %v3517, %v3327
      %v3519 = vadd.f32 %v3518, %v3328
      %v3520 = vadd.f32 %v3519, %v3329
      %v3521 = vadd.f32 %v3520, %v3330
      %v3522 = vadd.f32 %v3521, %v3331
      %v3523 = vadd.f32 %v3522, %v3332
      %v3524 = vadd.f32 %v3523, %v3333
      %v3525 = vadd.f32 %v3524, %v3334
      %v3526 = vadd.f32 %v3525, %v3335
      %v3527 = vadd.f32 %v3526, %v3336
      %v3528 = vadd.f32 %v3527, %v3337
      %v3529 = vadd.f32 %v3528, %v3338
      %v3530 = vadd.f32 %v3529, %v3339
      %v3531 = vrot.slane %v3530, 4
      %v3532 = vadd.f32 %v3530, %v3531
      %v3533 = vrot.slane %v3532, 2
      %v3534 = vadd.f32 %v3532, %v3533
      %v3535 = vrot.slane %v3534, 1
      %v3536 = vadd.f32 %v3534, %v3535
      %3537 = vst [vmem:[%s238] sm:$0x1] %v3536
      %v3538 = vmul.f32 %v3308, %v3308
      %v3539 = vmul.f32 %v3309, %v3309
      %v3540 = vmul.f32 %v3310, %v3310
      %v3541 = vmul.f32 %v3311, %v3311
      %v3542 = vmul.f32 %v3312, %v3312
      %v3543 = vmul.f32 %v3313, %v3313
      %v3544 = vmul.f32 %v3314, %v3314
      %v3545 = vmul.f32 %v3315, %v3315
      %v3546 = vmul.f32 %v3316, %v3316
      %v3547 = vmul.f32 %v3317, %v3317
      %v3548 = vmul.f32 %v3318, %v3318
      %v3549 = vmul.f32 %v3319, %v3319
      %v3550 = vmul.f32 %v3320, %v3320
      %v3551 = vmul.f32 %v3321, %v3321
      %v3552 = vmul.f32 %v3322, %v3322
      %v3553 = vmul.f32 %v3323, %v3323
      %v3554 = vmul.f32 %v3324, %v3324
      %v3555 = vmul.f32 %v3325, %v3325
      %v3556 = vmul.f32 %v3326, %v3326
      %v3557 = vmul.f32 %v3327, %v3327
      %v3558 = vmul.f32 %v3328, %v3328
      %v3559 = vmul.f32 %v3329, %v3329
      %v3560 = vmul.f32 %v3330, %v3330
      %v3561 = vmul.f32 %v3331, %v3331
      %v3562 = vmul.f32 %v3332, %v3332
      %v3563 = vmul.f32 %v3333, %v3333
      %v3564 = vmul.f32 %v3334, %v3334
      %v3565 = vmul.f32 %v3335, %v3335
      %v3566 = vmul.f32 %v3336, %v3336
      %v3567 = vmul.f32 %v3337, %v3337
      %v3568 = vmul.f32 %v3338, %v3338
      %v3569 = vmul.f32 %v3339, %v3339
      %v3570 = vadd.f32 %v3538, %v3539
      %v3571 = vadd.f32 %v3570, %v3540
      %v3572 = vadd.f32 %v3571, %v3541
      %v3573 = vadd.f32 %v3572, %v3542
      %v3574 = vadd.f32 %v3573, %v3543
      %v3575 = vadd.f32 %v3574, %v3544
      %v3576 = vadd.f32 %v3575, %v3545
      %v3577 = vadd.f32 %v3576, %v3546
      %v3578 = vadd.f32 %v3577, %v3547
      %v3579 = vadd.f32 %v3578, %v3548
      %v3580 = vadd.f32 %v3579, %v3549
      %v3581 = vadd.f32 %v3580, %v3550
      %v3582 = vadd.f32 %v3581, %v3551
      %v3583 = vadd.f32 %v3582, %v3552
      %v3584 = vadd.f32 %v3583, %v3553
      %v3585 = vadd.f32 %v3584, %v3554
      %v3586 = vadd.f32 %v3585, %v3555
      %v3587 = vadd.f32 %v3586, %v3556
      %v3588 = vadd.f32 %v3587, %v3557
      %v3589 = vadd.f32 %v3588, %v3558
      %v3590 = vadd.f32 %v3589, %v3559
      %v3591 = vadd.f32 %v3590, %v3560
      %v3592 = vadd.f32 %v3591, %v3561
      %v3593 = vadd.f32 %v3592, %v3562
      %v3594 = vadd.f32 %v3593, %v3563
      %v3595 = vadd.f32 %v3594, %v3564
      %v3596 = vadd.f32 %v3595, %v3565
      %v3597 = vadd.f32 %v3596, %v3566
      %v3598 = vadd.f32 %v3597, %v3567
      %v3599 = vadd.f32 %v3598, %v3568
      %v3600 = vadd.f32 %v3599, %v3569
      %v3601 = vrot.slane %v3600, 4
      %v3602 = vadd.f32 %v3600, %v3601
      %v3603 = vrot.slane %v3602, 2
      %v3604 = vadd.f32 %v3602, %v3603
      %v3605 = vrot.slane %v3604, 1
      %v3606 = vadd.f32 %v3604, %v3605
      %3607 = vst [vmem:[%s238 + $0x1] sm:$0x1] %v3606
      %s3608 = smul.u32 32, %s17
      %p3609 = scmp.lt.s32.totalorder %s3608, 63
      %s3610 = scalar_select %p3609, %s3608, 63
      %s3611 = smul.addr %s3610, 4
      %s3612 = scalar_lea.vmem %s4, %s3611
      %p3613 = scmp.lt.s32.totalorder %s17, 1
      %s3614 = scalar_select %p3613, %s17, 1
      %s3615 = smul.addr %s3614, 2
      %s3616 = scalar_lea.vmem %s5, %s3615
      // Predicated region
      $region37: #{bottleneck_forward.6} parent=35 // pred_check
        %p3617 = pneg %p124
      $region38: #{bottleneck_forward.6} parent=35 // pred_check_branch
        %3619 = sbr.rel (%p3617) target = $region40
      $region39: #{bottleneck_forward.6} parent=35 // pred_region
        %s3620 = smul.u32 32, %s17
      $region40: #{bottleneck_forward.6} parent=35 // pred_fallthru
        _
      // Predicated region
      $region41: #{bottleneck_forward.6} parent=35 // pred_check
        %p3621 = pneg %p150
      $region42: #{bottleneck_forward.6} parent=35 // pred_check_branch
        %3623 = sbr.rel (%p3621) target = $region44
      $region43: #{bottleneck_forward.6} parent=35 // pred_region
        _
      $region44: #{bottleneck_forward.6} parent=35 // pred_fallthru
        _
    $region36: #{bottleneck_forward.6} parent=5 // pred_fallthru
      _
    %p3624 = scmp.le.s32.totalorder 2, %s12
    // Predicated region
    $region45: #{bottleneck_forward.6} parent=5 // pred_check
      %p3625 = pneg %p3624
    $region46: #{bottleneck_forward.6} parent=5 // pred_check_branch
      %3627 = sbr.rel (%p3625) target = $region48
    $region47: #{bottleneck_forward.6} parent=5 // pred_region
      %s3628 = ssub.s32 %s12, 2
      // Predicated region
      $region49: #{bottleneck_forward.6} parent=47 // pred_check
        %p3629 = pneg %p130
      $region50: #{bottleneck_forward.6} parent=47 // pred_check_branch
        %3631 = sbr.rel (%p3629) target = $region52
      $region51: #{bottleneck_forward.6} parent=47 // pred_region
        %s3632 = smul.u32 32, %s18
        %p3633 = scmp.lt.s32.totalorder %s3632, 63
        %s3634 = scalar_select %p3633, %s3632, 63
        %s3635 = smul.addr %s3634, 4
        %s3636 = scalar_lea.vmem %s4, %s3635
      $region52: #{bottleneck_forward.6} parent=47 // pred_fallthru
        _
      // Predicated region
      $region53: #{bottleneck_forward.6} parent=47 // pred_check
        %p3637 = pneg %p156
      $region54: #{bottleneck_forward.6} parent=47 // pred_check_branch
        %3639 = sbr.rel (%p3637) target = $region56
      $region55: #{bottleneck_forward.6} parent=47 // pred_region
        %p3640 = scmp.lt.s32.totalorder %s18, 1
        %s3641 = scalar_select %p3640, %s18, 1
        %s3642 = smul.addr %s3641, 2
        %s3643 = scalar_lea.vmem %s5, %s3642
      $region56: #{bottleneck_forward.6} parent=47 // pred_fallthru
        _
    $region48: #{bottleneck_forward.6} parent=5 // pred_fallthru
      _
  $region6: #{bottleneck_forward.6} parent=0 // loop_footer
    %s16 = sadd.s32 1, %s12
  $region7: #{bottleneck_forward.6} parent=0 // loop_footer_branch
    %11 = sbr.rel target = $region3
  $region8: #{bottleneck_forward.6} parent=0 // loop_exit
    _

</llo_original>
